<compile_context>
chip_gen: v7x
topology: tpu7x:2x2x1
jax: 0.10.0
libtpu: 0.0.40
codegen_flags: <defaults>
</compile_context>

<pallas_src>
import jax
import jax.numpy as jnp
import numpy as np
from jax.experimental import pallas as pl
from jax.experimental.pallas import tpu as pltpu


def _round_up(x, m):
    return ((x + m - 1) // m) * m


def _nbytes(shape, dtype):
    return int(np.prod(shape)) * jnp.dtype(dtype).itemsize


# ----------------------------- fused kernel --------------------------------- #

def gin_fused_kernel(x0_ref, a_ref, eagg_ref, w1_ref, b1_ref, w2_ref, b2_ref,
                     bns_ref, bnb_ref, pool_ref, wp_ref, bp_ref,
                     pred_ref, h_ref):
    """One grid step = one GIN layer; graph head runs fused at the last layer.

    h_ref: persistent VMEM scratch carrying the node state across layers.
    pred_ref: [Bp, Tp] graph-level output block (constant index across the grid
    -> written once, only at the last layer step).
    """
    layer = pl.program_id(0)
    last = pl.num_programs(0) - 1

    @pl.when(layer == 0)
    def _():
        h_ref[...] = x0_ref[...]          # initialize carried node state

    # GIN add-aggregation on the MXU:  A @ h  +  sum_{e: dst[e]=i} edge_emb[l, e]
    # (A holds exact small integer counts in bf16; h cast to bf16, f32 accum.)
    aggr = (jnp.dot(a_ref[...], h_ref[...].astype(jnp.bfloat16),
                    preferred_element_type=jnp.float32)
            + eagg_ref[...].astype(jnp.float32))

    # GIN update MLP: Linear(D, 2D) -> ReLU -> Linear(2D, D).
    # bf16 operands on both sides of each GEMM (fast MXU path), f32 accumulation.
    hid = jnp.maximum(
        jnp.dot(aggr.astype(jnp.bfloat16), w1_ref[...],
                preferred_element_type=jnp.float32) + b1_ref[...],
        0.0)
    h_new = (jnp.dot(hid.astype(jnp.bfloat16), w2_ref[...],
                     preferred_element_type=jnp.float32) + b2_ref[...])
    # BatchNorm1d (eval mode) folded into per-feature scale / shift.
    h_new = h_new * bns_ref[...] + bnb_ref[...]

    # ReLU on all but the last layer (dropout with drop_ratio=0 is identity).
    @pl.when(layer != last)
    def _():
        h_ref[...] = jnp.maximum(h_new, 0.0)

    # Last layer: fused global_mean_pool (matmul with the normalized assignment
    # matrix) + graph_pred_linear, so h never goes back to HBM.
    @pl.when(layer == last)
    def _():
        pooled = jnp.dot(pool_ref[...], h_new.astype(jnp.bfloat16),
                         preferred_element_type=jnp.float32)
        pred_ref[...] = (jnp.dot(pooled.astype(jnp.bfloat16), wp_ref[...],
                                 preferred_element_type=jnp.float32)
                         + bp_ref[...])


# ----------------------------- wrapper --------------------------------------- #

def gnn_graphpred_forward(x0, src, dst, edge_emb, w1, b1, w2, b2,
                          bn_scale, bn_shift, batch, num_graphs, wp, bp):
    L = w1.shape[0]
    N, D = x0.shape
    H = w1.shape[2]                # hidden = 2 * emb_dim
    T = wp.shape[1]
    B = num_graphs

    # Lane-dense padding: last dims -> multiples of 128, graph dim -> 8.
    Dp = _round_up(D, 128)
    Hp = _round_up(H, 128)
    Np = _round_up(N, 128)         # N is A's lane axis
    Tp = _round_up(T, 128)
    Bp = _round_up(B, 8)

    # ---- structural operators (plain-JAX glue, O(E) scatter-adds) ----
    # Adjacency operator A[i, j] = #edges j -> i (includes self loops).
    A = jnp.zeros((N, N), jnp.float32).at[dst, src].add(1.0)
    # Per-layer aggregated edge bias: eagg[l, i] = sum_{e: dst[e]=i} edge_emb[l, e].
    eagg = jax.vmap(lambda e: jax.ops.segment_sum(e, dst, num_segments=N))(edge_emb)
    # Normalized mean-pool operator [B, N].
    counts = jax.ops.segment_sum(jnp.ones((N,), jnp.float32), batch, num_segments=B)
    pool = (jnp.zeros((B, N), jnp.float32).at[batch, jnp.arange(N)].add(1.0)
            / counts[:, None])

    pad = lambda a, shape: jnp.pad(a, [(0, s - d) for s, d in zip(shape, a.shape)])

    x0_p = pad(x0, (Np, Dp)).astype(jnp.float32)
    A_p = pad(A, (Np, Np)).astype(jnp.bfloat16)            # exact small counts
    eagg_p = pad(eagg, (L, Np, Dp)).astype(jnp.bfloat16)   # per-layer streamed
    w1_p = pad(w1, (L, Dp, Hp)).astype(jnp.bfloat16)
    b1_p = pad(b1, (L, 1, Hp)).astype(jnp.float32)
    w2_p = pad(w2, (L, Hp, Dp)).astype(jnp.bfloat16)
    b2_p = pad(b2, (L, 1, Dp)).astype(jnp.float32)
    bns_p = pad(bn_scale, (L, 1, Dp)).astype(jnp.float32)
    bnb_p = pad(bn_shift, (L, 1, Dp)).astype(jnp.float32)
    pool_p = pad(pool, (Bp, Np)).astype(jnp.bfloat16)
    wp_p = pad(wp, (Dp, Tp)).astype(jnp.bfloat16)
    bp_p = pad(bp, (1, Tp)).astype(jnp.float32)

    # ---- explicit VMEM budget (invariants single-buffered, per-layer double) ----
    budget = (
        _nbytes((Np, Dp), jnp.float32)                        # x0
        + _nbytes((Np, Np), jnp.bfloat16)                     # A
        + _nbytes((Bp, Np), jnp.bfloat16)                     # pool
        + _nbytes((Dp, Tp), jnp.bfloat16)                     # wp
        + _nbytes((1, Tp), jnp.float32)                       # bp
        + 2 * _nbytes((Np, Dp), jnp.bfloat16)                 # eagg[l]
        + 2 * (_nbytes((Dp, Hp), jnp.bfloat16)
               + _nbytes((Hp, Dp), jnp.bfloat16))             # W1[l], W2[l]
        + 2 * (_nbytes((1, Hp), jnp.float32)
               + 3 * _nbytes((1, Dp), jnp.float32))           # b1, b2, bn
        + _nbytes((Bp, Tp), jnp.float32)                      # pred output block
        + _nbytes((Np, Dp), jnp.float32)                      # h scratch
        + _nbytes((Np, Hp), jnp.float32)                      # hid intermediate
        + 2 * _nbytes((Np, Dp), jnp.float32)                  # aggr / h_new temps
    )
    vmem_limit = int(min(max(1.25 * budget + (4 << 20), 32 << 20), 112 << 20))

    const2 = lambda l: (0, 0)
    per_layer = lambda l: (l, 0, 0)

    def build_call(single_buffer_invariants):
        inv = ({"pipeline_mode": pl.Buffered(1)}
               if single_buffer_invariants else {})
        return pl.pallas_call(
            gin_fused_kernel,
            out_shape=jax.ShapeDtypeStruct((Bp, Tp), jnp.float32),
            grid_spec=pltpu.PrefetchScalarGridSpec(
                num_scalar_prefetch=0,
                grid=(L,),
                in_specs=[
                    pl.BlockSpec((Np, Dp), const2, **inv),         # x0 (layer 0 only)
                    pl.BlockSpec((Np, Np), const2, **inv),         # A (bf16)
                    pl.BlockSpec((None, Np, Dp), per_layer),       # eagg[l]
                    pl.BlockSpec((None, Dp, Hp), per_layer),       # mlp W1[l]
                    pl.BlockSpec((None, 1, Hp), per_layer),        # mlp b1[l]
                    pl.BlockSpec((None, Hp, Dp), per_layer),       # mlp W2[l]
                    pl.BlockSpec((None, 1, Dp), per_layer),        # mlp b2[l]
                    pl.BlockSpec((None, 1, Dp), per_layer),        # bn scale[l]
                    pl.BlockSpec((None, 1, Dp), per_layer),        # bn shift[l]
                    pl.BlockSpec((Bp, Np), const2, **inv),         # mean-pool operator
                    pl.BlockSpec((Dp, Tp), const2, **inv),         # head weight
                    pl.BlockSpec((1, Tp), const2, **inv),          # head bias
                ],
                out_specs=pl.BlockSpec((Bp, Tp), const2),          # graph predictions
                scratch_shapes=[pltpu.VMEM((Np, Dp), jnp.float32)],  # carried h
            ),
            compiler_params=pltpu.CompilerParams(
                dimension_semantics=("arbitrary",),
                vmem_limit_bytes=vmem_limit),
        )

    operands = (x0_p, A_p, eagg_p, w1_p, b1_p, w2_p, b2_p, bns_p, bnb_p,
                pool_p, wp_p, bp_p)
    try:
        out = jax.block_until_ready(build_call(True)(*operands))
    except Exception:
        # Fallback if this jax build rejects pipeline_mode=pl.Buffered(1) on the
        # grid-invariant blocks; default double buffering only changes VMEM
        # residency, not results.
        out = jax.block_until_ready(build_call(False)(*operands))

    # TODO(synk): for v7x-scale node counts, tile the node axis (grid=(L, Np//TN),
    # node axis 'parallel') and make the carried h core-visible; unnecessary at
    # these demo shapes.
    return out[:B, :T]


# ----------------------------- reference ------------------------------------- #

def reference_forward(x0, src, dst, edge_emb, w1, b1, w2, b2,
                      bn_scale, bn_shift, batch, num_graphs, wp, bp):
    """Pure-JAX f32 reference mirroring the PyTorch forward (eval mode, drop_ratio=0)."""
    N = x0.shape[0]
    L = w1.shape[0]
    h = x0
    for l in range(L):
        msg = h[src] + edge_emb[l]                                   # message()
        aggr = jax.ops.segment_sum(msg, dst, num_segments=N)         # add aggregation
        hid = jnp.maximum(aggr @ w1[l] + b1[l], 0.0)                 # mlp
        out = hid @ w2[l] + b2[l]
        out = out * bn_scale[l, 0] + bn_shift[l, 0]                  # batchnorm (eval)
        if l != L - 1:
            out = jnp.maximum(out, 0.0)                              # relu (dropout p=0)
        h = out
    counts = jax.ops.segment_sum(jnp.ones((N,), jnp.float32), batch,
                                 num_segments=num_graphs)
    pooled = jax.ops.segment_sum(h, batch, num_segments=num_graphs) / counts[:, None]
    return pooled @ wp + bp                                          # graph_pred_linear


# ----------------------------- test ------------------------------------------ #

if __name__ == "__main__":
    # configuration (small but consistent with the module)
    N, E, D, L, B, T = 16, 32, 32, 3, 2, 2   # nodes, edges, emb_dim, num_layer, graphs, tasks
    num_atom_type, num_chirality_tag = 120, 3
    num_bond_type, num_bond_direction = 6, 3
    eps = 1e-5

    key = jax.random.PRNGKey(0)
    ks = jax.random.split(key, 24)

    # synthetic graph inputs
    x_int = jnp.stack([jax.random.randint(ks[0], (N,), 0, num_atom_type),
                       jax.random.randint(ks[1], (N,), 0, num_chirality_tag)], axis=1)
    edge_index = jax.random.randint(ks[2], (2, E), 0, N)
    edge_attr = jnp.stack([jax.random.randint(ks[3], (E,), 0, num_bond_type),
                           jax.random.randint(ks[4], (E,), 0, num_bond_direction)], axis=1)
    batch = jnp.concatenate([jnp.zeros((N // 2,), jnp.int32),
                             jnp.ones((N - N // 2,), jnp.int32)])

    # deterministic parameter init (shapes from __init__)
    x_emb1 = 0.1 * jax.random.normal(ks[5], (num_atom_type, D), jnp.float32)
    x_emb2 = 0.1 * jax.random.normal(ks[6], (num_chirality_tag, D), jnp.float32)
    edge_emb1 = 0.1 * jax.random.normal(ks[7], (L, num_bond_type, D), jnp.float32)
    edge_emb2 = 0.1 * jax.random.normal(ks[8], (L, num_bond_direction, D), jnp.float32)
    w1 = jax.random.normal(ks[9], (L, D, 2 * D), jnp.float32) / np.sqrt(D)
    b1 = 0.01 * jax.random.normal(ks[10], (L, 1, 2 * D), jnp.float32)
    w2 = jax.random.normal(ks[11], (L, 2 * D, D), jnp.float32) / np.sqrt(2 * D)
    b2 = 0.01 * jax.random.normal(ks[12], (L, 1, D), jnp.float32)
    gamma = 1.0 + 0.1 * jax.random.normal(ks[13], (L, D), jnp.float32)
    beta = 0.1 * jax.random.normal(ks[14], (L, D), jnp.float32)
    run_mean = 0.1 * jax.random.normal(ks[15], (L, D), jnp.float32)
    run_var = 1.0 + 0.1 * jnp.abs(jax.random.normal(ks[16], (L, D), jnp.float32))
    wp = jax.random.normal(ks[17], (D, T), jnp.float32) / np.sqrt(D)
    bp = 0.01 * jax.random.normal(ks[18], (1, T), jnp.float32)

    # glue: embedding lookups, self loops, per-layer edge embeddings (plain JAX)
    x0 = (x_emb1[x_int[:, 0]] + x_emb2[x_int[:, 1]]).astype(jnp.float32)

    self_loops = jnp.stack([jnp.arange(N, dtype=edge_index.dtype)] * 2, axis=0)
    ei_full = jnp.concatenate([edge_index, self_loops], axis=1)          # [2, E+N]
    src, dst = ei_full[0], ei_full[1]
    self_attr = jnp.stack([jnp.full((N,), 4, dtype=edge_attr.dtype),
                           jnp.zeros((N,), dtype=edge_attr.dtype)], axis=1)
    attr_full = jnp.concatenate([edge_attr, self_attr], axis=0)          # [E+N, 2]
    edge_emb = (edge_emb1[:, attr_full[:, 0], :]
                + edge_emb2[:, attr_full[:, 1], :]).astype(jnp.float32)  # [L, E+N, D]

    # BatchNorm (eval) folded into scale / shift
    inv_std = 1.0 / jnp.sqrt(run_var + eps)
    bn_scale = (gamma * inv_std)[:, None, :]                             # [L, 1, D]
    bn_shift = (beta - run_mean * gamma * inv_std)[:, None, :]           # [L, 1, D]

    # run Pallas kernel
    out = gnn_graphpred_forward(x0, src, dst, edge_emb, w1, b1, w2, b2,
                                bn_scale, bn_shift, batch, B, wp, bp)
    out = jax.block_until_ready(out)

    # check against pure-JAX f32 reference (tolerance loosened: all GEMMs take
    # bf16 operands with f32 accumulation, rounding compounds over L layers)
    ref = reference_forward(x0, src, dst, edge_emb, w1, b1, w2, b2,
                            bn_scale, bn_shift, batch, B, wp, bp)
    np.testing.assert_allclose(np.asarray(out), np.asarray(ref), rtol=3e-2, atol=3e-2)

    print("KERNEL_OK")
</pallas_src>

<mosaic_0001>
module attributes {stable_mosaic.version = 11 : i64} {
  func.func @gin_fused_kernel(%arg0: i32, %arg1: memref<128x128xf32, #tpu.memory_space<vmem>>, %arg2: memref<128x128xbf16, #tpu.memory_space<vmem>>, %arg3: memref<1x128x128xbf16, #tpu.memory_space<vmem>>, %arg4: memref<1x128x128xbf16, #tpu.memory_space<vmem>>, %arg5: memref<1x1x128xf32, #tpu.memory_space<vmem>>, %arg6: memref<1x128x128xbf16, #tpu.memory_space<vmem>>, %arg7: memref<1x1x128xf32, #tpu.memory_space<vmem>>, %arg8: memref<1x1x128xf32, #tpu.memory_space<vmem>>, %arg9: memref<1x1x128xf32, #tpu.memory_space<vmem>>, %arg10: memref<8x128xbf16, #tpu.memory_space<vmem>>, %arg11: memref<128x128xbf16, #tpu.memory_space<vmem>>, %arg12: memref<1x128xf32, #tpu.memory_space<vmem>>, %arg13: memref<8x128xf32, #tpu.memory_space<vmem>>, %arg14: memref<128x128xf32, #tpu.memory_space<vmem>>) attributes {dimension_semantics = [#tpu.dimension_semantics<arbitrary>], iteration_bounds = array<i64: 3>, scalar_prefetch = 0 : i64, scratch_operands = 1 : i64, tpu.core_type = #tpu.core_type<tc>, window_params = [{pipeline_mode = #tpu.pipeline_mode<synchronous>, transform_indices = @transform_0, window_bounds = array<i64: 128, 128>}, {pipeline_mode = #tpu.pipeline_mode<synchronous>, transform_indices = @transform_1, window_bounds = array<i64: 128, 128>}, {transform_indices = @transform_2, window_bounds = array<i64: 1, 128, 128>}, {transform_indices = @transform_3, window_bounds = array<i64: 1, 128, 128>}, {transform_indices = @transform_4, window_bounds = array<i64: 1, 1, 128>}, {transform_indices = @transform_5, window_bounds = array<i64: 1, 128, 128>}, {transform_indices = @transform_6, window_bounds = array<i64: 1, 1, 128>}, {transform_indices = @transform_7, window_bounds = array<i64: 1, 1, 128>}, {transform_indices = @transform_8, window_bounds = array<i64: 1, 1, 128>}, {pipeline_mode = #tpu.pipeline_mode<synchronous>, transform_indices = @transform_9, window_bounds = array<i64: 8, 128>}, {pipeline_mode = #tpu.pipeline_mode<synchronous>, transform_indices = @transform_10, window_bounds = array<i64: 128, 128>}, {pipeline_mode = #tpu.pipeline_mode<synchronous>, transform_indices = @transform_11, window_bounds = array<i64: 1, 128>}, {pipeline_mode = #tpu.pipeline_mode<synchronous>, transform_indices = @transform_12, window_bounds = array<i64: 8, 128>}]} {
    %c0_i32 = arith.constant 0 : i32
    %0 = arith.cmpi eq, %arg0, %c0_i32 : i32
    %1 = arith.extui %0 : i1 to i32
    %c0_i32_0 = arith.constant 0 : i32
    %2 = arith.cmpi ne, %1, %c0_i32_0 : i32
    scf.if %2 {
      %c0_31 = arith.constant 0 : index
      %c0_32 = arith.constant 0 : index
      %43 = vector.load %arg1[%c0_31, %c0_32] : memref<128x128xf32, #tpu.memory_space<vmem>>, vector<128x128xf32>
      %c0_33 = arith.constant 0 : index
      %c0_34 = arith.constant 0 : index
      %44 = vector.load %arg14[%c0_33, %c0_34] : memref<128x128xf32, #tpu.memory_space<vmem>>, vector<128x128xf32>
      tpu.vector_store %arg14[%c0_33, %c0_34], %43 {strides = array<i32>} : memref<128x128xf32, #tpu.memory_space<vmem>>, vector<128x128xf32>,
    } else {
    }
    %c0 = arith.constant 0 : index
    %c0_1 = arith.constant 0 : index
    %3 = vector.load %arg2[%c0, %c0_1] : memref<128x128xbf16, #tpu.memory_space<vmem>>, vector<128x128xbf16>
    %c0_2 = arith.constant 0 : index
    %c0_3 = arith.constant 0 : index
    %4 = vector.load %arg14[%c0_2, %c0_3] : memref<128x128xf32, #tpu.memory_space<vmem>>, vector<128x128xf32>
    %5 = arith.truncf %4 : vector<128x128xf32> to vector<128x128xbf16>
    %cst = arith.constant dense<0.000000e+00> : vector<128x128xf32>
    %6 = tpu.matmul %3, %5, %cst {dimension_numbers = #tpu.dot_dimension_numbers<[1], [0], [0], [1], [0, 0, 1, 1], [], []>} : vector<128x128xbf16>, vector<128x128xbf16>, vector<128x128xf32> -> vector<128x128xf32>
    %c0_4 = arith.constant 0 : index
    %c0_5 = arith.constant 0 : index
    %c0_6 = arith.constant 0 : index
    %7 = vector.load %arg3[%c0_4, %c0_5, %c0_6] : memref<1x128x128xbf16, #tpu.memory_space<vmem>>, vector<1x128x128xbf16>
    %8 = vector.shape_cast %7 : vector<1x128x128xbf16> to vector<128x128xbf16>
    %9 = arith.extf %8 : vector<128x128xbf16> to vector<128x128xf32>
    %10 = arith.addf %6, %9 : vector<128x128xf32>
    %11 = arith.truncf %10 : vector<128x128xf32> to vector<128x128xbf16>
    %c0_7 = arith.constant 0 : index
    %c0_8 = arith.constant 0 : index
    %c0_9 = arith.constant 0 : index
    %12 = vector.load %arg4[%c0_7, %c0_8, %c0_9] : memref<1x128x128xbf16, #tpu.memory_space<vmem>>, vector<1x128x128xbf16>
    %13 = vector.shape_cast %12 : vector<1x128x128xbf16> to vector<128x128xbf16>
    %cst_10 = arith.constant dense<0.000000e+00> : vector<128x128xf32>
    %14 = tpu.matmul %11, %13, %cst_10 {dimension_numbers = #tpu.dot_dimension_numbers<[1], [0], [0], [1], [0, 0, 1, 1], [], []>} : vector<128x128xbf16>, vector<128x128xbf16>, vector<128x128xf32> -> vector<128x128xf32>
    %c0_11 = arith.constant 0 : index
    %c0_12 = arith.constant 0 : index
    %c0_13 = arith.constant 0 : index
    %15 = vector.load %arg5[%c0_11, %c0_12, %c0_13] : memref<1x1x128xf32, #tpu.memory_space<vmem>>, vector<1x1x128xf32>
    %16 = vector.shape_cast %15 : vector<1x1x128xf32> to vector<1x128xf32>
    %17 = vector.broadcast %16 : vector<1x128xf32> to vector<128x128xf32>
    %18 = arith.addf %14, %17 : vector<128x128xf32>
    %cst_14 = arith.constant 0.000000e+00 : f32
    %19 = vector.broadcast %cst_14 : f32 to vector<128x128xf32>
    %20 = arith.maximumf %18, %19 : vector<128x128xf32>
    %21 = arith.truncf %20 : vector<128x128xf32> to vector<128x128xbf16>
    %c0_15 = arith.constant 0 : index
    %c0_16 = arith.constant 0 : index
    %c0_17 = arith.constant 0 : index
    %22 = vector.load %arg6[%c0_15, %c0_16, %c0_17] : memref<1x128x128xbf16, #tpu.memory_space<vmem>>, vector<1x128x128xbf16>
    %23 = vector.shape_cast %22 : vector<1x128x128xbf16> to vector<128x128xbf16>
    %cst_18 = arith.constant dense<0.000000e+00> : vector<128x128xf32>
    %24 = tpu.matmul %21, %23, %cst_18 {dimension_numbers = #tpu.dot_dimension_numbers<[1], [0], [0], [1], [0, 0, 1, 1], [], []>} : vector<128x128xbf16>, vector<128x128xbf16>, vector<128x128xf32> -> vector<128x128xf32>
    %c0_19 = arith.constant 0 : index
    %c0_20 = arith.constant 0 : index
    %c0_21 = arith.constant 0 : index
    %25 = vector.load %arg7[%c0_19, %c0_20, %c0_21] : memref<1x1x128xf32, #tpu.memory_space<vmem>>, vector<1x1x128xf32>
    %26 = vector.shape_cast %25 : vector<1x1x128xf32> to vector<1x128xf32>
    %27 = vector.broadcast %26 : vector<1x128xf32> to vector<128x128xf32>
    %28 = arith.addf %24, %27 : vector<128x128xf32>
    %c0_22 = arith.constant 0 : index
    %c0_23 = arith.constant 0 : index
    %c0_24 = arith.constant 0 : index
    %29 = vector.load %arg8[%c0_22, %c0_23, %c0_24] : memref<1x1x128xf32, #tpu.memory_space<vmem>>, vector<1x1x128xf32>
    %30 = vector.shape_cast %29 : vector<1x1x128xf32> to vector<1x128xf32>
    %31 = vector.broadcast %30 : vector<1x128xf32> to vector<128x128xf32>
    %32 = arith.mulf %28, %31 : vector<128x128xf32>
    %c0_25 = arith.constant 0 : index
    %c0_26 = arith.constant 0 : index
    %c0_27 = arith.constant 0 : index
    %33 = vector.load %arg9[%c0_25, %c0_26, %c0_27] : memref<1x1x128xf32, #tpu.memory_space<vmem>>, vector<1x1x128xf32>
    %34 = vector.shape_cast %33 : vector<1x1x128xf32> to vector<1x128xf32>
    %35 = vector.broadcast %34 : vector<1x128xf32> to vector<128x128xf32>
    %36 = arith.addf %32, %35 : vector<128x128xf32>
    %c2_i32 = arith.constant 2 : i32
    %37 = arith.cmpi ne, %arg0, %c2_i32 : i32
    %38 = arith.extui %37 : i1 to i32
    %c0_i32_28 = arith.constant 0 : i32
    %39 = arith.cmpi ne, %38, %c0_i32_28 : i32
    scf.if %39 {
      %cst_31 = arith.constant 0.000000e+00 : f32
      %43 = vector.broadcast %cst_31 : f32 to vector<128x128xf32>
      %44 = arith.maximumf %36, %43 : vector<128x128xf32>
      %c0_32 = arith.constant 0 : index
      %c0_33 = arith.constant 0 : index
      %45 = vector.load %arg14[%c0_32, %c0_33] : memref<128x128xf32, #tpu.memory_space<vmem>>, vector<128x128xf32>
      tpu.vector_store %arg14[%c0_32, %c0_33], %44 {strides = array<i32>} : memref<128x128xf32, #tpu.memory_space<vmem>>, vector<128x128xf32>,
    } else {
    }
    %c2_i32_29 = arith.constant 2 : i32
    %40 = arith.cmpi eq, %arg0, %c2_i32_29 : i32
    %41 = arith.extui %40 : i1 to i32
    %c0_i32_30 = arith.constant 0 : i32
    %42 = arith.cmpi ne, %41, %c0_i32_30 : i32
    scf.if %42 {
      %c0_31 = arith.constant 0 : index
      %c0_32 = arith.constant 0 : index
      %43 = vector.load %arg10[%c0_31, %c0_32] : memref<8x128xbf16, #tpu.memory_space<vmem>>, vector<8x128xbf16>
      %44 = arith.truncf %36 : vector<128x128xf32> to vector<128x128xbf16>
      %cst_33 = arith.constant dense<0.000000e+00> : vector<8x128xf32>
      %45 = tpu.matmul %43, %44, %cst_33 {dimension_numbers = #tpu.dot_dimension_numbers<[1], [0], [0], [1], [0, 0, 1, 1], [], []>} : vector<8x128xbf16>, vector<128x128xbf16>, vector<8x128xf32> -> vector<8x128xf32>
      %46 = arith.truncf %45 : vector<8x128xf32> to vector<8x128xbf16>
      %c0_34 = arith.constant 0 : index
      %c0_35 = arith.constant 0 : index
      %47 = vector.load %arg11[%c0_34, %c0_35] : memref<128x128xbf16, #tpu.memory_space<vmem>>, vector<128x128xbf16>
      %cst_36 = arith.constant dense<0.000000e+00> : vector<8x128xf32>
      %48 = tpu.matmul %46, %47, %cst_36 {dimension_numbers = #tpu.dot_dimension_numbers<[1], [0], [0], [1], [0, 0, 1, 1], [], []>} : vector<8x128xbf16>, vector<128x128xbf16>, vector<8x128xf32> -> vector<8x128xf32>
      %c0_37 = arith.constant 0 : index
      %c0_38 = arith.constant 0 : index
      %49 = vector.load %arg12[%c0_37, %c0_38] : memref<1x128xf32, #tpu.memory_space<vmem>>, vector<1x128xf32>
      %50 = vector.broadcast %49 : vector<1x128xf32> to vector<8x128xf32>
      %51 = arith.addf %48, %50 : vector<8x128xf32>
      %c0_39 = arith.constant 0 : index
      %c0_40 = arith.constant 0 : index
      %52 = vector.load %arg13[%c0_39, %c0_40] : memref<8x128xf32, #tpu.memory_space<vmem>>, vector<8x128xf32>
      tpu.vector_store %arg13[%c0_39, %c0_40], %51 {strides = array<i32>} : memref<8x128xf32, #tpu.memory_space<vmem>>, vector<8x128xf32>,
    } else {
    }
    return
  }
  func.func @transform_0(%arg0: i32) -> (i32, i32) {
    %c0_i32 = arith.constant 0 : i32
    %c0_i32_0 = arith.constant 0 : i32
    %c0_i32_1 = arith.constant 0 : i32
    return %c0_i32, %c0_i32_0 : i32, i32
  }
  func.func @transform_1(%arg0: i32) -> (i32, i32) {
    %c0_i32 = arith.constant 0 : i32
    %c0_i32_0 = arith.constant 0 : i32
    %c0_i32_1 = arith.constant 0 : i32
    return %c0_i32, %c0_i32_0 : i32, i32
  }
  func.func @transform_2(%arg0: i32) -> (i32, i32, i32) {
    %c0_i32 = arith.constant 0 : i32
    %c0_i32_0 = arith.constant 0 : i32
    %c0_i32_1 = arith.constant 0 : i32
    return %arg0, %c0_i32, %c0_i32_0 : i32, i32, i32
  }
  func.func @transform_3(%arg0: i32) -> (i32, i32, i32) {
    %c0_i32 = arith.constant 0 : i32
    %c0_i32_0 = arith.constant 0 : i32
    %c0_i32_1 = arith.constant 0 : i32
    return %arg0, %c0_i32, %c0_i32_0 : i32, i32, i32
  }
  func.func @transform_4(%arg0: i32) -> (i32, i32, i32) {
    %c0_i32 = arith.constant 0 : i32
    %c0_i32_0 = arith.constant 0 : i32
    %c0_i32_1 = arith.constant 0 : i32
    return %arg0, %c0_i32, %c0_i32_0 : i32, i32, i32
  }
  func.func @transform_5(%arg0: i32) -> (i32, i32, i32) {
    %c0_i32 = arith.constant 0 : i32
    %c0_i32_0 = arith.constant 0 : i32
    %c0_i32_1 = arith.constant 0 : i32
    return %arg0, %c0_i32, %c0_i32_0 : i32, i32, i32
  }
  func.func @transform_6(%arg0: i32) -> (i32, i32, i32) {
    %c0_i32 = arith.constant 0 : i32
    %c0_i32_0 = arith.constant 0 : i32
    %c0_i32_1 = arith.constant 0 : i32
    return %arg0, %c0_i32, %c0_i32_0 : i32, i32, i32
  }
  func.func @transform_7(%arg0: i32) -> (i32, i32, i32) {
    %c0_i32 = arith.constant 0 : i32
    %c0_i32_0 = arith.constant 0 : i32
    %c0_i32_1 = arith.constant 0 : i32
    return %arg0, %c0_i32, %c0_i32_0 : i32, i32, i32
  }
  func.func @transform_8(%arg0: i32) -> (i32, i32, i32) {
    %c0_i32 = arith.constant 0 : i32
    %c0_i32_0 = arith.constant 0 : i32
    %c0_i32_1 = arith.constant 0 : i32
    return %arg0, %c0_i32, %c0_i32_0 : i32, i32, i32
  }
  func.func @transform_9(%arg0: i32) -> (i32, i32) {
    %c0_i32 = arith.constant 0 : i32
    %c0_i32_0 = arith.constant 0 : i32
    %c0_i32_1 = arith.constant 0 : i32
    return %c0_i32, %c0_i32_0 : i32, i32
  }
  func.func @transform_10(%arg0: i32) -> (i32, i32) {
    %c0_i32 = arith.constant 0 : i32
    %c0_i32_0 = arith.constant 0 : i32
    %c0_i32_1 = arith.constant 0 : i32
    return %c0_i32, %c0_i32_0 : i32, i32
  }
  func.func @transform_11(%arg0: i32) -> (i32, i32) {
    %c0_i32 = arith.constant 0 : i32
    %c0_i32_0 = arith.constant 0 : i32
    %c0_i32_1 = arith.constant 0 : i32
    return %c0_i32, %c0_i32_0 : i32, i32
  }
  func.func @transform_12(%arg0: i32) -> (i32, i32) {
    %c0_i32 = arith.constant 0 : i32
    %c0_i32_0 = arith.constant 0 : i32
    %c0_i32_1 = arith.constant 0 : i32
    return %c0_i32, %c0_i32_0 : i32, i32
  }
}

module attributes {stable_mosaic.version = 11 : i64} {
  func.func @gin_fused_kernel(%arg0: i32, %arg1: memref<128x128xf32, #tpu.memory_space<vmem>>, %arg2: memref<128x128xbf16, #tpu.memory_space<vmem>>, %arg3: memref<1x128x128xbf16, #tpu.memory_space<vmem>>, %arg4: memref<1x128x128xbf16, #tpu.memory_space<vmem>>, %arg5: memref<1x1x128xf32, #tpu.memory_space<vmem>>, %arg6: memref<1x128x128xbf16, #tpu.memory_space<vmem>>, %arg7: memref<1x1x128xf32, #tpu.memory_space<vmem>>, %arg8: memref<1x1x128xf32, #tpu.memory_space<vmem>>, %arg9: memref<1x1x128xf32, #tpu.memory_space<vmem>>, %arg10: memref<8x128xbf16, #tpu.memory_space<vmem>>, %arg11: memref<128x128xbf16, #tpu.memory_space<vmem>>, %arg12: memref<1x128xf32, #tpu.memory_space<vmem>>, %arg13: memref<8x128xf32, #tpu.memory_space<vmem>>, %arg14: memref<128x128xf32, #tpu.memory_space<vmem>>) attributes {dimension_semantics = [#tpu.dimension_semantics<arbitrary>], iteration_bounds = array<i64: 3>, scalar_prefetch = 0 : i64, scratch_operands = 1 : i64, tpu.core_type = #tpu.core_type<tc>, window_params = [{pipeline_mode = #tpu.pipeline_mode<synchronous>, transform_indices = @transform_0, window_bounds = array<i64: 128, 128>}, {pipeline_mode = #tpu.pipeline_mode<synchronous>, transform_indices = @transform_1, window_bounds = array<i64: 128, 128>}, {transform_indices = @transform_2, window_bounds = array<i64: 1, 128, 128>}, {transform_indices = @transform_3, window_bounds = array<i64: 1, 128, 128>}, {transform_indices = @transform_4, window_bounds = array<i64: 1, 1, 128>}, {transform_indices = @transform_5, window_bounds = array<i64: 1, 128, 128>}, {transform_indices = @transform_6, window_bounds = array<i64: 1, 1, 128>}, {transform_indices = @transform_7, window_bounds = array<i64: 1, 1, 128>}, {transform_indices = @transform_8, window_bounds = array<i64: 1, 1, 128>}, {pipeline_mode = #tpu.pipeline_mode<synchronous>, transform_indices = @transform_9, window_bounds = array<i64: 8, 128>}, {pipeline_mode = #tpu.pipeline_mode<synchronous>, transform_indices = @transform_10, window_bounds = array<i64: 128, 128>}, {pipeline_mode = #tpu.pipeline_mode<synchronous>, transform_indices = @transform_11, window_bounds = array<i64: 1, 128>}, {pipeline_mode = #tpu.pipeline_mode<synchronous>, transform_indices = @transform_12, window_bounds = array<i64: 8, 128>}]} {
    %c0_i32 = arith.constant 0 : i32
    %0 = arith.cmpi eq, %arg0, %c0_i32 : i32
    %1 = arith.extui %0 : i1 to i32
    %c0_i32_0 = arith.constant 0 : i32
    %2 = arith.cmpi ne, %1, %c0_i32_0 : i32
    scf.if %2 {
      %c0_31 = arith.constant 0 : index
      %c0_32 = arith.constant 0 : index
      %43 = vector.load %arg1[%c0_31, %c0_32] : memref<128x128xf32, #tpu.memory_space<vmem>>, vector<128x128xf32>
      %c0_33 = arith.constant 0 : index
      %c0_34 = arith.constant 0 : index
      %44 = vector.load %arg14[%c0_33, %c0_34] : memref<128x128xf32, #tpu.memory_space<vmem>>, vector<128x128xf32>
      tpu.vector_store %arg14[%c0_33, %c0_34], %43 {strides = array<i32>} : memref<128x128xf32, #tpu.memory_space<vmem>>, vector<128x128xf32>,
    } else {
    }
    %c0 = arith.constant 0 : index
    %c0_1 = arith.constant 0 : index
    %3 = vector.load %arg2[%c0, %c0_1] : memref<128x128xbf16, #tpu.memory_space<vmem>>, vector<128x128xbf16>
    %c0_2 = arith.constant 0 : index
    %c0_3 = arith.constant 0 : index
    %4 = vector.load %arg14[%c0_2, %c0_3] : memref<128x128xf32, #tpu.memory_space<vmem>>, vector<128x128xf32>
    %5 = arith.truncf %4 : vector<128x128xf32> to vector<128x128xbf16>
    %cst = arith.constant dense<0.000000e+00> : vector<128x128xf32>
    %6 = tpu.matmul %3, %5, %cst {dimension_numbers = #tpu.dot_dimension_numbers<[1], [0], [0], [1], [0, 0, 1, 1], [], []>} : vector<128x128xbf16>, vector<128x128xbf16>, vector<128x128xf32> -> vector<128x128xf32>
    %c0_4 = arith.constant 0 : index
    %c0_5 = arith.constant 0 : index
    %c0_6 = arith.constant 0 : index
    %7 = vector.load %arg3[%c0_4, %c0_5, %c0_6] : memref<1x128x128xbf16, #tpu.memory_space<vmem>>, vector<1x128x128xbf16>
    %8 = vector.shape_cast %7 : vector<1x128x128xbf16> to vector<128x128xbf16>
    %9 = arith.extf %8 : vector<128x128xbf16> to vector<128x128xf32>
    %10 = arith.addf %6, %9 : vector<128x128xf32>
    %11 = arith.truncf %10 : vector<128x128xf32> to vector<128x128xbf16>
    %c0_7 = arith.constant 0 : index
    %c0_8 = arith.constant 0 : index
    %c0_9 = arith.constant 0 : index
    %12 = vector.load %arg4[%c0_7, %c0_8, %c0_9] : memref<1x128x128xbf16, #tpu.memory_space<vmem>>, vector<1x128x128xbf16>
    %13 = vector.shape_cast %12 : vector<1x128x128xbf16> to vector<128x128xbf16>
    %cst_10 = arith.constant dense<0.000000e+00> : vector<128x128xf32>
    %14 = tpu.matmul %11, %13, %cst_10 {dimension_numbers = #tpu.dot_dimension_numbers<[1], [0], [0], [1], [0, 0, 1, 1], [], []>} : vector<128x128xbf16>, vector<128x128xbf16>, vector<128x128xf32> -> vector<128x128xf32>
    %c0_11 = arith.constant 0 : index
    %c0_12 = arith.constant 0 : index
    %c0_13 = arith.constant 0 : index
    %15 = vector.load %arg5[%c0_11, %c0_12, %c0_13] : memref<1x1x128xf32, #tpu.memory_space<vmem>>, vector<1x1x128xf32>
    %16 = vector.shape_cast %15 : vector<1x1x128xf32> to vector<1x128xf32>
    %17 = vector.broadcast %16 : vector<1x128xf32> to vector<128x128xf32>
    %18 = arith.addf %14, %17 : vector<128x128xf32>
    %cst_14 = arith.constant 0.000000e+00 : f32
    %19 = vector.broadcast %cst_14 : f32 to vector<128x128xf32>
    %20 = arith.maximumf %18, %19 : vector<128x128xf32>
    %21 = arith.truncf %20 : vector<128x128xf32> to vector<128x128xbf16>
    %c0_15 = arith.constant 0 : index
    %c0_16 = arith.constant 0 : index
    %c0_17 = arith.constant 0 : index
    %22 = vector.load %arg6[%c0_15, %c0_16, %c0_17] : memref<1x128x128xbf16, #tpu.memory_space<vmem>>, vector<1x128x128xbf16>
    %23 = vector.shape_cast %22 : vector<1x128x128xbf16> to vector<128x128xbf16>
    %cst_18 = arith.constant dense<0.000000e+00> : vector<128x128xf32>
    %24 = tpu.matmul %21, %23, %cst_18 {dimension_numbers = #tpu.dot_dimension_numbers<[1], [0], [0], [1], [0, 0, 1, 1], [], []>} : vector<128x128xbf16>, vector<128x128xbf16>, vector<128x128xf32> -> vector<128x128xf32>
    %c0_19 = arith.constant 0 : index
    %c0_20 = arith.constant 0 : index
    %c0_21 = arith.constant 0 : index
    %25 = vector.load %arg7[%c0_19, %c0_20, %c0_21] : memref<1x1x128xf32, #tpu.memory_space<vmem>>, vector<1x1x128xf32>
    %26 = vector.shape_cast %25 : vector<1x1x128xf32> to vector<1x128xf32>
    %27 = vector.broadcast %26 : vector<1x128xf32> to vector<128x128xf32>
    %28 = arith.addf %24, %27 : vector<128x128xf32>
    %c0_22 = arith.constant 0 : index
    %c0_23 = arith.constant 0 : index
    %c0_24 = arith.constant 0 : index
    %29 = vector.load %arg8[%c0_22, %c0_23, %c0_24] : memref<1x1x128xf32, #tpu.memory_space<vmem>>, vector<1x1x128xf32>
    %30 = vector.shape_cast %29 : vector<1x1x128xf32> to vector<1x128xf32>
    %31 = vector.broadcast %30 : vector<1x128xf32> to vector<128x128xf32>
    %32 = arith.mulf %28, %31 : vector<128x128xf32>
    %c0_25 = arith.constant 0 : index
    %c0_26 = arith.constant 0 : index
    %c0_27 = arith.constant 0 : index
    %33 = vector.load %arg9[%c0_25, %c0_26, %c0_27] : memref<1x1x128xf32, #tpu.memory_space<vmem>>, vector<1x1x128xf32>
    %34 = vector.shape_cast %33 : vector<1x1x128xf32> to vector<1x128xf32>
    %35 = vector.broadcast %34 : vector<1x128xf32> to vector<128x128xf32>
    %36 = arith.addf %32, %35 : vector<128x128xf32>
    %c2_i32 = arith.constant 2 : i32
    %37 = arith.cmpi ne, %arg0, %c2_i32 : i32
    %38 = arith.extui %37 : i1 to i32
    %c0_i32_28 = arith.constant 0 : i32
    %39 = arith.cmpi ne, %38, %c0_i32_28 : i32
    scf.if %39 {
      %cst_31 = arith.constant 0.000000e+00 : f32
      %43 = vector.broadcast %cst_31 : f32 to vector<128x128xf32>
      %44 = arith.maximumf %36, %43 : vector<128x128xf32>
      %c0_32 = arith.constant 0 : index
      %c0_33 = arith.constant 0 : index
      %45 = vector.load %arg14[%c0_32, %c0_33] : memref<128x128xf32, #tpu.memory_space<vmem>>, vector<128x128xf32>
      tpu.vector_store %arg14[%c0_32, %c0_33], %44 {strides = array<i32>} : memref<128x128xf32, #tpu.memory_space<vmem>>, vector<128x128xf32>,
    } else {
    }
    %c2_i32_29 = arith.constant 2 : i32
    %40 = arith.cmpi eq, %arg0, %c2_i32_29 : i32
    %41 = arith.extui %40 : i1 to i32
    %c0_i32_30 = arith.constant 0 : i32
    %42 = arith.cmpi ne, %41, %c0_i32_30 : i32
    scf.if %42 {
      %c0_31 = arith.constant 0 : index
      %c0_32 = arith.constant 0 : index
      %43 = vector.load %arg10[%c0_31, %c0_32] : memref<8x128xbf16, #tpu.memory_space<vmem>>, vector<8x128xbf16>
      %44 = arith.truncf %36 : vector<128x128xf32> to vector<128x128xbf16>
      %cst_33 = arith.constant dense<0.000000e+00> : vector<8x128xf32>
      %45 = tpu.matmul %43, %44, %cst_33 {dimension_numbers = #tpu.dot_dimension_numbers<[1], [0], [0], [1], [0, 0, 1, 1], [], []>} : vector<8x128xbf16>, vector<128x128xbf16>, vector<8x128xf32> -> vector<8x128xf32>
      %46 = arith.truncf %45 : vector<8x128xf32> to vector<8x128xbf16>
      %c0_34 = arith.constant 0 : index
      %c0_35 = arith.constant 0 : index
      %47 = vector.load %arg11[%c0_34, %c0_35] : memref<128x128xbf16, #tpu.memory_space<vmem>>, vector<128x128xbf16>
      %cst_36 = arith.constant dense<0.000000e+00> : vector<8x128xf32>
      %48 = tpu.matmul %46, %47, %cst_36 {dimension_numbers = #tpu.dot_dimension_numbers<[1], [0], [0], [1], [0, 0, 1, 1], [], []>} : vector<8x128xbf16>, vector<128x128xbf16>, vector<8x128xf32> -> vector<8x128xf32>
      %c0_37 = arith.constant 0 : index
      %c0_38 = arith.constant 0 : index
      %49 = vector.load %arg12[%c0_37, %c0_38] : memref<1x128xf32, #tpu.memory_space<vmem>>, vector<1x128xf32>
      %50 = vector.broadcast %49 : vector<1x128xf32> to vector<8x128xf32>
      %51 = arith.addf %48, %50 : vector<8x128xf32>
      %c0_39 = arith.constant 0 : index
      %c0_40 = arith.constant 0 : index
      %52 = vector.load %arg13[%c0_39, %c0_40] : memref<8x128xf32, #tpu.memory_space<vmem>>, vector<8x128xf32>
      tpu.vector_store %arg13[%c0_39, %c0_40], %51 {strides = array<i32>} : memref<8x128xf32, #tpu.memory_space<vmem>>, vector<8x128xf32>,
    } else {
    }
    return
  }
  func.func @transform_0(%arg0: i32) -> (i32, i32) {
    %c0_i32 = arith.constant 0 : i32
    %c0_i32_0 = arith.constant 0 : i32
    %c0_i32_1 = arith.constant 0 : i32
    return %c0_i32, %c0_i32_0 : i32, i32
  }
  func.func @transform_1(%arg0: i32) -> (i32, i32) {
    %c0_i32 = arith.constant 0 : i32
    %c0_i32_0 = arith.constant 0 : i32
    %c0_i32_1 = arith.constant 0 : i32
    return %c0_i32, %c0_i32_0 : i32, i32
  }
  func.func @transform_2(%arg0: i32) -> (i32, i32, i32) {
    %c0_i32 = arith.constant 0 : i32
    %c0_i32_0 = arith.constant 0 : i32
    %c0_i32_1 = arith.constant 0 : i32
    return %arg0, %c0_i32, %c0_i32_0 : i32, i32, i32
  }
  func.func @transform_3(%arg0: i32) -> (i32, i32, i32) {
    %c0_i32 = arith.constant 0 : i32
    %c0_i32_0 = arith.constant 0 : i32
    %c0_i32_1 = arith.constant 0 : i32
    return %arg0, %c0_i32, %c0_i32_0 : i32, i32, i32
  }
  func.func @transform_4(%arg0: i32) -> (i32, i32, i32) {
    %c0_i32 = arith.constant 0 : i32
    %c0_i32_0 = arith.constant 0 : i32
    %c0_i32_1 = arith.constant 0 : i32
    return %arg0, %c0_i32, %c0_i32_0 : i32, i32, i32
  }
  func.func @transform_5(%arg0: i32) -> (i32, i32, i32) {
    %c0_i32 = arith.constant 0 : i32
    %c0_i32_0 = arith.constant 0 : i32
    %c0_i32_1 = arith.constant 0 : i32
    return %arg0, %c0_i32, %c0_i32_0 : i32, i32, i32
  }
  func.func @transform_6(%arg0: i32) -> (i32, i32, i32) {
    %c0_i32 = arith.constant 0 : i32
    %c0_i32_0 = arith.constant 0 : i32
    %c0_i32_1 = arith.constant 0 : i32
    return %arg0, %c0_i32, %c0_i32_0 : i32, i32, i32
  }
  func.func @transform_7(%arg0: i32) -> (i32, i32, i32) {
    %c0_i32 = arith.constant 0 : i32
    %c0_i32_0 = arith.constant 0 : i32
    %c0_i32_1 = arith.constant 0 : i32
    return %arg0, %c0_i32, %c0_i32_0 : i32, i32, i32
  }
  func.func @transform_8(%arg0: i32) -> (i32, i32, i32) {
    %c0_i32 = arith.constant 0 : i32
    %c0_i32_0 = arith.constant 0 : i32
    %c0_i32_1 = arith.constant 0 : i32
    return %arg0, %c0_i32, %c0_i32_0 : i32, i32, i32
  }
  func.func @transform_9(%arg0: i32) -> (i32, i32) {
    %c0_i32 = arith.constant 0 : i32
    %c0_i32_0 = arith.constant 0 : i32
    %c0_i32_1 = arith.constant 0 : i32
    return %c0_i32, %c0_i32_0 : i32, i32
  }
  func.func @transform_10(%arg0: i32) -> (i32, i32) {
    %c0_i32 = arith.constant 0 : i32
    %c0_i32_0 = arith.constant 0 : i32
    %c0_i32_1 = arith.constant 0 : i32
    return %c0_i32, %c0_i32_0 : i32, i32
  }
  func.func @transform_11(%arg0: i32) -> (i32, i32) {
    %c0_i32 = arith.constant 0 : i32
    %c0_i32_0 = arith.constant 0 : i32
    %c0_i32_1 = arith.constant 0 : i32
    return %c0_i32, %c0_i32_0 : i32, i32
  }
  func.func @transform_12(%arg0: i32) -> (i32, i32) {
    %c0_i32 = arith.constant 0 : i32
    %c0_i32_0 = arith.constant 0 : i32
    %c0_i32_1 = arith.constant 0 : i32
    return %c0_i32, %c0_i32_0 : i32, i32
  }
}

</mosaic_0001>

<llo_original>
// kernel: tpu_custom_call.1
$region0: #{tpu_custom_call.1}
  #allocation0 [shape = 'u32[]', space=smem, size = 0x4, offset = 0x4, fixed_abs, tag = 'smem constant byte address 0x4 - core index']
  #allocation1 [shape = 'u32[144,128]{1,0:T(1,128)}', space=vmem, size = 0x12000, scoped, tag = 'internal scratch']
  #allocation2 [shape = 'f32[128,128]{1,0:T(8,128)}', space=vmem, size = 0x10000, scoped, tag = 'scratch operand']
  %s0 = inlined_call_operand.hbm [shape: f32[128,128], index: 0, kind: input, shape index: {}]
  %s1 = inlined_call_operand.hbm [shape: bf16[128,128], index: 1, kind: input, shape index: {}]
  %s2 = inlined_call_operand.hbm [shape: bf16[3,128,128], index: 2, kind: input, shape index: {}]
  %s3 = inlined_call_operand.hbm [shape: bf16[3,128,128], index: 3, kind: input, shape index: {}]
  %s4 = inlined_call_operand.vmem [shape: f32[3,1,128], index: 4, kind: input, shape index: {}]
  %s5 = inlined_call_operand.hbm [shape: bf16[3,128,128], index: 5, kind: input, shape index: {}]
  %s6 = inlined_call_operand.vmem [shape: f32[3,1,128], index: 6, kind: input, shape index: {}]
  %s7 = inlined_call_operand.vmem [shape: f32[3,1,128], index: 7, kind: input, shape index: {}]
  %s8 = inlined_call_operand.vmem [shape: f32[3,1,128], index: 8, kind: input, shape index: {}]
  %s9 = inlined_call_operand.vmem [shape: bf16[8,128], index: 9, kind: input, shape index: {}]
  %s10 = inlined_call_operand.hbm [shape: bf16[128,128], index: 10, kind: input, shape index: {}]
  %s11 = inlined_call_operand.vmem [shape: f32[1,128], index: 11, kind: input, shape index: {}]
  %s12 = inlined_call_operand.hbm [shape: f32[8,128], index: 12, kind: output, shape index: {}]
  %s13 = sld [smem:[#allocation0]]
  $region117: #{tpu_custom_call.1} parent=0
    _
  %s15 = ssub.s32 1, %s13
  %s16 = scalar_select 0, %s15, %s13
  $region1: #{tpu_custom_call.1} parent=0
    #allocation3 [shape = 'u8[65536]{0}', space=vmem, size = 0x10000, scoped, tag = 'input window, operand 0, single buffered']
    #allocation4 [shape = 's32[2]{0}', space=sflag, size = 0x8, scoped, tag = 'scoped memory for tpu_custom_call.1']
    #allocation5 [shape = 's32[2]{0}', space=sflag, size = 0x8, scoped, tag = 'scoped memory for tpu_custom_call.1']
    #allocation6 [shape = 'u8[32768]{0}', space=vmem, size = 0x8000, scoped, tag = 'input window, operand 1, single buffered']
    #allocation7 [shape = 's32[1]{0}', space=sflag, size = 0x4, scoped, tag = 'scoped memory for tpu_custom_call.1']
    #allocation8 [shape = 'u8[65536]{0}', space=vmem, size = 0x10000, scoped, tag = 'input window, operand 2']
    #allocation9 [shape = 'u8[65536]{0}', space=vmem, size = 0x10000, scoped, tag = 'input window, operand 3']
    #allocation10 [shape = 'u8[65536]{0}', space=vmem, size = 0x10000, scoped, tag = 'input window, operand 5']
    #allocation11 [shape = 'u8[32768]{0}', space=vmem, size = 0x8000, scoped, tag = 'input window, operand 10, single buffered']
    #allocation12 [shape = 'u8[4096]{0}', space=vmem, size = 0x1000, scoped, tag = 'output window, operand 0, single buffered']
    %17 = vsyncpa [#allocation4], 0
    %18 = vsyncpa [#allocation7], 0
    %19 = vsyncpa [#allocation5], 0
    loop: start=0, step=1, limit=5
    $region2: #{tpu_custom_call.1} parent=1 // loop_pre_header
      _
    $region3: #{tpu_custom_call.1} parent=1 // loop_header
      %s21 = sphi 0, %s25
      %p22 = scmp.ge.s32.totalorder %s21, 5
      %s29 = sphi 0, %s29
      %s31 = sphi 0, %s29
      %s32 = sphi 0, %s31
      %s46 = sphi 0, %s32
      %s50 = sphi 0, %s50
      %s52 = sphi 0, %s50
      %s53 = sphi 0, %s52
      %s67 = sphi 0, %s53
      %s73 = sphi 0, %s75
      %s76 = sphi 0, %s73
      %s77 = sphi 0, %s76
      %s93 = sphi 0, %s77
      %s99 = sphi 0, %s101
      %s102 = sphi 0, %s99
      %s103 = sphi 0, %s102
      %s119 = sphi 0, %s103
      %s125 = sphi 0, %s127
      %s128 = sphi 0, %s125
      %s129 = sphi 0, %s128
      %s145 = sphi 0, %s129
      %s151 = sphi 0, %s153
      %s154 = sphi 0, %s151
      %s155 = sphi 0, %s154
      %s171 = sphi 0, %s155
      %s177 = sphi 0, %s179
      %s180 = sphi 0, %s177
      %s181 = sphi 0, %s180
      %s197 = sphi 0, %s181
      %s203 = sphi 0, %s205
      %s206 = sphi 0, %s203
      %s207 = sphi 0, %s206
      %s223 = sphi 0, %s207
      %s229 = sphi 0, %s231
      %s232 = sphi 0, %s229
      %s233 = sphi 0, %s232
      %s249 = sphi 0, %s233
      %s253 = sphi 0, %s253
      %s255 = sphi 0, %s253
      %s256 = sphi 0, %s255
      %s270 = sphi 0, %s256
      %s274 = sphi 0, %s274
      %s276 = sphi 0, %s274
      %s277 = sphi 0, %s276
      %s291 = sphi 0, %s277
      %s295 = sphi 0, %s295
      %s297 = sphi 0, %s295
      %s298 = sphi 0, %s297
      %s312 = sphi 0, %s298
      %s316 = sphi 0, %s316
      %s318 = sphi 0, %s316
      %s319 = sphi 0, %s318
      %s333 = sphi 0, %s319
    $region4: #{tpu_custom_call.1} parent=1 // loop_header_branch
      %24 = sbr.rel (%p22) target = $region8
    $region5: #{tpu_custom_call.1} parent=1 // loop_body
      %s26 = ssub.s32 %s21, 1
      %s27 = ssub.s32 %s21, 2
      %s28 = sadd.s32 %s21, 1
      %s30 = sadd.s32 %s29, 1
      %p33 = scmp.eq.s32.totalorder %s21, 2
      %p34 = scmp.ne.s32.totalorder %s29, %s31
      %p35 = scmp.eq.s32.totalorder %s21, 0
      %p36 = por %p34, %p35
      %p37 = scmp.ne.s32.totalorder %s29, %s31
      %p38 = scmp.eq.s32.totalorder %s26, 2
      %p39 = por %p37, %p38
      %p40 = scmp.ne.s32.totalorder %s31, %s32
      %p41 = scmp.eq.s32.totalorder %s26, 0
      %p42 = por %p40, %p41
      %p43 = scmp.ne.s32.totalorder %s31, %s32
      %p44 = scmp.eq.s32.totalorder %s27, 2
      %p45 = por %p43, %p44
      %p47 = scmp.ne.s32.totalorder %s32, %s46
      %p48 = scmp.eq.s32.totalorder %s27, 0
      %p49 = por %p47, %p48
      %s51 = sadd.s32 %s50, 1
      %p54 = scmp.eq.s32.totalorder %s21, 2
      %p55 = scmp.ne.s32.totalorder %s50, %s52
      %p56 = scmp.eq.s32.totalorder %s21, 0
      %p57 = por %p55, %p56
      %p58 = scmp.ne.s32.totalorder %s50, %s52
      %p59 = scmp.eq.s32.totalorder %s26, 2
      %p60 = por %p58, %p59
      %p61 = scmp.ne.s32.totalorder %s52, %s53
      %p62 = scmp.eq.s32.totalorder %s26, 0
      %p63 = por %p61, %p62
      %p64 = scmp.ne.s32.totalorder %s52, %s53
      %p65 = scmp.eq.s32.totalorder %s27, 2
      %p66 = por %p64, %p65
      %p68 = scmp.ne.s32.totalorder %s53, %s67
      %p69 = scmp.eq.s32.totalorder %s27, 0
      %p70 = por %p68, %p69
      %s71 = ssub.s32 %s21, %s28
      %p72 = scmp.eq.s32.totalorder %s71, 0
      %s74 = sadd.s32 %s73, 1
      %s75 = scalar_select %p72, %s73, %s74
      %p78 = pneg %p72
      %p79 = scmp.eq.s32.totalorder %s21, 2
      %p80 = por %p78, %p79
      %p81 = scmp.ne.s32.totalorder %s73, %s76
      %p82 = scmp.eq.s32.totalorder %s21, 0
      %p83 = por %p81, %p82
      %p84 = scmp.ne.s32.totalorder %s73, %s76
      %p85 = scmp.eq.s32.totalorder %s26, 2
      %p86 = por %p84, %p85
      %p87 = scmp.ne.s32.totalorder %s76, %s77
      %p88 = scmp.eq.s32.totalorder %s26, 0
      %p89 = por %p87, %p88
      %p90 = scmp.ne.s32.totalorder %s76, %s77
      %p91 = scmp.eq.s32.totalorder %s27, 2
      %p92 = por %p90, %p91
      %p94 = scmp.ne.s32.totalorder %s77, %s93
      %p95 = scmp.eq.s32.totalorder %s27, 0
      %p96 = por %p94, %p95
      %s97 = ssub.s32 %s21, %s28
      %p98 = scmp.eq.s32.totalorder %s97, 0
      %s100 = sadd.s32 %s99, 1
      %s101 = scalar_select %p98, %s99, %s100
      %p104 = pneg %p98
      %p105 = scmp.eq.s32.totalorder %s21, 2
      %p106 = por %p104, %p105
      %p107 = scmp.ne.s32.totalorder %s99, %s102
      %p108 = scmp.eq.s32.totalorder %s21, 0
      %p109 = por %p107, %p108
      %p110 = scmp.ne.s32.totalorder %s99, %s102
      %p111 = scmp.eq.s32.totalorder %s26, 2
      %p112 = por %p110, %p111
      %p113 = scmp.ne.s32.totalorder %s102, %s103
      %p114 = scmp.eq.s32.totalorder %s26, 0
      %p115 = por %p113, %p114
      %p116 = scmp.ne.s32.totalorder %s102, %s103
      %p117 = scmp.eq.s32.totalorder %s27, 2
      %p118 = por %p116, %p117
      %p120 = scmp.ne.s32.totalorder %s103, %s119
      %p121 = scmp.eq.s32.totalorder %s27, 0
      %p122 = por %p120, %p121
      %s123 = ssub.s32 %s21, %s28
      %p124 = scmp.eq.s32.totalorder %s123, 0
      %s126 = sadd.s32 %s125, 1
      %s127 = scalar_select %p124, %s125, %s126
      %p130 = pneg %p124
      %p131 = scmp.eq.s32.totalorder %s21, 2
      %p132 = por %p130, %p131
      %p133 = scmp.ne.s32.totalorder %s125, %s128
      %p134 = scmp.eq.s32.totalorder %s21, 0
      %p135 = por %p133, %p134
      %p136 = scmp.ne.s32.totalorder %s125, %s128
      %p137 = scmp.eq.s32.totalorder %s26, 2
      %p138 = por %p136, %p137
      %p139 = scmp.ne.s32.totalorder %s128, %s129
      %p140 = scmp.eq.s32.totalorder %s26, 0
      %p141 = por %p139, %p140
      %p142 = scmp.ne.s32.totalorder %s128, %s129
      %p143 = scmp.eq.s32.totalorder %s27, 2
      %p144 = por %p142, %p143
      %p146 = scmp.ne.s32.totalorder %s129, %s145
      %p147 = scmp.eq.s32.totalorder %s27, 0
      %p148 = por %p146, %p147
      %s149 = ssub.s32 %s21, %s28
      %p150 = scmp.eq.s32.totalorder %s149, 0
      %s152 = sadd.s32 %s151, 1
      %s153 = scalar_select %p150, %s151, %s152
      %p156 = pneg %p150
      %p157 = scmp.eq.s32.totalorder %s21, 2
      %p158 = por %p156, %p157
      %p159 = scmp.ne.s32.totalorder %s151, %s154
      %p160 = scmp.eq.s32.totalorder %s21, 0
      %p161 = por %p159, %p160
      %p162 = scmp.ne.s32.totalorder %s151, %s154
      %p163 = scmp.eq.s32.totalorder %s26, 2
      %p164 = por %p162, %p163
      %p165 = scmp.ne.s32.totalorder %s154, %s155
      %p166 = scmp.eq.s32.totalorder %s26, 0
      %p167 = por %p165, %p166
      %p168 = scmp.ne.s32.totalorder %s154, %s155
      %p169 = scmp.eq.s32.totalorder %s27, 2
      %p170 = por %p168, %p169
      %p172 = scmp.ne.s32.totalorder %s155, %s171
      %p173 = scmp.eq.s32.totalorder %s27, 0
      %p174 = por %p172, %p173
      %s175 = ssub.s32 %s21, %s28
      %p176 = scmp.eq.s32.totalorder %s175, 0
      %s178 = sadd.s32 %s177, 1
      %s179 = scalar_select %p176, %s177, %s178
      %p182 = pneg %p176
      %p183 = scmp.eq.s32.totalorder %s21, 2
      %p184 = por %p182, %p183
      %p185 = scmp.ne.s32.totalorder %s177, %s180
      %p186 = scmp.eq.s32.totalorder %s21, 0
      %p187 = por %p185, %p186
      %p188 = scmp.ne.s32.totalorder %s177, %s180
      %p189 = scmp.eq.s32.totalorder %s26, 2
      %p190 = por %p188, %p189
      %p191 = scmp.ne.s32.totalorder %s180, %s181
      %p192 = scmp.eq.s32.totalorder %s26, 0
      %p193 = por %p191, %p192
      %p194 = scmp.ne.s32.totalorder %s180, %s181
      %p195 = scmp.eq.s32.totalorder %s27, 2
      %p196 = por %p194, %p195
      %p198 = scmp.ne.s32.totalorder %s181, %s197
      %p199 = scmp.eq.s32.totalorder %s27, 0
      %p200 = por %p198, %p199
      %s201 = ssub.s32 %s21, %s28
      %p202 = scmp.eq.s32.totalorder %s201, 0
      %s204 = sadd.s32 %s203, 1
      %s205 = scalar_select %p202, %s203, %s204
      %p208 = pneg %p202
      %p209 = scmp.eq.s32.totalorder %s21, 2
      %p210 = por %p208, %p209
      %p211 = scmp.ne.s32.totalorder %s203, %s206
      %p212 = scmp.eq.s32.totalorder %s21, 0
      %p213 = por %p211, %p212
      %p214 = scmp.ne.s32.totalorder %s203, %s206
      %p215 = scmp.eq.s32.totalorder %s26, 2
      %p216 = por %p214, %p215
      %p217 = scmp.ne.s32.totalorder %s206, %s207
      %p218 = scmp.eq.s32.totalorder %s26, 0
      %p219 = por %p217, %p218
      %p220 = scmp.ne.s32.totalorder %s206, %s207
      %p221 = scmp.eq.s32.totalorder %s27, 2
      %p222 = por %p220, %p221
      %p224 = scmp.ne.s32.totalorder %s207, %s223
      %p225 = scmp.eq.s32.totalorder %s27, 0
      %p226 = por %p224, %p225
      %s227 = ssub.s32 %s21, %s28
      %p228 = scmp.eq.s32.totalorder %s227, 0
      %s230 = sadd.s32 %s229, 1
      %s231 = scalar_select %p228, %s229, %s230
      %p234 = pneg %p228
      %p235 = scmp.eq.s32.totalorder %s21, 2
      %p236 = por %p234, %p235
      %p237 = scmp.ne.s32.totalorder %s229, %s232
      %p238 = scmp.eq.s32.totalorder %s21, 0
      %p239 = por %p237, %p238
      %p240 = scmp.ne.s32.totalorder %s229, %s232
      %p241 = scmp.eq.s32.totalorder %s26, 2
      %p242 = por %p240, %p241
      %p243 = scmp.ne.s32.totalorder %s232, %s233
      %p244 = scmp.eq.s32.totalorder %s26, 0
      %p245 = por %p243, %p244
      %p246 = scmp.ne.s32.totalorder %s232, %s233
      %p247 = scmp.eq.s32.totalorder %s27, 2
      %p248 = por %p246, %p247
      %p250 = scmp.ne.s32.totalorder %s233, %s249
      %p251 = scmp.eq.s32.totalorder %s27, 0
      %p252 = por %p250, %p251
      %s254 = sadd.s32 %s253, 1
      %p257 = scmp.eq.s32.totalorder %s21, 2
      %p258 = scmp.ne.s32.totalorder %s253, %s255
      %p259 = scmp.eq.s32.totalorder %s21, 0
      %p260 = por %p258, %p259
      %p261 = scmp.ne.s32.totalorder %s253, %s255
      %p262 = scmp.eq.s32.totalorder %s26, 2
      %p263 = por %p261, %p262
      %p264 = scmp.ne.s32.totalorder %s255, %s256
      %p265 = scmp.eq.s32.totalorder %s26, 0
      %p266 = por %p264, %p265
      %p267 = scmp.ne.s32.totalorder %s255, %s256
      %p268 = scmp.eq.s32.totalorder %s27, 2
      %p269 = por %p267, %p268
      %p271 = scmp.ne.s32.totalorder %s256, %s270
      %p272 = scmp.eq.s32.totalorder %s27, 0
      %p273 = por %p271, %p272
      %s275 = sadd.s32 %s274, 1
      %p278 = scmp.eq.s32.totalorder %s21, 2
      %p279 = scmp.ne.s32.totalorder %s274, %s276
      %p280 = scmp.eq.s32.totalorder %s21, 0
      %p281 = por %p279, %p280
      %p282 = scmp.ne.s32.totalorder %s274, %s276
      %p283 = scmp.eq.s32.totalorder %s26, 2
      %p284 = por %p282, %p283
      %p285 = scmp.ne.s32.totalorder %s276, %s277
      %p286 = scmp.eq.s32.totalorder %s26, 0
      %p287 = por %p285, %p286
      %p288 = scmp.ne.s32.totalorder %s276, %s277
      %p289 = scmp.eq.s32.totalorder %s27, 2
      %p290 = por %p288, %p289
      %p292 = scmp.ne.s32.totalorder %s277, %s291
      %p293 = scmp.eq.s32.totalorder %s27, 0
      %p294 = por %p292, %p293
      %s296 = sadd.s32 %s295, 1
      %p299 = scmp.eq.s32.totalorder %s21, 2
      %p300 = scmp.ne.s32.totalorder %s295, %s297
      %p301 = scmp.eq.s32.totalorder %s21, 0
      %p302 = por %p300, %p301
      %p303 = scmp.ne.s32.totalorder %s295, %s297
      %p304 = scmp.eq.s32.totalorder %s26, 2
      %p305 = por %p303, %p304
      %p306 = scmp.ne.s32.totalorder %s297, %s298
      %p307 = scmp.eq.s32.totalorder %s26, 0
      %p308 = por %p306, %p307
      %p309 = scmp.ne.s32.totalorder %s297, %s298
      %p310 = scmp.eq.s32.totalorder %s27, 2
      %p311 = por %p309, %p310
      %p313 = scmp.ne.s32.totalorder %s298, %s312
      %p314 = scmp.eq.s32.totalorder %s27, 0
      %p315 = por %p313, %p314
      %s317 = sadd.s32 %s316, 1
      %p320 = scmp.eq.s32.totalorder %s21, 2
      %p321 = scmp.ne.s32.totalorder %s316, %s318
      %p322 = scmp.eq.s32.totalorder %s21, 0
      %p323 = por %p321, %p322
      %p324 = scmp.ne.s32.totalorder %s316, %s318
      %p325 = scmp.eq.s32.totalorder %s26, 2
      %p326 = por %p324, %p325
      %p327 = scmp.ne.s32.totalorder %s318, %s319
      %p328 = scmp.eq.s32.totalorder %s26, 0
      %p329 = por %p327, %p328
      %p330 = scmp.ne.s32.totalorder %s318, %s319
      %p331 = scmp.eq.s32.totalorder %s27, 2
      %p332 = por %p330, %p331
      %p334 = scmp.ne.s32.totalorder %s319, %s333
      %p335 = scmp.eq.s32.totalorder %s27, 0
      %p336 = por %p334, %p335
      %p337 = scmp.le.s32.totalorder 1, %s21
      %p338 = scmp.lt.s32.totalorder %s21, 4
      %p339 = pnand %p337, %p338
      %p340 = pneg %p339
      // Predicated region
      $region9: #{tpu_custom_call.1} parent=5 // pred_check
        _
      $region10: #{tpu_custom_call.1} parent=5 // pred_check_branch
        %342 = sbr.rel (%p339) target = $region12
      $region11: #{tpu_custom_call.1} parent=5 // pred_region
        %s343 = ssub.s32 %s21, 1
        // Predicated region
        $region13: #{tpu_custom_call.1} parent=11 // pred_check
          %p344 = pneg %p42
        $region14: #{tpu_custom_call.1} parent=11 // pred_check_branch
          %346 = sbr.rel (%p344) target = $region16
        $region15: #{tpu_custom_call.1} parent=11 // pred_region
          %s348 = ssub.s32 2048, 2048
          %349 = vsyncadd [#allocation4], %s348
          %s350 = sshll.u32 [#allocation3], 4
          %s351 = int_to_ptr.vmem [resolvable:$true] %s350
          %356 = dma.hbm_to_vmem [thread:$0]  %s0, 2048, %s351, [#allocation4], 128, 128, 8
        $region16: #{tpu_custom_call.1} parent=11 // pred_fallthru
          _
        // Predicated region
        $region17: #{tpu_custom_call.1} parent=11 // pred_check
          %p357 = pneg %p63
        $region18: #{tpu_custom_call.1} parent=11 // pred_check_branch
          %359 = sbr.rel (%p357) target = $region20
        $region19: #{tpu_custom_call.1} parent=11 // pred_region
          %s361 = ssub.s32 1024, 1024
          %362 = vsyncadd [#allocation7], %s361
          %s363 = sshll.u32 [#allocation6], 4
          %s364 = int_to_ptr.vmem [resolvable:$true] %s363
          %369 = dma.hbm_to_vmem [thread:$0]  %s1, 1024, %s364, [#allocation7], 64, 64, 4
        $region20: #{tpu_custom_call.1} parent=11 // pred_fallthru
          _
        // Predicated region
        $region21: #{tpu_custom_call.1} parent=11 // pred_check
          %p370 = pneg %p266
        $region22: #{tpu_custom_call.1} parent=11 // pred_check_branch
          %372 = sbr.rel (%p370) target = $region24
        $region23: #{tpu_custom_call.1} parent=11 // pred_region
          _
        $region24: #{tpu_custom_call.1} parent=11 // pred_fallthru
          _
        // Predicated region
        $region25: #{tpu_custom_call.1} parent=11 // pred_check
          %p373 = pneg %p287
        $region26: #{tpu_custom_call.1} parent=11 // pred_check_branch
          %375 = sbr.rel (%p373) target = $region28
        $region27: #{tpu_custom_call.1} parent=11 // pred_region
          %s377 = ssub.s32 1024, 1024
          %378 = vsyncadd [#allocation7], %s377
          %s379 = sshll.u32 [#allocation11], 4
          %s380 = int_to_ptr.vmem [resolvable:$true] %s379
          %385 = dma.hbm_to_vmem [thread:$0]  %s10, 1024, %s380, [#allocation7], 64, 64, 4
        $region28: #{tpu_custom_call.1} parent=11 // pred_fallthru
          _
        // Predicated region
        $region29: #{tpu_custom_call.1} parent=11 // pred_check
          %p386 = pneg %p308
        $region30: #{tpu_custom_call.1} parent=11 // pred_check_branch
          %388 = sbr.rel (%p386) target = $region32
        $region31: #{tpu_custom_call.1} parent=11 // pred_region
          _
        $region32: #{tpu_custom_call.1} parent=11 // pred_fallthru
          _
      $region12: #{tpu_custom_call.1} parent=5 // pred_fallthru
        _
      %p389 = scmp.lt.s32.totalorder %s21, 3
      // Predicated region
      $region33: #{tpu_custom_call.1} parent=5 // pred_check
        %p390 = pneg %p389
      $region34: #{tpu_custom_call.1} parent=5 // pred_check_branch
        %392 = sbr.rel (%p390) target = $region36
      $region35: #{tpu_custom_call.1} parent=5 // pred_region
        // Predicated region
        $region37: #{tpu_custom_call.1} parent=35 // pred_check
          %p393 = pneg %p83
        $region38: #{tpu_custom_call.1} parent=35 // pred_check_branch
          %395 = sbr.rel (%p393) target = $region40
        $region39: #{tpu_custom_call.1} parent=35 // pred_region
          %s396 = sand.u32 %s21, 1
          %s397 = scalar_lea.sflag [#allocation4], %s396
          %s398 = sand.u32 %s73, 1
          %s399 = smul.addr %s398, 64
          %s400 = scalar_lea.vmem [#allocation8], %s399
          %s402 = ssub.s32 1024, 1024
          %403 = vsyncadd %s397, %s402
          %s404 = smul.addr %s21, 16
          %s405 = smul.addr %s404, 64
          %s406 = scalar_lea.hbm %s2, %s405
          %s407 = sshll.u32 %s400, 4
          %s408 = int_to_ptr.vmem [resolvable:$true] %s407
          %413 = dma.hbm_to_vmem [thread:$0]  %s406, 1024, %s408, %s397, 64, 64, 4
        $region40: #{tpu_custom_call.1} parent=35 // pred_fallthru
          _
        // Predicated region
        $region41: #{tpu_custom_call.1} parent=35 // pred_check
          %p414 = pneg %p109
        $region42: #{tpu_custom_call.1} parent=35 // pred_check_branch
          %416 = sbr.rel (%p414) target = $region44
        $region43: #{tpu_custom_call.1} parent=35 // pred_region
          %s417 = sand.u32 %s21, 1
          %s418 = scalar_lea.sflag [#allocation4], %s417
          %s419 = sand.u32 %s99, 1
          %s420 = smul.addr %s419, 64
          %s421 = scalar_lea.vmem [#allocation9], %s420
          %s423 = ssub.s32 1024, 1024
          %424 = vsyncadd %s418, %s423
          %s425 = smul.addr %s21, 16
          %s426 = smul.addr %s425, 64
          %s427 = scalar_lea.hbm %s3, %s426
          %s428 = sshll.u32 %s421, 4
          %s429 = int_to_ptr.vmem [resolvable:$true] %s428
          %434 = dma.hbm_to_vmem [thread:$0]  %s427, 1024, %s429, %s418, 64, 64, 4
        $region44: #{tpu_custom_call.1} parent=35 // pred_fallthru
          _
        // Predicated region
        $region45: #{tpu_custom_call.1} parent=35 // pred_check
          %p435 = pneg %p135
        $region46: #{tpu_custom_call.1} parent=35 // pred_check_branch
          %437 = sbr.rel (%p435) target = $region48
        $region47: #{tpu_custom_call.1} parent=35 // pred_region
          %p438 = scmp.lt.s32.totalorder %s21, 2
          %s439 = scalar_select %p438, %s21, 2
          %s440 = scalar_lea.vmem %s4, %s439
        $region48: #{tpu_custom_call.1} parent=35 // pred_fallthru
          _
        // Predicated region
        $region49: #{tpu_custom_call.1} parent=35 // pred_check
          %p441 = pneg %p161
        $region50: #{tpu_custom_call.1} parent=35 // pred_check_branch
          %443 = sbr.rel (%p441) target = $region52
        $region51: #{tpu_custom_call.1} parent=35 // pred_region
          %s444 = sand.u32 %s21, 1
          %s445 = scalar_lea.sflag [#allocation4], %s444
          %s446 = sand.u32 %s151, 1
          %s447 = smul.addr %s446, 64
          %s448 = scalar_lea.vmem [#allocation10], %s447
          %s450 = ssub.s32 1024, 1024
          %451 = vsyncadd %s445, %s450
          %s452 = smul.addr %s21, 16
          %s453 = smul.addr %s452, 64
          %s454 = scalar_lea.hbm %s5, %s453
          %s455 = sshll.u32 %s448, 4
          %s456 = int_to_ptr.vmem [resolvable:$true] %s455
          %461 = dma.hbm_to_vmem [thread:$0]  %s454, 1024, %s456, %s445, 64, 64, 4
        $region52: #{tpu_custom_call.1} parent=35 // pred_fallthru
          _
        // Predicated region
        $region53: #{tpu_custom_call.1} parent=35 // pred_check
          %p462 = pneg %p187
        $region54: #{tpu_custom_call.1} parent=35 // pred_check_branch
          %464 = sbr.rel (%p462) target = $region56
        $region55: #{tpu_custom_call.1} parent=35 // pred_region
          %p465 = scmp.lt.s32.totalorder %s21, 2
          %s466 = scalar_select %p465, %s21, 2
          %s467 = scalar_lea.vmem %s6, %s466
        $region56: #{tpu_custom_call.1} parent=35 // pred_fallthru
          _
        // Predicated region
        $region57: #{tpu_custom_call.1} parent=35 // pred_check
          %p468 = pneg %p213
        $region58: #{tpu_custom_call.1} parent=35 // pred_check_branch
          %470 = sbr.rel (%p468) target = $region60
        $region59: #{tpu_custom_call.1} parent=35 // pred_region
          %p471 = scmp.lt.s32.totalorder %s21, 2
          %s472 = scalar_select %p471, %s21, 2
          %s473 = scalar_lea.vmem %s7, %s472
        $region60: #{tpu_custom_call.1} parent=35 // pred_fallthru
          _
        // Predicated region
        $region61: #{tpu_custom_call.1} parent=35 // pred_check
          %p474 = pneg %p239
        $region62: #{tpu_custom_call.1} parent=35 // pred_check_branch
          %476 = sbr.rel (%p474) target = $region64
        $region63: #{tpu_custom_call.1} parent=35 // pred_region
          %p477 = scmp.lt.s32.totalorder %s21, 2
          %s478 = scalar_select %p477, %s21, 2
          %s479 = scalar_lea.vmem %s8, %s478
        $region64: #{tpu_custom_call.1} parent=35 // pred_fallthru
          _
      $region36: #{tpu_custom_call.1} parent=5 // pred_fallthru
        _
      %p480 = scmp.le.s32.totalorder 1, %s21
      %p481 = scmp.lt.s32.totalorder %s21, 4
      %p482 = pnand %p480, %p481
      %p483 = pneg %p482
      // Predicated region
      $region65: #{tpu_custom_call.1} parent=5 // pred_check
        _
      $region66: #{tpu_custom_call.1} parent=5 // pred_check_branch
        %485 = sbr.rel (%p482) target = $region68
      $region67: #{tpu_custom_call.1} parent=5 // pred_region
        %s486 = ssub.s32 %s21, 1
        // Predicated region
        $region69: #{tpu_custom_call.1} parent=67 // pred_check
          %p487 = pneg %p42
        $region70: #{tpu_custom_call.1} parent=67 // pred_check_branch
          %489 = sbr.rel (%p487) target = $region72
        $region71: #{tpu_custom_call.1} parent=67 // pred_region
          %490 = dma.done [#allocation4], 2048
        $region72: #{tpu_custom_call.1} parent=67 // pred_fallthru
          _
        // Predicated region
        $region73: #{tpu_custom_call.1} parent=67 // pred_check
          %p491 = pneg %p63
        $region74: #{tpu_custom_call.1} parent=67 // pred_check_branch
          %493 = sbr.rel (%p491) target = $region76
        $region75: #{tpu_custom_call.1} parent=67 // pred_region
          %494 = dma.done [#allocation7], 1024
        $region76: #{tpu_custom_call.1} parent=67 // pred_fallthru
          _
        %s495 = sand.u32 %s26, 1
        %s496 = scalar_lea.sflag [#allocation4], %s495
        %s497 = sand.u32 %s76, 1
        %s498 = smul.addr %s497, 64
        %s499 = scalar_lea.vmem [#allocation8], %s498
        // Predicated region
        $region77: #{tpu_custom_call.1} parent=67 // pred_check
          %p500 = pneg %p89
        $region78: #{tpu_custom_call.1} parent=67 // pred_check_branch
          %502 = sbr.rel (%p500) target = $region80
        $region79: #{tpu_custom_call.1} parent=67 // pred_region
          %503 = dma.done %s496, 1024
        $region80: #{tpu_custom_call.1} parent=67 // pred_fallthru
          _
        %s504 = sand.u32 %s26, 1
        %s505 = scalar_lea.sflag [#allocation4], %s504
        %s506 = sand.u32 %s102, 1
        %s507 = smul.addr %s506, 64
        %s508 = scalar_lea.vmem [#allocation9], %s507
        // Predicated region
        $region81: #{tpu_custom_call.1} parent=67 // pred_check
          %p509 = pneg %p115
        $region82: #{tpu_custom_call.1} parent=67 // pred_check_branch
          %511 = sbr.rel (%p509) target = $region84
        $region83: #{tpu_custom_call.1} parent=67 // pred_region
          %512 = dma.done %s505, 1024
        $region84: #{tpu_custom_call.1} parent=67 // pred_fallthru
          _
        %s513 = sand.u32 %s26, 1
        %s514 = scalar_lea.sflag [#allocation4], %s513
        %s515 = sand.u32 %s154, 1
        %s516 = smul.addr %s515, 64
        %s517 = scalar_lea.vmem [#allocation10], %s516
        // Predicated region
        $region85: #{tpu_custom_call.1} parent=67 // pred_check
          %p518 = pneg %p167
        $region86: #{tpu_custom_call.1} parent=67 // pred_check_branch
          %520 = sbr.rel (%p518) target = $region88
        $region87: #{tpu_custom_call.1} parent=67 // pred_region
          %521 = dma.done %s514, 1024
        $region88: #{tpu_custom_call.1} parent=67 // pred_fallthru
          _
        // Predicated region
        $region89: #{tpu_custom_call.1} parent=67 // pred_check
          %p522 = pneg %p287
        $region90: #{tpu_custom_call.1} parent=67 // pred_check_branch
          %524 = sbr.rel (%p522) target = $region92
        $region91: #{tpu_custom_call.1} parent=67 // pred_region
          %525 = dma.done [#allocation7], 1024
        $region92: #{tpu_custom_call.1} parent=67 // pred_fallthru
          _
        %p526 = pneg %p42
        %p527 = pneg %p39
        %p528 = pneg %p63
        %p529 = pneg %p60
        %s530 = sand.u32 %s26, 1
        %s531 = scalar_lea.sflag [#allocation4], %s530
        %s532 = sand.u32 %s76, 1
        %s533 = smul.addr %s532, 64
        %s534 = scalar_lea.vmem [#allocation8], %s533
        %p535 = pneg %p89
        %p536 = pneg %p86
        %s537 = sand.u32 %s26, 1
        %s538 = scalar_lea.sflag [#allocation4], %s537
        %s539 = sand.u32 %s102, 1
        %s540 = smul.addr %s539, 64
        %s541 = scalar_lea.vmem [#allocation9], %s540
        %p542 = pneg %p115
        %p543 = pneg %p112
        %p544 = scmp.lt.s32.totalorder %s26, 2
        %s545 = scalar_select %p544, %s26, 2
        %s546 = scalar_lea.vmem %s4, %s545
        %p547 = pneg %p141
        %p548 = pneg %p138
        %s549 = sand.u32 %s26, 1
        %s550 = scalar_lea.sflag [#allocation4], %s549
        %s551 = sand.u32 %s154, 1
        %s552 = smul.addr %s551, 64
        %s553 = scalar_lea.vmem [#allocation10], %s552
        %p554 = pneg %p167
        %p555 = pneg %p164
        %p556 = scmp.lt.s32.totalorder %s26, 2
        %s557 = scalar_select %p556, %s26, 2
        %s558 = scalar_lea.vmem %s6, %s557
        %p559 = pneg %p193
        %p560 = pneg %p190
        %p561 = scmp.lt.s32.totalorder %s26, 2
        %s562 = scalar_select %p561, %s26, 2
        %s563 = scalar_lea.vmem %s7, %s562
        %p564 = pneg %p219
        %p565 = pneg %p216
        %p566 = scmp.lt.s32.totalorder %s26, 2
        %s567 = scalar_select %p566, %s26, 2
        %s568 = scalar_lea.vmem %s8, %s567
        %p569 = pneg %p245
        %p570 = pneg %p242
        %p571 = pneg %p266
        %p572 = pneg %p263
        %p573 = pneg %p287
        %p574 = pneg %p284
        %p575 = pneg %p308
        %p576 = pneg %p305
        %p577 = pneg %p329
        %p578 = pneg %p326
        %p579 = scmp.lt.s32.totalorder %s26, 2
        %s580 = scalar_select %p579, %s26, 2
        %s581 = scalar_lea.vmem %s4, %s580
        %p582 = scmp.lt.s32.totalorder %s26, 2
        %s583 = scalar_select %p582, %s26, 2
        %s584 = scalar_lea.vmem %s6, %s583
        %p585 = scmp.lt.s32.totalorder %s26, 2
        %s586 = scalar_select %p585, %s26, 2
        %s587 = scalar_lea.vmem %s7, %s586
        %p588 = scmp.lt.s32.totalorder %s26, 2
        %s589 = scalar_select %p588, %s26, 2
        %s590 = scalar_lea.vmem %s8, %s589
        %p592 = scmp.eq.s32.totalorder %s26, 0
        // Predicated region
        $region93: #{tpu_custom_call.1} parent=67 // pred_check
          %p593 = pneg %p592
        $region94: #{tpu_custom_call.1} parent=67 // pred_check_branch
          %595 = sbr.rel (%p593) target = $region96
        $region95: #{tpu_custom_call.1} parent=67 // pred_region
          %v596 = vld [vmem:[#allocation3] sm:$0xff]
          %v597 = vld [vmem:[#allocation3 + $0x8] sm:$0xff]
          %v598 = vld [vmem:[#allocation3 + $0x10] sm:$0xff]
          %v599 = vld [vmem:[#allocation3 + $0x18] sm:$0xff]
          %v600 = vld [vmem:[#allocation3 + $0x20] sm:$0xff]
          %v601 = vld [vmem:[#allocation3 + $0x28] sm:$0xff]
          %v602 = vld [vmem:[#allocation3 + $0x30] sm:$0xff]
          %v603 = vld [vmem:[#allocation3 + $0x38] sm:$0xff]
          %v604 = vld [vmem:[#allocation3 + $0x40] sm:$0xff]
          %v605 = vld [vmem:[#allocation3 + $0x48] sm:$0xff]
          %v606 = vld [vmem:[#allocation3 + $0x50] sm:$0xff]
          %v607 = vld [vmem:[#allocation3 + $0x58] sm:$0xff]
          %v608 = vld [vmem:[#allocation3 + $0x60] sm:$0xff]
          %v609 = vld [vmem:[#allocation3 + $0x68] sm:$0xff]
          %v610 = vld [vmem:[#allocation3 + $0x70] sm:$0xff]
          %v611 = vld [vmem:[#allocation3 + $0x78] sm:$0xff]
          %612 = vst [vmem:[#allocation2] sm:$0xff] %v596
          %613 = vst [vmem:[#allocation2 + $0x8] sm:$0xff] %v597
          %614 = vst [vmem:[#allocation2 + $0x10] sm:$0xff] %v598
          %615 = vst [vmem:[#allocation2 + $0x18] sm:$0xff] %v599
          %616 = vst [vmem:[#allocation2 + $0x20] sm:$0xff] %v600
          %617 = vst [vmem:[#allocation2 + $0x28] sm:$0xff] %v601
          %618 = vst [vmem:[#allocation2 + $0x30] sm:$0xff] %v602
          %619 = vst [vmem:[#allocation2 + $0x38] sm:$0xff] %v603
          %620 = vst [vmem:[#allocation2 + $0x40] sm:$0xff] %v604
          %621 = vst [vmem:[#allocation2 + $0x48] sm:$0xff] %v605
          %622 = vst [vmem:[#allocation2 + $0x50] sm:$0xff] %v606
          %623 = vst [vmem:[#allocation2 + $0x58] sm:$0xff] %v607
          %624 = vst [vmem:[#allocation2 + $0x60] sm:$0xff] %v608
          %625 = vst [vmem:[#allocation2 + $0x68] sm:$0xff] %v609
          %626 = vst [vmem:[#allocation2 + $0x70] sm:$0xff] %v610
          %627 = vst [vmem:[#allocation2 + $0x78] sm:$0xff] %v611
        $region96: #{tpu_custom_call.1} parent=67 // pred_fallthru
          _
        %v628 = vld [vmem:[#allocation6] sm:$0xf]
        %v629 = vld [vmem:[#allocation6 + $0x4] sm:$0xf]
        %v630 = vld [vmem:[#allocation6 + $0x8] sm:$0xf]
        %v631 = vld [vmem:[#allocation6 + $0xc] sm:$0xf]
        %v632 = vld [vmem:[#allocation6 + $0x10] sm:$0xf]
        %v633 = vld [vmem:[#allocation6 + $0x14] sm:$0xf]
        %v634 = vld [vmem:[#allocation6 + $0x18] sm:$0xf]
        %v635 = vld [vmem:[#allocation6 + $0x1c] sm:$0xf]
        %v636 = vld [vmem:[#allocation6 + $0x20] sm:$0xf]
        %v637 = vld [vmem:[#allocation6 + $0x24] sm:$0xf]
        %v638 = vld [vmem:[#allocation6 + $0x28] sm:$0xf]
        %v639 = vld [vmem:[#allocation6 + $0x2c] sm:$0xf]
        %v640 = vld [vmem:[#allocation6 + $0x30] sm:$0xf]
        %v641 = vld [vmem:[#allocation6 + $0x34] sm:$0xf]
        %v642 = vld [vmem:[#allocation6 + $0x38] sm:$0xf]
        %v643 = vld [vmem:[#allocation6 + $0x3c] sm:$0xf]
        %v644 = vld [vmem:[#allocation2] sm:$0xff]
        %v645 = vld [vmem:[#allocation2 + $0x8] sm:$0xff]
        %v646 = vld [vmem:[#allocation2 + $0x10] sm:$0xff]
        %v647 = vld [vmem:[#allocation2 + $0x18] sm:$0xff]
        %v648 = vld [vmem:[#allocation2 + $0x20] sm:$0xff]
        %v649 = vld [vmem:[#allocation2 + $0x28] sm:$0xff]
        %v650 = vld [vmem:[#allocation2 + $0x30] sm:$0xff]
        %v651 = vld [vmem:[#allocation2 + $0x38] sm:$0xff]
        %v652 = vld [vmem:[#allocation2 + $0x40] sm:$0xff]
        %v653 = vld [vmem:[#allocation2 + $0x48] sm:$0xff]
        %v654 = vld [vmem:[#allocation2 + $0x50] sm:$0xff]
        %v655 = vld [vmem:[#allocation2 + $0x58] sm:$0xff]
        %v656 = vld [vmem:[#allocation2 + $0x60] sm:$0xff]
        %v657 = vld [vmem:[#allocation2 + $0x68] sm:$0xff]
        %v658 = vld [vmem:[#allocation2 + $0x70] sm:$0xff]
        %v659 = vld [vmem:[#allocation2 + $0x78] sm:$0xff]
        %v660 = vpack.c.bf16 %v645, %v644
        %v661 = vpack.c.bf16 %v647, %v646
        %v662 = vpack.c.bf16 %v649, %v648
        %v663 = vpack.c.bf16 %v651, %v650
        %v664 = vpack.c.bf16 %v653, %v652
        %v665 = vpack.c.bf16 %v655, %v654
        %v666 = vpack.c.bf16 %v657, %v656
        %v667 = vpack.c.bf16 %v659, %v658
        %v668 = vld [vmem:[%s499] sm:$0xf]
        %v669 = vld [vmem:[%s499 + $0x4] sm:$0xf]
        %v670 = vld [vmem:[%s499 + $0x8] sm:$0xf]
        %v671 = vld [vmem:[%s499 + $0xc] sm:$0xf]
        %v672 = vld [vmem:[%s499 + $0x10] sm:$0xf]
        %v673 = vld [vmem:[%s499 + $0x14] sm:$0xf]
        %v674 = vld [vmem:[%s499 + $0x18] sm:$0xf]
        %v675 = vld [vmem:[%s499 + $0x1c] sm:$0xf]
        %v676 = vld [vmem:[%s499 + $0x20] sm:$0xf]
        %v677 = vld [vmem:[%s499 + $0x24] sm:$0xf]
        %v678 = vld [vmem:[%s499 + $0x28] sm:$0xf]
        %v679 = vld [vmem:[%s499 + $0x2c] sm:$0xf]
        %v680 = vld [vmem:[%s499 + $0x30] sm:$0xf]
        %v681 = vld [vmem:[%s499 + $0x34] sm:$0xf]
        %v682 = vld [vmem:[%s499 + $0x38] sm:$0xf]
        %v683 = vld [vmem:[%s499 + $0x3c] sm:$0xf]
        %v684 = vunpack.c.l.bf16 %v668
        %v685 = vunpack.c.l.bf16 %v669
        %v686 = vunpack.c.l.bf16 %v670
        %v687 = vunpack.c.l.bf16 %v671
        %v688 = vunpack.c.l.bf16 %v672
        %v689 = vunpack.c.l.bf16 %v673
        %v690 = vunpack.c.l.bf16 %v674
        %v691 = vunpack.c.l.bf16 %v675
        %v692 = vunpack.c.l.bf16 %v676
        %v693 = vunpack.c.l.bf16 %v677
        %v694 = vunpack.c.l.bf16 %v678
        %v695 = vunpack.c.l.bf16 %v679
        %v696 = vunpack.c.l.bf16 %v680
        %v697 = vunpack.c.l.bf16 %v681
        %v698 = vunpack.c.l.bf16 %v682
        %v699 = vunpack.c.l.bf16 %v683
        %v716 = vunpack.c.l.b16 %v628
        %v717 = vunpack.c.l.b16 %v629
        %v718 = vunpack.c.l.b16 %v630
        %v719 = vunpack.c.l.b16 %v631
        %v720 = vunpack.c.l.b16 %v632
        %v721 = vunpack.c.l.b16 %v633
        %v722 = vunpack.c.l.b16 %v634
        %v723 = vunpack.c.l.b16 %v635
        %v724 = vunpack.c.l.b16 %v636
        %v725 = vunpack.c.l.b16 %v637
        %v726 = vunpack.c.l.b16 %v638
        %v727 = vunpack.c.l.b16 %v639
        %v728 = vunpack.c.l.b16 %v640
        %v729 = vunpack.c.l.b16 %v641
        %v730 = vunpack.c.l.b16 %v642
        %v731 = vunpack.c.l.b16 %v643
        %v732 = vpack.c.b16 %v717, %v716
        %v733 = vpack.c.b16 %v719, %v718
        %v734 = vpack.c.b16 %v721, %v720
        %v735 = vpack.c.b16 %v723, %v722
        %v736 = vpack.c.b16 %v725, %v724
        %v737 = vpack.c.b16 %v727, %v726
        %v738 = vpack.c.b16 %v729, %v728
        %v739 = vpack.c.b16 %v731, %v730
        %748 = vmatprep.subr.bf16.mxu0 0
        %749 = vmatpush1.bf16.msra.mxu0 %v660
        %750 = vmatprep.subr.bf16.mxu0 0
        %751 = vmatpush1.bf16.msra.mxu0 %v661
        %752 = vmatprep.subr.bf16.mxu0 0
        %753 = vmatpush1.bf16.msra.mxu0 %v662
        %754 = vmatprep.subr.bf16.mxu0 0
        %755 = vmatpush1.bf16.msra.mxu0 %v663
        %756 = vmatprep.subr.bf16.mxu0 0
        %757 = vmatpush1.bf16.msra.mxu0 %v664
        %758 = vmatprep.subr.bf16.mxu0 0
        %759 = vmatpush1.bf16.msra.mxu0 %v665
        %760 = vmatprep.subr.bf16.mxu0 0
        %761 = vmatpush1.bf16.msra.mxu0 %v666
        %762 = vmatprep.subr.bf16.mxu0 0
        %763 = vmatpush1.bf16.msra.mxu0 %v667
        %764 = vmatprep.subr.bf16.mxu0 0
        %765 = vmatpush1.bf16.msra.mxu0 0
        %766 = vmatprep.subr.bf16.mxu0 0
        %767 = vmatpush1.bf16.msra.mxu0 0
        %768 = vmatprep.subr.bf16.mxu0 0
        %769 = vmatpush1.bf16.msra.mxu0 0
        %770 = vmatprep.subr.bf16.mxu0 0
        %771 = vmatpush1.bf16.msra.mxu0 0
        %772 = vmatprep.subr.bf16.mxu0 0
        %773 = vmatpush1.bf16.msra.mxu0 0
        %774 = vmatprep.subr.bf16.mxu0 0
        %775 = vmatpush1.bf16.msra.mxu0 0
        %776 = vmatprep.subr.bf16.mxu0 0
        %777 = vmatpush1.bf16.msra.mxu0 0
        %778 = vmatprep.subr.bf16.mxu0 0
        %779 = vmatpush1.bf16.msra.mxu0 0
        %780 = vmatprep.mubr.bf16.mxu0 0
        %781 = vmatmul.mubr.bf16.gmra.mrb[0].mxu0 %v732
        %v782 = vpop.f32.mrb[0].mxu0
        %v783 = vadd.f32 %v684, %v782
        %v784 = vpop.f32.mrb[0].mxu0
        %v785 = vpop.f32.mrb[0].mxu0
        %v786 = vadd.f32 %v685, %v785
        %v787 = vpop.f32.mrb[0].mxu0
        %788 = vmatprep.mubr.bf16.mxu0 0
        %789 = vmatmul.mubr.bf16.gmra.mrb[0].mxu0 %v733
        %v790 = vpop.f32.mrb[0].mxu0
        %v791 = vadd.f32 %v686, %v790
        %v792 = vpop.f32.mrb[0].mxu0
        %v793 = vpop.f32.mrb[0].mxu0
        %v794 = vadd.f32 %v687, %v793
        %v795 = vpop.f32.mrb[0].mxu0
        %796 = vmatprep.mubr.bf16.mxu0 0
        %797 = vmatmul.mubr.bf16.gmra.mrb[0].mxu0 %v734
        %v798 = vpop.f32.mrb[0].mxu0
        %v799 = vadd.f32 %v688, %v798
        %v800 = vpop.f32.mrb[0].mxu0
        %v801 = vpop.f32.mrb[0].mxu0
        %v802 = vadd.f32 %v689, %v801
        %v803 = vpop.f32.mrb[0].mxu0
        %804 = vmatprep.mubr.bf16.mxu0 0
        %805 = vmatmul.mubr.bf16.gmra.mrb[0].mxu0 %v735
        %v806 = vpop.f32.mrb[0].mxu0
        %v807 = vadd.f32 %v690, %v806
        %v808 = vpop.f32.mrb[0].mxu0
        %v809 = vpop.f32.mrb[0].mxu0
        %v810 = vadd.f32 %v691, %v809
        %v811 = vpop.f32.mrb[0].mxu0
        %812 = vmatprep.mubr.bf16.mxu0 0
        %813 = vmatmul.mubr.bf16.gmra.mrb[0].mxu0 %v736
        %v814 = vpop.f32.mrb[0].mxu0
        %v815 = vadd.f32 %v692, %v814
        %v816 = vpop.f32.mrb[0].mxu0
        %v817 = vpop.f32.mrb[0].mxu0
        %v818 = vadd.f32 %v693, %v817
        %v819 = vpop.f32.mrb[0].mxu0
        %820 = vmatprep.mubr.bf16.mxu0 0
        %821 = vmatmul.mubr.bf16.gmra.mrb[0].mxu0 %v737
        %v822 = vpop.f32.mrb[0].mxu0
        %v823 = vadd.f32 %v694, %v822
        %v824 = vpop.f32.mrb[0].mxu0
        %v825 = vpop.f32.mrb[0].mxu0
        %v826 = vadd.f32 %v695, %v825
        %v827 = vpop.f32.mrb[0].mxu0
        %828 = vmatprep.mubr.bf16.mxu0 0
        %829 = vmatmul.mubr.bf16.gmra.mrb[0].mxu0 %v738
        %v830 = vpop.f32.mrb[0].mxu0
        %v831 = vadd.f32 %v696, %v830
        %v832 = vpop.f32.mrb[0].mxu0
        %v833 = vpop.f32.mrb[0].mxu0
        %v834 = vadd.f32 %v697, %v833
        %v835 = vpop.f32.mrb[0].mxu0
        %836 = vmatprep.mubr.bf16.mxu0 0
        %837 = vmatmul.mubr.bf16.gmra.mrb[0].mxu0 %v739
        %v838 = vpop.f32.mrb[0].mxu0
        %v839 = vadd.f32 %v698, %v838
        %v840 = vpop.f32.mrb[0].mxu0
        %v841 = vpop.f32.mrb[0].mxu0
        %v842 = vadd.f32 %v699, %v841
        %v843 = vpop.f32.mrb[0].mxu0
        %844 = vdwg.mxu0
        %v845 = vpack.c.bf16 %v786, %v783
        %v846 = vpack.c.bf16 %v794, %v791
        %v847 = vpack.c.bf16 %v802, %v799
        %v848 = vpack.c.bf16 %v810, %v807
        %v849 = vpack.c.bf16 %v818, %v815
        %v850 = vpack.c.bf16 %v826, %v823
        %v851 = vpack.c.bf16 %v834, %v831
        %v852 = vpack.c.bf16 %v842, %v839
        %v853 = vld [vmem:[%s508] sm:$0xf]
        %v854 = vld [vmem:[%s508 + $0x4] sm:$0xf]
        %v855 = vld [vmem:[%s508 + $0x8] sm:$0xf]
        %v856 = vld [vmem:[%s508 + $0xc] sm:$0xf]
        %v857 = vld [vmem:[%s508 + $0x10] sm:$0xf]
        %v858 = vld [vmem:[%s508 + $0x14] sm:$0xf]
        %v859 = vld [vmem:[%s508 + $0x18] sm:$0xf]
        %v860 = vld [vmem:[%s508 + $0x1c] sm:$0xf]
        %v861 = vld [vmem:[%s508 + $0x20] sm:$0xf]
        %v862 = vld [vmem:[%s508 + $0x24] sm:$0xf]
        %v863 = vld [vmem:[%s508 + $0x28] sm:$0xf]
        %v864 = vld [vmem:[%s508 + $0x2c] sm:$0xf]
        %v865 = vld [vmem:[%s508 + $0x30] sm:$0xf]
        %v866 = vld [vmem:[%s508 + $0x34] sm:$0xf]
        %v867 = vld [vmem:[%s508 + $0x38] sm:$0xf]
        %v868 = vld [vmem:[%s508 + $0x3c] sm:$0xf]
        %v869 = vld [vmem:[%s581] sm:$0x1]
        %v871 = vlaneseq
        %v872 = vshrl.u32 %v871, 7
        %v873 = vsub.s32 0, %v872
        %v874 = vrot.slane %v869, %v873
        %v892 = vunpack.c.l.b16 %v853
        %v893 = vunpack.c.l.b16 %v854
        %v894 = vunpack.c.l.b16 %v855
        %v895 = vunpack.c.l.b16 %v856
        %v896 = vunpack.c.l.b16 %v857
        %v897 = vunpack.c.l.b16 %v858
        %v898 = vunpack.c.l.b16 %v859
        %v899 = vunpack.c.l.b16 %v860
        %v900 = vunpack.c.l.b16 %v861
        %v901 = vunpack.c.l.b16 %v862
        %v902 = vunpack.c.l.b16 %v863
        %v903 = vunpack.c.l.b16 %v864
        %v904 = vunpack.c.l.b16 %v865
        %v905 = vunpack.c.l.b16 %v866
        %v906 = vunpack.c.l.b16 %v867
        %v907 = vunpack.c.l.b16 %v868
        %v908 = vpack.c.b16 %v893, %v892
        %v909 = vpack.c.b16 %v895, %v894
        %v910 = vpack.c.b16 %v897, %v896
        %v911 = vpack.c.b16 %v899, %v898
        %v912 = vpack.c.b16 %v901, %v900
        %v913 = vpack.c.b16 %v903, %v902
        %v914 = vpack.c.b16 %v905, %v904
        %v915 = vpack.c.b16 %v907, %v906
        %924 = vmatprep.subr.bf16.mxu0 0
        %925 = vmatpush1.bf16.msra.mxu0 %v908
        %926 = vmatprep.subr.bf16.mxu0 0
        %927 = vmatpush1.bf16.msra.mxu0 %v909
        %928 = vmatprep.subr.bf16.mxu0 0
        %929 = vmatpush1.bf16.msra.mxu0 %v910
        %930 = vmatprep.subr.bf16.mxu0 0
        %931 = vmatpush1.bf16.msra.mxu0 %v911
        %932 = vmatprep.subr.bf16.mxu0 0
        %933 = vmatpush1.bf16.msra.mxu0 %v912
        %934 = vmatprep.subr.bf16.mxu0 0
        %935 = vmatpush1.bf16.msra.mxu0 %v913
        %936 = vmatprep.subr.bf16.mxu0 0
        %937 = vmatpush1.bf16.msra.mxu0 %v914
        %938 = vmatprep.subr.bf16.mxu0 0
        %939 = vmatpush1.bf16.msra.mxu0 %v915
        %940 = vmatprep.subr.bf16.mxu0 0
        %941 = vmatpush1.bf16.msra.mxu0 0
        %942 = vmatprep.subr.bf16.mxu0 0
        %943 = vmatpush1.bf16.msra.mxu0 0
        %944 = vmatprep.subr.bf16.mxu0 0
        %945 = vmatpush1.bf16.msra.mxu0 0
        %946 = vmatprep.subr.bf16.mxu0 0
        %947 = vmatpush1.bf16.msra.mxu0 0
        %948 = vmatprep.subr.bf16.mxu0 0
        %949 = vmatpush1.bf16.msra.mxu0 0
        %950 = vmatprep.subr.bf16.mxu0 0
        %951 = vmatpush1.bf16.msra.mxu0 0
        %952 = vmatprep.subr.bf16.mxu0 0
        %953 = vmatpush1.bf16.msra.mxu0 0
        %954 = vmatprep.subr.bf16.mxu0 0
        %955 = vmatpush1.bf16.msra.mxu0 0
        %956 = vmatprep.mubr.bf16.mxu0 0
        %957 = vmatmul.mubr.bf16.gmra.mrb[0].mxu0 %v845
        %v958 = vpop.f32.mrb[0].mxu0
        %v959 = vadd.f32 %v874, %v958
        %v960 = vpop.f32.mrb[0].mxu0
        %v961 = vpop.f32.mrb[0].mxu0
        %v962 = vadd.f32 %v874, %v961
        %v963 = vpop.f32.mrb[0].mxu0
        %964 = vmatprep.mubr.bf16.mxu0 0
        %965 = vmatmul.mubr.bf16.gmra.mrb[0].mxu0 %v846
        %v966 = vpop.f32.mrb[0].mxu0
        %v967 = vadd.f32 %v874, %v966
        %v968 = vpop.f32.mrb[0].mxu0
        %v969 = vpop.f32.mrb[0].mxu0
        %v970 = vadd.f32 %v874, %v969
        %v971 = vpop.f32.mrb[0].mxu0
        %972 = vmatprep.mubr.bf16.mxu0 0
        %973 = vmatmul.mubr.bf16.gmra.mrb[0].mxu0 %v847
        %v974 = vpop.f32.mrb[0].mxu0
        %v975 = vadd.f32 %v874, %v974
        %v976 = vpop.f32.mrb[0].mxu0
        %v977 = vpop.f32.mrb[0].mxu0
        %v978 = vadd.f32 %v874, %v977
        %v979 = vpop.f32.mrb[0].mxu0
        %980 = vmatprep.mubr.bf16.mxu0 0
        %981 = vmatmul.mubr.bf16.gmra.mrb[0].mxu0 %v848
        %v982 = vpop.f32.mrb[0].mxu0
        %v983 = vadd.f32 %v874, %v982
        %v984 = vpop.f32.mrb[0].mxu0
        %v985 = vpop.f32.mrb[0].mxu0
        %v986 = vadd.f32 %v874, %v985
        %v987 = vpop.f32.mrb[0].mxu0
        %988 = vmatprep.mubr.bf16.mxu0 0
        %989 = vmatmul.mubr.bf16.gmra.mrb[0].mxu0 %v849
        %v990 = vpop.f32.mrb[0].mxu0
        %v991 = vadd.f32 %v874, %v990
        %v992 = vpop.f32.mrb[0].mxu0
        %v993 = vpop.f32.mrb[0].mxu0
        %v994 = vadd.f32 %v874, %v993
        %v995 = vpop.f32.mrb[0].mxu0
        %996 = vmatprep.mubr.bf16.mxu0 0
        %997 = vmatmul.mubr.bf16.gmra.mrb[0].mxu0 %v850
        %v998 = vpop.f32.mrb[0].mxu0
        %v999 = vadd.f32 %v874, %v998
        %v1000 = vpop.f32.mrb[0].mxu0
        %v1001 = vpop.f32.mrb[0].mxu0
        %v1002 = vadd.f32 %v874, %v1001
        %v1003 = vpop.f32.mrb[0].mxu0
        %1004 = vmatprep.mubr.bf16.mxu0 0
        %1005 = vmatmul.mubr.bf16.gmra.mrb[0].mxu0 %v851
        %v1006 = vpop.f32.mrb[0].mxu0
        %v1007 = vadd.f32 %v874, %v1006
        %v1008 = vpop.f32.mrb[0].mxu0
        %v1009 = vpop.f32.mrb[0].mxu0
        %v1010 = vadd.f32 %v874, %v1009
        %v1011 = vpop.f32.mrb[0].mxu0
        %1012 = vmatprep.mubr.bf16.mxu0 0
        %1013 = vmatmul.mubr.bf16.gmra.mrb[0].mxu0 %v852
        %v1014 = vpop.f32.mrb[0].mxu0
        %v1015 = vadd.f32 %v874, %v1014
        %v1016 = vpop.f32.mrb[0].mxu0
        %v1017 = vpop.f32.mrb[0].mxu0
        %v1018 = vadd.f32 %v874, %v1017
        %v1019 = vpop.f32.mrb[0].mxu0
        %1020 = vdwg.mxu0
        %v1021 = vmax.f32 %v959, 0.0
        %v1022 = vmax.f32 %v962, 0.0
        %v1023 = vmax.f32 %v967, 0.0
        %v1024 = vmax.f32 %v970, 0.0
        %v1025 = vmax.f32 %v975, 0.0
        %v1026 = vmax.f32 %v978, 0.0
        %v1027 = vmax.f32 %v983, 0.0
        %v1028 = vmax.f32 %v986, 0.0
        %v1029 = vmax.f32 %v991, 0.0
        %v1030 = vmax.f32 %v994, 0.0
        %v1031 = vmax.f32 %v999, 0.0
        %v1032 = vmax.f32 %v1002, 0.0
        %v1033 = vmax.f32 %v1007, 0.0
        %v1034 = vmax.f32 %v1010, 0.0
        %v1035 = vmax.f32 %v1015, 0.0
        %v1036 = vmax.f32 %v1018, 0.0
        %v1037 = vpack.c.bf16 %v1022, %v1021
        %v1038 = vpack.c.bf16 %v1024, %v1023
        %v1039 = vpack.c.bf16 %v1026, %v1025
        %v1040 = vpack.c.bf16 %v1028, %v1027
        %v1041 = vpack.c.bf16 %v1030, %v1029
        %v1042 = vpack.c.bf16 %v1032, %v1031
        %v1043 = vpack.c.bf16 %v1034, %v1033
        %v1044 = vpack.c.bf16 %v1036, %v1035
        %v1045 = vld [vmem:[%s517] sm:$0xf]
        %v1046 = vld [vmem:[%s517 + $0x4] sm:$0xf]
        %v1047 = vld [vmem:[%s517 + $0x8] sm:$0xf]
        %v1048 = vld [vmem:[%s517 + $0xc] sm:$0xf]
        %v1049 = vld [vmem:[%s517 + $0x10] sm:$0xf]
        %v1050 = vld [vmem:[%s517 + $0x14] sm:$0xf]
        %v1051 = vld [vmem:[%s517 + $0x18] sm:$0xf]
        %v1052 = vld [vmem:[%s517 + $0x1c] sm:$0xf]
        %v1053 = vld [vmem:[%s517 + $0x20] sm:$0xf]
        %v1054 = vld [vmem:[%s517 + $0x24] sm:$0xf]
        %v1055 = vld [vmem:[%s517 + $0x28] sm:$0xf]
        %v1056 = vld [vmem:[%s517 + $0x2c] sm:$0xf]
        %v1057 = vld [vmem:[%s517 + $0x30] sm:$0xf]
        %v1058 = vld [vmem:[%s517 + $0x34] sm:$0xf]
        %v1059 = vld [vmem:[%s517 + $0x38] sm:$0xf]
        %v1060 = vld [vmem:[%s517 + $0x3c] sm:$0xf]
        %v1061 = vld [vmem:[%s584] sm:$0x1]
        %v1063 = vlaneseq
        %v1064 = vshrl.u32 %v1063, 7
        %v1065 = vsub.s32 0, %v1064
        %v1066 = vrot.slane %v1061, %v1065
        %v1084 = vunpack.c.l.b16 %v1045
        %v1085 = vunpack.c.l.b16 %v1046
        %v1086 = vunpack.c.l.b16 %v1047
        %v1087 = vunpack.c.l.b16 %v1048
        %v1088 = vunpack.c.l.b16 %v1049
        %v1089 = vunpack.c.l.b16 %v1050
        %v1090 = vunpack.c.l.b16 %v1051
        %v1091 = vunpack.c.l.b16 %v1052
        %v1092 = vunpack.c.l.b16 %v1053
        %v1093 = vunpack.c.l.b16 %v1054
        %v1094 = vunpack.c.l.b16 %v1055
        %v1095 = vunpack.c.l.b16 %v1056
        %v1096 = vunpack.c.l.b16 %v1057
        %v1097 = vunpack.c.l.b16 %v1058
        %v1098 = vunpack.c.l.b16 %v1059
        %v1099 = vunpack.c.l.b16 %v1060
        %v1100 = vpack.c.b16 %v1085, %v1084
        %v1101 = vpack.c.b16 %v1087, %v1086
        %v1102 = vpack.c.b16 %v1089, %v1088
        %v1103 = vpack.c.b16 %v1091, %v1090
        %v1104 = vpack.c.b16 %v1093, %v1092
        %v1105 = vpack.c.b16 %v1095, %v1094
        %v1106 = vpack.c.b16 %v1097, %v1096
        %v1107 = vpack.c.b16 %v1099, %v1098
        %1116 = vmatprep.subr.bf16.mxu0 0
        %1117 = vmatpush1.bf16.msra.mxu0 %v1100
        %1118 = vmatprep.subr.bf16.mxu0 0
        %1119 = vmatpush1.bf16.msra.mxu0 %v1101
        %1120 = vmatprep.subr.bf16.mxu0 0
        %1121 = vmatpush1.bf16.msra.mxu0 %v1102
        %1122 = vmatprep.subr.bf16.mxu0 0
        %1123 = vmatpush1.bf16.msra.mxu0 %v1103
        %1124 = vmatprep.subr.bf16.mxu0 0
        %1125 = vmatpush1.bf16.msra.mxu0 %v1104
        %1126 = vmatprep.subr.bf16.mxu0 0
        %1127 = vmatpush1.bf16.msra.mxu0 %v1105
        %1128 = vmatprep.subr.bf16.mxu0 0
        %1129 = vmatpush1.bf16.msra.mxu0 %v1106
        %1130 = vmatprep.subr.bf16.mxu0 0
        %1131 = vmatpush1.bf16.msra.mxu0 %v1107
        %1132 = vmatprep.subr.bf16.mxu0 0
        %1133 = vmatpush1.bf16.msra.mxu0 0
        %1134 = vmatprep.subr.bf16.mxu0 0
        %1135 = vmatpush1.bf16.msra.mxu0 0
        %1136 = vmatprep.subr.bf16.mxu0 0
        %1137 = vmatpush1.bf16.msra.mxu0 0
        %1138 = vmatprep.subr.bf16.mxu0 0
        %1139 = vmatpush1.bf16.msra.mxu0 0
        %1140 = vmatprep.subr.bf16.mxu0 0
        %1141 = vmatpush1.bf16.msra.mxu0 0
        %1142 = vmatprep.subr.bf16.mxu0 0
        %1143 = vmatpush1.bf16.msra.mxu0 0
        %1144 = vmatprep.subr.bf16.mxu0 0
        %1145 = vmatpush1.bf16.msra.mxu0 0
        %1146 = vmatprep.subr.bf16.mxu0 0
        %1147 = vmatpush1.bf16.msra.mxu0 0
        %1148 = vmatprep.mubr.bf16.mxu0 0
        %1149 = vmatmul.mubr.bf16.gmra.mrb[0].mxu0 %v1037
        %v1150 = vpop.f32.mrb[0].mxu0
        %v1151 = vadd.f32 %v1066, %v1150
        %v1152 = vpop.f32.mrb[0].mxu0
        %v1153 = vpop.f32.mrb[0].mxu0
        %v1154 = vadd.f32 %v1066, %v1153
        %v1155 = vpop.f32.mrb[0].mxu0
        %1156 = vmatprep.mubr.bf16.mxu0 0
        %1157 = vmatmul.mubr.bf16.gmra.mrb[0].mxu0 %v1038
        %v1158 = vpop.f32.mrb[0].mxu0
        %v1159 = vadd.f32 %v1066, %v1158
        %v1160 = vpop.f32.mrb[0].mxu0
        %v1161 = vpop.f32.mrb[0].mxu0
        %v1162 = vadd.f32 %v1066, %v1161
        %v1163 = vpop.f32.mrb[0].mxu0
        %1164 = vmatprep.mubr.bf16.mxu0 0
        %1165 = vmatmul.mubr.bf16.gmra.mrb[0].mxu0 %v1039
        %v1166 = vpop.f32.mrb[0].mxu0
        %v1167 = vadd.f32 %v1066, %v1166
        %v1168 = vpop.f32.mrb[0].mxu0
        %v1169 = vpop.f32.mrb[0].mxu0
        %v1170 = vadd.f32 %v1066, %v1169
        %v1171 = vpop.f32.mrb[0].mxu0
        %1172 = vmatprep.mubr.bf16.mxu0 0
        %1173 = vmatmul.mubr.bf16.gmra.mrb[0].mxu0 %v1040
        %v1174 = vpop.f32.mrb[0].mxu0
        %v1175 = vadd.f32 %v1066, %v1174
        %v1176 = vpop.f32.mrb[0].mxu0
        %v1177 = vpop.f32.mrb[0].mxu0
        %v1178 = vadd.f32 %v1066, %v1177
        %v1179 = vpop.f32.mrb[0].mxu0
        %1180 = vmatprep.mubr.bf16.mxu0 0
        %1181 = vmatmul.mubr.bf16.gmra.mrb[0].mxu0 %v1041
        %v1182 = vpop.f32.mrb[0].mxu0
        %v1183 = vadd.f32 %v1066, %v1182
        %v1184 = vpop.f32.mrb[0].mxu0
        %v1185 = vpop.f32.mrb[0].mxu0
        %v1186 = vadd.f32 %v1066, %v1185
        %v1187 = vpop.f32.mrb[0].mxu0
        %1188 = vmatprep.mubr.bf16.mxu0 0
        %1189 = vmatmul.mubr.bf16.gmra.mrb[0].mxu0 %v1042
        %v1190 = vpop.f32.mrb[0].mxu0
        %v1191 = vadd.f32 %v1066, %v1190
        %v1192 = vpop.f32.mrb[0].mxu0
        %v1193 = vpop.f32.mrb[0].mxu0
        %v1194 = vadd.f32 %v1066, %v1193
        %v1195 = vpop.f32.mrb[0].mxu0
        %1196 = vmatprep.mubr.bf16.mxu0 0
        %1197 = vmatmul.mubr.bf16.gmra.mrb[0].mxu0 %v1043
        %v1198 = vpop.f32.mrb[0].mxu0
        %v1199 = vadd.f32 %v1066, %v1198
        %v1200 = vpop.f32.mrb[0].mxu0
        %v1201 = vpop.f32.mrb[0].mxu0
        %v1202 = vadd.f32 %v1066, %v1201
        %v1203 = vpop.f32.mrb[0].mxu0
        %1204 = vmatprep.mubr.bf16.mxu0 0
        %1205 = vmatmul.mubr.bf16.gmra.mrb[0].mxu0 %v1044
        %v1206 = vpop.f32.mrb[0].mxu0
        %v1207 = vadd.f32 %v1066, %v1206
        %v1208 = vpop.f32.mrb[0].mxu0
        %v1209 = vpop.f32.mrb[0].mxu0
        %v1210 = vadd.f32 %v1066, %v1209
        %v1211 = vpop.f32.mrb[0].mxu0
        %1212 = vdwg.mxu0
        %v1213 = vld [vmem:[%s587] sm:$0x1]
        %v1215 = vlaneseq
        %v1216 = vshrl.u32 %v1215, 7
        %v1217 = vsub.s32 0, %v1216
        %v1218 = vrot.slane %v1213, %v1217
        %v1220 = vmul.f32 %v1151, %v1218
        %v1221 = vmul.f32 %v1154, %v1218
        %v1222 = vmul.f32 %v1159, %v1218
        %v1223 = vmul.f32 %v1162, %v1218
        %v1224 = vmul.f32 %v1167, %v1218
        %v1225 = vmul.f32 %v1170, %v1218
        %v1226 = vmul.f32 %v1175, %v1218
        %v1227 = vmul.f32 %v1178, %v1218
        %v1228 = vmul.f32 %v1183, %v1218
        %v1229 = vmul.f32 %v1186, %v1218
        %v1230 = vmul.f32 %v1191, %v1218
        %v1231 = vmul.f32 %v1194, %v1218
        %v1232 = vmul.f32 %v1199, %v1218
        %v1233 = vmul.f32 %v1202, %v1218
        %v1234 = vmul.f32 %v1207, %v1218
        %v1235 = vmul.f32 %v1210, %v1218
        %v1236 = vld [vmem:[%s590] sm:$0x1]
        %v1238 = vlaneseq
        %v1239 = vshrl.u32 %v1238, 7
        %v1240 = vsub.s32 0, %v1239
        %v1241 = vrot.slane %v1236, %v1240
        %v1243 = vadd.f32 %v1220, %v1241
        %v1244 = vadd.f32 %v1221, %v1241
        %v1245 = vadd.f32 %v1222, %v1241
        %v1246 = vadd.f32 %v1223, %v1241
        %v1247 = vadd.f32 %v1224, %v1241
        %v1248 = vadd.f32 %v1225, %v1241
        %v1249 = vadd.f32 %v1226, %v1241
        %v1250 = vadd.f32 %v1227, %v1241
        %v1251 = vadd.f32 %v1228, %v1241
        %v1252 = vadd.f32 %v1229, %v1241
        %v1253 = vadd.f32 %v1230, %v1241
        %v1254 = vadd.f32 %v1231, %v1241
        %v1255 = vadd.f32 %v1232, %v1241
        %v1256 = vadd.f32 %v1233, %v1241
        %v1257 = vadd.f32 %v1234, %v1241
        %v1258 = vadd.f32 %v1235, %v1241
        %p1259 = scmp.ne.s32.totalorder %s26, 2
        // Predicated region
        $region97: #{tpu_custom_call.1} parent=67 // pred_check
          %p1260 = pneg %p1259
        $region98: #{tpu_custom_call.1} parent=67 // pred_check_branch
          %1262 = sbr.rel (%p1260) target = $region100
        $region99: #{tpu_custom_call.1} parent=67 // pred_region
          %v1263 = vmax.f32 %v1243, 0.0
          %v1264 = vmax.f32 %v1244, 0.0
          %v1265 = vmax.f32 %v1245, 0.0
          %v1266 = vmax.f32 %v1246, 0.0
          %v1267 = vmax.f32 %v1247, 0.0
          %v1268 = vmax.f32 %v1248, 0.0
          %v1269 = vmax.f32 %v1249, 0.0
          %v1270 = vmax.f32 %v1250, 0.0
          %v1271 = vmax.f32 %v1251, 0.0
          %v1272 = vmax.f32 %v1252, 0.0
          %v1273 = vmax.f32 %v1253, 0.0
          %v1274 = vmax.f32 %v1254, 0.0
          %v1275 = vmax.f32 %v1255, 0.0
          %v1276 = vmax.f32 %v1256, 0.0
          %v1277 = vmax.f32 %v1257, 0.0
          %v1278 = vmax.f32 %v1258, 0.0
          %1279 = vst [vmem:[#allocation2] sm:$0xff] %v1263
          %1280 = vst [vmem:[#allocation2 + $0x8] sm:$0xff] %v1264
          %1281 = vst [vmem:[#allocation2 + $0x10] sm:$0xff] %v1265
          %1282 = vst [vmem:[#allocation2 + $0x18] sm:$0xff] %v1266
          %1283 = vst [vmem:[#allocation2 + $0x20] sm:$0xff] %v1267
          %1284 = vst [vmem:[#allocation2 + $0x28] sm:$0xff] %v1268
          %1285 = vst [vmem:[#allocation2 + $0x30] sm:$0xff] %v1269
          %1286 = vst [vmem:[#allocation2 + $0x38] sm:$0xff] %v1270
          %1287 = vst [vmem:[#allocation2 + $0x40] sm:$0xff] %v1271
          %1288 = vst [vmem:[#allocation2 + $0x48] sm:$0xff] %v1272
          %1289 = vst [vmem:[#allocation2 + $0x50] sm:$0xff] %v1273
          %1290 = vst [vmem:[#allocation2 + $0x58] sm:$0xff] %v1274
          %1291 = vst [vmem:[#allocation2 + $0x60] sm:$0xff] %v1275
          %1292 = vst [vmem:[#allocation2 + $0x68] sm:$0xff] %v1276
          %1293 = vst [vmem:[#allocation2 + $0x70] sm:$0xff] %v1277
          %1294 = vst [vmem:[#allocation2 + $0x78] sm:$0xff] %v1278
        $region100: #{tpu_custom_call.1} parent=67 // pred_fallthru
          _
        %p1295 = scmp.eq.s32.totalorder %s26, 2
        // Predicated region
        $region101: #{tpu_custom_call.1} parent=67 // pred_check
          %p1296 = pneg %p1295
        $region102: #{tpu_custom_call.1} parent=67 // pred_check_branch
          %1298 = sbr.rel (%p1296) target = $region104
        $region103: #{tpu_custom_call.1} parent=67 // pred_region
          %v1299 = vld [vmem:[%s9] sm:$0xf]
          %v1300 = vpack.c.bf16 %v1244, %v1243
          %v1301 = vpack.c.bf16 %v1246, %v1245
          %v1302 = vpack.c.bf16 %v1248, %v1247
          %v1303 = vpack.c.bf16 %v1250, %v1249
          %v1304 = vpack.c.bf16 %v1252, %v1251
          %v1305 = vpack.c.bf16 %v1254, %v1253
          %v1306 = vpack.c.bf16 %v1256, %v1255
          %v1307 = vpack.c.bf16 %v1258, %v1257
          %1308 = vmatprep.subr.bf16.mxu0 0
          %1309 = vmatpush1.bf16.msra.mxu0 %v1300
          %1310 = vmatprep.subr.bf16.mxu0 0
          %1311 = vmatpush1.bf16.msra.mxu0 %v1301
          %1312 = vmatprep.subr.bf16.mxu0 0
          %1313 = vmatpush1.bf16.msra.mxu0 %v1302
          %1314 = vmatprep.subr.bf16.mxu0 0
          %1315 = vmatpush1.bf16.msra.mxu0 %v1303
          %1316 = vmatprep.subr.bf16.mxu0 0
          %1317 = vmatpush1.bf16.msra.mxu0 %v1304
          %1318 = vmatprep.subr.bf16.mxu0 0
          %1319 = vmatpush1.bf16.msra.mxu0 %v1305
          %1320 = vmatprep.subr.bf16.mxu0 0
          %1321 = vmatpush1.bf16.msra.mxu0 %v1306
          %1322 = vmatprep.subr.bf16.mxu0 0
          %1323 = vmatpush1.bf16.msra.mxu0 %v1307
          %1324 = vmatprep.subr.bf16.mxu0 0
          %1325 = vmatpush1.bf16.msra.mxu0 0
          %1326 = vmatprep.subr.bf16.mxu0 0
          %1327 = vmatpush1.bf16.msra.mxu0 0
          %1328 = vmatprep.subr.bf16.mxu0 0
          %1329 = vmatpush1.bf16.msra.mxu0 0
          %1330 = vmatprep.subr.bf16.mxu0 0
          %1331 = vmatpush1.bf16.msra.mxu0 0
          %1332 = vmatprep.subr.bf16.mxu0 0
          %1333 = vmatpush1.bf16.msra.mxu0 0
          %1334 = vmatprep.subr.bf16.mxu0 0
          %1335 = vmatpush1.bf16.msra.mxu0 0
          %1336 = vmatprep.subr.bf16.mxu0 0
          %1337 = vmatpush1.bf16.msra.mxu0 0
          %1338 = vmatprep.subr.bf16.mxu0 0
          %1339 = vmatpush1.bf16.msra.mxu0 0
          %1340 = vmatprep.mubr.bf16.mxu0 0
          %1341 = vmatmul.mubr.bf16.gmra.mrb[0].mxu0 %v1299
          %v1342 = vpop.f32.mrb[0].mxu0
          %v1343 = vadd.f32 0.0, %v1342
          %v1344 = vpop.f32.mrb[0].mxu0
          %v1345 = vpop.f32.mrb[0].mxu0
          %v1346 = vpop.f32.mrb[0].mxu0
          %1347 = vdwg.mxu0
          %v1348 = vpack.c.bf16 %v1343, %v1343
          %v1349 = vld [vmem:[#allocation11] sm:$0xf]
          %v1350 = vld [vmem:[#allocation11 + $0x4] sm:$0xf]
          %v1351 = vld [vmem:[#allocation11 + $0x8] sm:$0xf]
          %v1352 = vld [vmem:[#allocation11 + $0xc] sm:$0xf]
          %v1353 = vld [vmem:[#allocation11 + $0x10] sm:$0xf]
          %v1354 = vld [vmem:[#allocation11 + $0x14] sm:$0xf]
          %v1355 = vld [vmem:[#allocation11 + $0x18] sm:$0xf]
          %v1356 = vld [vmem:[#allocation11 + $0x1c] sm:$0xf]
          %v1357 = vld [vmem:[#allocation11 + $0x20] sm:$0xf]
          %v1358 = vld [vmem:[#allocation11 + $0x24] sm:$0xf]
          %v1359 = vld [vmem:[#allocation11 + $0x28] sm:$0xf]
          %v1360 = vld [vmem:[#allocation11 + $0x2c] sm:$0xf]
          %v1361 = vld [vmem:[#allocation11 + $0x30] sm:$0xf]
          %v1362 = vld [vmem:[#allocation11 + $0x34] sm:$0xf]
          %v1363 = vld [vmem:[#allocation11 + $0x38] sm:$0xf]
          %v1364 = vld [vmem:[#allocation11 + $0x3c] sm:$0xf]
          %v1365 = vld [vmem:[%s11] sm:$0x1]
          %v1367 = vlaneseq
          %v1368 = vshrl.u32 %v1367, 7
          %v1369 = vsub.s32 0, %v1368
          %v1370 = vrot.slane %v1365, %v1369
          %v1388 = vunpack.c.l.b16 %v1349
          %v1389 = vunpack.c.l.b16 %v1350
          %v1390 = vunpack.c.l.b16 %v1351
          %v1391 = vunpack.c.l.b16 %v1352
          %v1392 = vunpack.c.l.b16 %v1353
          %v1393 = vunpack.c.l.b16 %v1354
          %v1394 = vunpack.c.l.b16 %v1355
          %v1395 = vunpack.c.l.b16 %v1356
          %v1396 = vunpack.c.l.b16 %v1357
          %v1397 = vunpack.c.l.b16 %v1358
          %v1398 = vunpack.c.l.b16 %v1359
          %v1399 = vunpack.c.l.b16 %v1360
          %v1400 = vunpack.c.l.b16 %v1361
          %v1401 = vunpack.c.l.b16 %v1362
          %v1402 = vunpack.c.l.b16 %v1363
          %v1403 = vunpack.c.l.b16 %v1364
          %v1404 = vpack.c.b16 %v1389, %v1388
          %v1405 = vpack.c.b16 %v1391, %v1390
          %v1406 = vpack.c.b16 %v1393, %v1392
          %v1407 = vpack.c.b16 %v1395, %v1394
          %v1408 = vpack.c.b16 %v1397, %v1396
          %v1409 = vpack.c.b16 %v1399, %v1398
          %v1410 = vpack.c.b16 %v1401, %v1400
          %v1411 = vpack.c.b16 %v1403, %v1402
          %1420 = vmatprep.subr.bf16.mxu0 0
          %1421 = vmatpush1.bf16.msra.mxu0 %v1404
          %1422 = vmatprep.subr.bf16.mxu0 0
          %1423 = vmatpush1.bf16.msra.mxu0 %v1405
          %1424 = vmatprep.subr.bf16.mxu0 0
          %1425 = vmatpush1.bf16.msra.mxu0 %v1406
          %1426 = vmatprep.subr.bf16.mxu0 0
          %1427 = vmatpush1.bf16.msra.mxu0 %v1407
          %1428 = vmatprep.subr.bf16.mxu0 0
          %1429 = vmatpush1.bf16.msra.mxu0 %v1408
          %1430 = vmatprep.subr.bf16.mxu0 0
          %1431 = vmatpush1.bf16.msra.mxu0 %v1409
          %1432 = vmatprep.subr.bf16.mxu0 0
          %1433 = vmatpush1.bf16.msra.mxu0 %v1410
          %1434 = vmatprep.subr.bf16.mxu0 0
          %1435 = vmatpush1.bf16.msra.mxu0 %v1411
          %1436 = vmatprep.subr.bf16.mxu0 0
          %1437 = vmatpush1.bf16.msra.mxu0 0
          %1438 = vmatprep.subr.bf16.mxu0 0
          %1439 = vmatpush1.bf16.msra.mxu0 0
          %1440 = vmatprep.subr.bf16.mxu0 0
          %1441 = vmatpush1.bf16.msra.mxu0 0
          %1442 = vmatprep.subr.bf16.mxu0 0
          %1443 = vmatpush1.bf16.msra.mxu0 0
          %1444 = vmatprep.subr.bf16.mxu0 0
          %1445 = vmatpush1.bf16.msra.mxu0 0
          %1446 = vmatprep.subr.bf16.mxu0 0
          %1447 = vmatpush1.bf16.msra.mxu0 0
          %1448 = vmatprep.subr.bf16.mxu0 0
          %1449 = vmatpush1.bf16.msra.mxu0 0
          %1450 = vmatprep.subr.bf16.mxu0 0
          %1451 = vmatpush1.bf16.msra.mxu0 0
          %1452 = vmatprep.mubr.bf16.mxu0 0
          %1453 = vmatmul.mubr.bf16.gmra.mrb[0].mxu0 %v1348
          %v1454 = vpop.f32.mrb[0].mxu0
          %v1455 = vadd.f32 %v1370, %v1454
          %v1456 = vpop.f32.mrb[0].mxu0
          %v1457 = vpop.f32.mrb[0].mxu0
          %v1458 = vpop.f32.mrb[0].mxu0
          %1459 = vdwg.mxu0
          %1460 = vst [vmem:[#allocation12] sm:$0xff] %v1455
        $region104: #{tpu_custom_call.1} parent=67 // pred_fallthru
          _
        // Predicated region
        $region105: #{tpu_custom_call.1} parent=67 // pred_check
          %p1461 = pneg %p326
        $region106: #{tpu_custom_call.1} parent=67 // pred_check_branch
          %1463 = sbr.rel (%p1461) target = $region108
        $region107: #{tpu_custom_call.1} parent=67 // pred_region
          %s1465 = ssub.s32 128, 128
          %1466 = vsyncadd [#allocation5], %s1465
          %s1468 = sshll.u32 [#allocation12], 4
          %s1469 = int_to_ptr.vmem [resolvable:$true] %s1468
          %1471 = dma.vmem_to_hbm [thread:$0]  %s1469, 128, %s12, [#allocation5]
        $region108: #{tpu_custom_call.1} parent=67 // pred_fallthru
          _
        // Predicated region
        $region109: #{tpu_custom_call.1} parent=67 // pred_check
          %p1472 = pneg %p326
        $region110: #{tpu_custom_call.1} parent=67 // pred_check_branch
          %1474 = sbr.rel (%p1472) target = $region112
        $region111: #{tpu_custom_call.1} parent=67 // pred_region
          %1475 = dma.done [#allocation5], 128
        $region112: #{tpu_custom_call.1} parent=67 // pred_fallthru
          _
      $region68: #{tpu_custom_call.1} parent=5 // pred_fallthru
        _
      %p1476 = scmp.le.s32.totalorder 2, %s21
      // Predicated region
      $region113: #{tpu_custom_call.1} parent=5 // pred_check
        %p1477 = pneg %p1476
      $region114: #{tpu_custom_call.1} parent=5 // pred_check_branch
        %1479 = sbr.rel (%p1477) target = $region116
      $region115: #{tpu_custom_call.1} parent=5 // pred_region
        %s1480 = ssub.s32 %s21, 2
      $region116: #{tpu_custom_call.1} parent=5 // pred_fallthru
        _
    $region6: #{tpu_custom_call.1} parent=1 // loop_footer
      %s25 = sadd.s32 1, %s21
    $region7: #{tpu_custom_call.1} parent=1 // loop_footer_branch
      %20 = sbr.rel target = $region3
    $region8: #{tpu_custom_call.1} parent=1 // loop_exit
      _
    %1481 = vsyncpa [#allocation4], 1
    %s1482 = scalar_lea.sflag [#allocation4], 1
    %1483 = vsyncpa %s1482, 1
    %1484 = vsyncpa [#allocation7], 1
    %1485 = vsyncpa [#allocation5], 1
    %s1486 = scalar_lea.sflag [#allocation5], 1
    %1487 = vsyncpa %s1486, 1

// kernel: tpu_custom_call.1
$region0: #{tpu_custom_call.1}
  #allocation0 [shape = 'u32[]', space=smem, size = 0x4, offset = 0x4, fixed_abs, tag = 'smem constant byte address 0x4 - core index']
  #allocation1 [shape = 'u32[144,128]{1,0:T(1,128)}', space=vmem, size = 0x12000, scoped, tag = 'internal scratch']
  #allocation2 [shape = 'f32[128,128]{1,0:T(8,128)}', space=vmem, size = 0x10000, scoped, tag = 'scratch operand']
  %s0 = inlined_call_operand.hbm [shape: f32[128,128], index: 0, kind: input, shape index: {}]
  %s1 = inlined_call_operand.hbm [shape: bf16[128,128], index: 1, kind: input, shape index: {}]
  %s2 = inlined_call_operand.hbm [shape: bf16[3,128,128], index: 2, kind: input, shape index: {}]
  %s3 = inlined_call_operand.hbm [shape: bf16[3,128,128], index: 3, kind: input, shape index: {}]
  %s4 = inlined_call_operand.vmem [shape: f32[3,1,128], index: 4, kind: input, shape index: {}]
  %s5 = inlined_call_operand.hbm [shape: bf16[3,128,128], index: 5, kind: input, shape index: {}]
  %s6 = inlined_call_operand.vmem [shape: f32[3,1,128], index: 6, kind: input, shape index: {}]
  %s7 = inlined_call_operand.vmem [shape: f32[3,1,128], index: 7, kind: input, shape index: {}]
  %s8 = inlined_call_operand.vmem [shape: f32[3,1,128], index: 8, kind: input, shape index: {}]
  %s9 = inlined_call_operand.vmem [shape: bf16[8,128], index: 9, kind: input, shape index: {}]
  %s10 = inlined_call_operand.hbm [shape: bf16[128,128], index: 10, kind: input, shape index: {}]
  %s11 = inlined_call_operand.vmem [shape: f32[1,128], index: 11, kind: input, shape index: {}]
  %s12 = inlined_call_operand.hbm [shape: f32[8,128], index: 12, kind: output, shape index: {}]
  %s13 = sld [smem:[#allocation0]]
  $region117: #{tpu_custom_call.1} parent=0
    _
  %s15 = ssub.s32 1, %s13
  %s16 = scalar_select 0, %s15, %s13
  $region1: #{tpu_custom_call.1} parent=0
    #allocation3 [shape = 'u8[65536]{0}', space=vmem, size = 0x10000, scoped, tag = 'input window, operand 0, single buffered']
    #allocation4 [shape = 's32[2]{0}', space=sflag, size = 0x8, scoped, tag = 'scoped memory for tpu_custom_call.1']
    #allocation5 [shape = 's32[2]{0}', space=sflag, size = 0x8, scoped, tag = 'scoped memory for tpu_custom_call.1']
    #allocation6 [shape = 'u8[32768]{0}', space=vmem, size = 0x8000, scoped, tag = 'input window, operand 1, single buffered']
    #allocation7 [shape = 's32[1]{0}', space=sflag, size = 0x4, scoped, tag = 'scoped memory for tpu_custom_call.1']
    #allocation8 [shape = 'u8[65536]{0}', space=vmem, size = 0x10000, scoped, tag = 'input window, operand 2']
    #allocation9 [shape = 'u8[65536]{0}', space=vmem, size = 0x10000, scoped, tag = 'input window, operand 3']
    #allocation10 [shape = 'u8[65536]{0}', space=vmem, size = 0x10000, scoped, tag = 'input window, operand 5']
    #allocation11 [shape = 'u8[32768]{0}', space=vmem, size = 0x8000, scoped, tag = 'input window, operand 10, single buffered']
    #allocation12 [shape = 'u8[4096]{0}', space=vmem, size = 0x1000, scoped, tag = 'output window, operand 0, single buffered']
    %17 = vsyncpa [#allocation4], 0
    %18 = vsyncpa [#allocation7], 0
    %19 = vsyncpa [#allocation5], 0
    loop: start=0, step=1, limit=5
    $region2: #{tpu_custom_call.1} parent=1 // loop_pre_header
      _
    $region3: #{tpu_custom_call.1} parent=1 // loop_header
      %s21 = sphi 0, %s25
      %p22 = scmp.ge.s32.totalorder %s21, 5
      %s29 = sphi 0, %s29
      %s31 = sphi 0, %s29
      %s32 = sphi 0, %s31
      %s46 = sphi 0, %s32
      %s50 = sphi 0, %s50
      %s52 = sphi 0, %s50
      %s53 = sphi 0, %s52
      %s67 = sphi 0, %s53
      %s73 = sphi 0, %s75
      %s76 = sphi 0, %s73
      %s77 = sphi 0, %s76
      %s93 = sphi 0, %s77
      %s99 = sphi 0, %s101
      %s102 = sphi 0, %s99
      %s103 = sphi 0, %s102
      %s119 = sphi 0, %s103
      %s125 = sphi 0, %s127
      %s128 = sphi 0, %s125
      %s129 = sphi 0, %s128
      %s145 = sphi 0, %s129
      %s151 = sphi 0, %s153
      %s154 = sphi 0, %s151
      %s155 = sphi 0, %s154
      %s171 = sphi 0, %s155
      %s177 = sphi 0, %s179
      %s180 = sphi 0, %s177
      %s181 = sphi 0, %s180
      %s197 = sphi 0, %s181
      %s203 = sphi 0, %s205
      %s206 = sphi 0, %s203
      %s207 = sphi 0, %s206
      %s223 = sphi 0, %s207
      %s229 = sphi 0, %s231
      %s232 = sphi 0, %s229
      %s233 = sphi 0, %s232
      %s249 = sphi 0, %s233
      %s253 = sphi 0, %s253
      %s255 = sphi 0, %s253
      %s256 = sphi 0, %s255
      %s270 = sphi 0, %s256
      %s274 = sphi 0, %s274
      %s276 = sphi 0, %s274
      %s277 = sphi 0, %s276
      %s291 = sphi 0, %s277
      %s295 = sphi 0, %s295
      %s297 = sphi 0, %s295
      %s298 = sphi 0, %s297
      %s312 = sphi 0, %s298
      %s316 = sphi 0, %s316
      %s318 = sphi 0, %s316
      %s319 = sphi 0, %s318
      %s333 = sphi 0, %s319
    $region4: #{tpu_custom_call.1} parent=1 // loop_header_branch
      %24 = sbr.rel (%p22) target = $region8
    $region5: #{tpu_custom_call.1} parent=1 // loop_body
      %s26 = ssub.s32 %s21, 1
      %s27 = ssub.s32 %s21, 2
      %s28 = sadd.s32 %s21, 1
      %s30 = sadd.s32 %s29, 1
      %p33 = scmp.eq.s32.totalorder %s21, 2
      %p34 = scmp.ne.s32.totalorder %s29, %s31
      %p35 = scmp.eq.s32.totalorder %s21, 0
      %p36 = por %p34, %p35
      %p37 = scmp.ne.s32.totalorder %s29, %s31
      %p38 = scmp.eq.s32.totalorder %s26, 2
      %p39 = por %p37, %p38
      %p40 = scmp.ne.s32.totalorder %s31, %s32
      %p41 = scmp.eq.s32.totalorder %s26, 0
      %p42 = por %p40, %p41
      %p43 = scmp.ne.s32.totalorder %s31, %s32
      %p44 = scmp.eq.s32.totalorder %s27, 2
      %p45 = por %p43, %p44
      %p47 = scmp.ne.s32.totalorder %s32, %s46
      %p48 = scmp.eq.s32.totalorder %s27, 0
      %p49 = por %p47, %p48
      %s51 = sadd.s32 %s50, 1
      %p54 = scmp.eq.s32.totalorder %s21, 2
      %p55 = scmp.ne.s32.totalorder %s50, %s52
      %p56 = scmp.eq.s32.totalorder %s21, 0
      %p57 = por %p55, %p56
      %p58 = scmp.ne.s32.totalorder %s50, %s52
      %p59 = scmp.eq.s32.totalorder %s26, 2
      %p60 = por %p58, %p59
      %p61 = scmp.ne.s32.totalorder %s52, %s53
      %p62 = scmp.eq.s32.totalorder %s26, 0
      %p63 = por %p61, %p62
      %p64 = scmp.ne.s32.totalorder %s52, %s53
      %p65 = scmp.eq.s32.totalorder %s27, 2
      %p66 = por %p64, %p65
      %p68 = scmp.ne.s32.totalorder %s53, %s67
      %p69 = scmp.eq.s32.totalorder %s27, 0
      %p70 = por %p68, %p69
      %s71 = ssub.s32 %s21, %s28
      %p72 = scmp.eq.s32.totalorder %s71, 0
      %s74 = sadd.s32 %s73, 1
      %s75 = scalar_select %p72, %s73, %s74
      %p78 = pneg %p72
      %p79 = scmp.eq.s32.totalorder %s21, 2
      %p80 = por %p78, %p79
      %p81 = scmp.ne.s32.totalorder %s73, %s76
      %p82 = scmp.eq.s32.totalorder %s21, 0
      %p83 = por %p81, %p82
      %p84 = scmp.ne.s32.totalorder %s73, %s76
      %p85 = scmp.eq.s32.totalorder %s26, 2
      %p86 = por %p84, %p85
      %p87 = scmp.ne.s32.totalorder %s76, %s77
      %p88 = scmp.eq.s32.totalorder %s26, 0
      %p89 = por %p87, %p88
      %p90 = scmp.ne.s32.totalorder %s76, %s77
      %p91 = scmp.eq.s32.totalorder %s27, 2
      %p92 = por %p90, %p91
      %p94 = scmp.ne.s32.totalorder %s77, %s93
      %p95 = scmp.eq.s32.totalorder %s27, 0
      %p96 = por %p94, %p95
      %s97 = ssub.s32 %s21, %s28
      %p98 = scmp.eq.s32.totalorder %s97, 0
      %s100 = sadd.s32 %s99, 1
      %s101 = scalar_select %p98, %s99, %s100
      %p104 = pneg %p98
      %p105 = scmp.eq.s32.totalorder %s21, 2
      %p106 = por %p104, %p105
      %p107 = scmp.ne.s32.totalorder %s99, %s102
      %p108 = scmp.eq.s32.totalorder %s21, 0
      %p109 = por %p107, %p108
      %p110 = scmp.ne.s32.totalorder %s99, %s102
      %p111 = scmp.eq.s32.totalorder %s26, 2
      %p112 = por %p110, %p111
      %p113 = scmp.ne.s32.totalorder %s102, %s103
      %p114 = scmp.eq.s32.totalorder %s26, 0
      %p115 = por %p113, %p114
      %p116 = scmp.ne.s32.totalorder %s102, %s103
      %p117 = scmp.eq.s32.totalorder %s27, 2
      %p118 = por %p116, %p117
      %p120 = scmp.ne.s32.totalorder %s103, %s119
      %p121 = scmp.eq.s32.totalorder %s27, 0
      %p122 = por %p120, %p121
      %s123 = ssub.s32 %s21, %s28
      %p124 = scmp.eq.s32.totalorder %s123, 0
      %s126 = sadd.s32 %s125, 1
      %s127 = scalar_select %p124, %s125, %s126
      %p130 = pneg %p124
      %p131 = scmp.eq.s32.totalorder %s21, 2
      %p132 = por %p130, %p131
      %p133 = scmp.ne.s32.totalorder %s125, %s128
      %p134 = scmp.eq.s32.totalorder %s21, 0
      %p135 = por %p133, %p134
      %p136 = scmp.ne.s32.totalorder %s125, %s128
      %p137 = scmp.eq.s32.totalorder %s26, 2
      %p138 = por %p136, %p137
      %p139 = scmp.ne.s32.totalorder %s128, %s129
      %p140 = scmp.eq.s32.totalorder %s26, 0
      %p141 = por %p139, %p140
      %p142 = scmp.ne.s32.totalorder %s128, %s129
      %p143 = scmp.eq.s32.totalorder %s27, 2
      %p144 = por %p142, %p143
      %p146 = scmp.ne.s32.totalorder %s129, %s145
      %p147 = scmp.eq.s32.totalorder %s27, 0
      %p148 = por %p146, %p147
      %s149 = ssub.s32 %s21, %s28
      %p150 = scmp.eq.s32.totalorder %s149, 0
      %s152 = sadd.s32 %s151, 1
      %s153 = scalar_select %p150, %s151, %s152
      %p156 = pneg %p150
      %p157 = scmp.eq.s32.totalorder %s21, 2
      %p158 = por %p156, %p157
      %p159 = scmp.ne.s32.totalorder %s151, %s154
      %p160 = scmp.eq.s32.totalorder %s21, 0
      %p161 = por %p159, %p160
      %p162 = scmp.ne.s32.totalorder %s151, %s154
      %p163 = scmp.eq.s32.totalorder %s26, 2
      %p164 = por %p162, %p163
      %p165 = scmp.ne.s32.totalorder %s154, %s155
      %p166 = scmp.eq.s32.totalorder %s26, 0
      %p167 = por %p165, %p166
      %p168 = scmp.ne.s32.totalorder %s154, %s155
      %p169 = scmp.eq.s32.totalorder %s27, 2
      %p170 = por %p168, %p169
      %p172 = scmp.ne.s32.totalorder %s155, %s171
      %p173 = scmp.eq.s32.totalorder %s27, 0
      %p174 = por %p172, %p173
      %s175 = ssub.s32 %s21, %s28
      %p176 = scmp.eq.s32.totalorder %s175, 0
      %s178 = sadd.s32 %s177, 1
      %s179 = scalar_select %p176, %s177, %s178
      %p182 = pneg %p176
      %p183 = scmp.eq.s32.totalorder %s21, 2
      %p184 = por %p182, %p183
      %p185 = scmp.ne.s32.totalorder %s177, %s180
      %p186 = scmp.eq.s32.totalorder %s21, 0
      %p187 = por %p185, %p186
      %p188 = scmp.ne.s32.totalorder %s177, %s180
      %p189 = scmp.eq.s32.totalorder %s26, 2
      %p190 = por %p188, %p189
      %p191 = scmp.ne.s32.totalorder %s180, %s181
      %p192 = scmp.eq.s32.totalorder %s26, 0
      %p193 = por %p191, %p192
      %p194 = scmp.ne.s32.totalorder %s180, %s181
      %p195 = scmp.eq.s32.totalorder %s27, 2
      %p196 = por %p194, %p195
      %p198 = scmp.ne.s32.totalorder %s181, %s197
      %p199 = scmp.eq.s32.totalorder %s27, 0
      %p200 = por %p198, %p199
      %s201 = ssub.s32 %s21, %s28
      %p202 = scmp.eq.s32.totalorder %s201, 0
      %s204 = sadd.s32 %s203, 1
      %s205 = scalar_select %p202, %s203, %s204
      %p208 = pneg %p202
      %p209 = scmp.eq.s32.totalorder %s21, 2
      %p210 = por %p208, %p209
      %p211 = scmp.ne.s32.totalorder %s203, %s206
      %p212 = scmp.eq.s32.totalorder %s21, 0
      %p213 = por %p211, %p212
      %p214 = scmp.ne.s32.totalorder %s203, %s206
      %p215 = scmp.eq.s32.totalorder %s26, 2
      %p216 = por %p214, %p215
      %p217 = scmp.ne.s32.totalorder %s206, %s207
      %p218 = scmp.eq.s32.totalorder %s26, 0
      %p219 = por %p217, %p218
      %p220 = scmp.ne.s32.totalorder %s206, %s207
      %p221 = scmp.eq.s32.totalorder %s27, 2
      %p222 = por %p220, %p221
      %p224 = scmp.ne.s32.totalorder %s207, %s223
      %p225 = scmp.eq.s32.totalorder %s27, 0
      %p226 = por %p224, %p225
      %s227 = ssub.s32 %s21, %s28
      %p228 = scmp.eq.s32.totalorder %s227, 0
      %s230 = sadd.s32 %s229, 1
      %s231 = scalar_select %p228, %s229, %s230
      %p234 = pneg %p228
      %p235 = scmp.eq.s32.totalorder %s21, 2
      %p236 = por %p234, %p235
      %p237 = scmp.ne.s32.totalorder %s229, %s232
      %p238 = scmp.eq.s32.totalorder %s21, 0
      %p239 = por %p237, %p238
      %p240 = scmp.ne.s32.totalorder %s229, %s232
      %p241 = scmp.eq.s32.totalorder %s26, 2
      %p242 = por %p240, %p241
      %p243 = scmp.ne.s32.totalorder %s232, %s233
      %p244 = scmp.eq.s32.totalorder %s26, 0
      %p245 = por %p243, %p244
      %p246 = scmp.ne.s32.totalorder %s232, %s233
      %p247 = scmp.eq.s32.totalorder %s27, 2
      %p248 = por %p246, %p247
      %p250 = scmp.ne.s32.totalorder %s233, %s249
      %p251 = scmp.eq.s32.totalorder %s27, 0
      %p252 = por %p250, %p251
      %s254 = sadd.s32 %s253, 1
      %p257 = scmp.eq.s32.totalorder %s21, 2
      %p258 = scmp.ne.s32.totalorder %s253, %s255
      %p259 = scmp.eq.s32.totalorder %s21, 0
      %p260 = por %p258, %p259
      %p261 = scmp.ne.s32.totalorder %s253, %s255
      %p262 = scmp.eq.s32.totalorder %s26, 2
      %p263 = por %p261, %p262
      %p264 = scmp.ne.s32.totalorder %s255, %s256
      %p265 = scmp.eq.s32.totalorder %s26, 0
      %p266 = por %p264, %p265
      %p267 = scmp.ne.s32.totalorder %s255, %s256
      %p268 = scmp.eq.s32.totalorder %s27, 2
      %p269 = por %p267, %p268
      %p271 = scmp.ne.s32.totalorder %s256, %s270
      %p272 = scmp.eq.s32.totalorder %s27, 0
      %p273 = por %p271, %p272
      %s275 = sadd.s32 %s274, 1
      %p278 = scmp.eq.s32.totalorder %s21, 2
      %p279 = scmp.ne.s32.totalorder %s274, %s276
      %p280 = scmp.eq.s32.totalorder %s21, 0
      %p281 = por %p279, %p280
      %p282 = scmp.ne.s32.totalorder %s274, %s276
      %p283 = scmp.eq.s32.totalorder %s26, 2
      %p284 = por %p282, %p283
      %p285 = scmp.ne.s32.totalorder %s276, %s277
      %p286 = scmp.eq.s32.totalorder %s26, 0
      %p287 = por %p285, %p286
      %p288 = scmp.ne.s32.totalorder %s276, %s277
      %p289 = scmp.eq.s32.totalorder %s27, 2
      %p290 = por %p288, %p289
      %p292 = scmp.ne.s32.totalorder %s277, %s291
      %p293 = scmp.eq.s32.totalorder %s27, 0
      %p294 = por %p292, %p293
      %s296 = sadd.s32 %s295, 1
      %p299 = scmp.eq.s32.totalorder %s21, 2
      %p300 = scmp.ne.s32.totalorder %s295, %s297
      %p301 = scmp.eq.s32.totalorder %s21, 0
      %p302 = por %p300, %p301
      %p303 = scmp.ne.s32.totalorder %s295, %s297
      %p304 = scmp.eq.s32.totalorder %s26, 2
      %p305 = por %p303, %p304
      %p306 = scmp.ne.s32.totalorder %s297, %s298
      %p307 = scmp.eq.s32.totalorder %s26, 0
      %p308 = por %p306, %p307
      %p309 = scmp.ne.s32.totalorder %s297, %s298
      %p310 = scmp.eq.s32.totalorder %s27, 2
      %p311 = por %p309, %p310
      %p313 = scmp.ne.s32.totalorder %s298, %s312
      %p314 = scmp.eq.s32.totalorder %s27, 0
      %p315 = por %p313, %p314
      %s317 = sadd.s32 %s316, 1
      %p320 = scmp.eq.s32.totalorder %s21, 2
      %p321 = scmp.ne.s32.totalorder %s316, %s318
      %p322 = scmp.eq.s32.totalorder %s21, 0
      %p323 = por %p321, %p322
      %p324 = scmp.ne.s32.totalorder %s316, %s318
      %p325 = scmp.eq.s32.totalorder %s26, 2
      %p326 = por %p324, %p325
      %p327 = scmp.ne.s32.totalorder %s318, %s319
      %p328 = scmp.eq.s32.totalorder %s26, 0
      %p329 = por %p327, %p328
      %p330 = scmp.ne.s32.totalorder %s318, %s319
      %p331 = scmp.eq.s32.totalorder %s27, 2
      %p332 = por %p330, %p331
      %p334 = scmp.ne.s32.totalorder %s319, %s333
      %p335 = scmp.eq.s32.totalorder %s27, 0
      %p336 = por %p334, %p335
      %p337 = scmp.le.s32.totalorder 1, %s21
      %p338 = scmp.lt.s32.totalorder %s21, 4
      %p339 = pnand %p337, %p338
      %p340 = pneg %p339
      // Predicated region
      $region9: #{tpu_custom_call.1} parent=5 // pred_check
        _
      $region10: #{tpu_custom_call.1} parent=5 // pred_check_branch
        %342 = sbr.rel (%p339) target = $region12
      $region11: #{tpu_custom_call.1} parent=5 // pred_region
        %s343 = ssub.s32 %s21, 1
        // Predicated region
        $region13: #{tpu_custom_call.1} parent=11 // pred_check
          %p344 = pneg %p42
        $region14: #{tpu_custom_call.1} parent=11 // pred_check_branch
          %346 = sbr.rel (%p344) target = $region16
        $region15: #{tpu_custom_call.1} parent=11 // pred_region
          %s348 = ssub.s32 2048, 2048
          %349 = vsyncadd [#allocation4], %s348
          %s350 = sshll.u32 [#allocation3], 4
          %s351 = int_to_ptr.vmem [resolvable:$true] %s350
          %356 = dma.hbm_to_vmem [thread:$0]  %s0, 2048, %s351, [#allocation4], 128, 128, 8
        $region16: #{tpu_custom_call.1} parent=11 // pred_fallthru
          _
        // Predicated region
        $region17: #{tpu_custom_call.1} parent=11 // pred_check
          %p357 = pneg %p63
        $region18: #{tpu_custom_call.1} parent=11 // pred_check_branch
          %359 = sbr.rel (%p357) target = $region20
        $region19: #{tpu_custom_call.1} parent=11 // pred_region
          %s361 = ssub.s32 1024, 1024
          %362 = vsyncadd [#allocation7], %s361
          %s363 = sshll.u32 [#allocation6], 4
          %s364 = int_to_ptr.vmem [resolvable:$true] %s363
          %369 = dma.hbm_to_vmem [thread:$0]  %s1, 1024, %s364, [#allocation7], 64, 64, 4
        $region20: #{tpu_custom_call.1} parent=11 // pred_fallthru
          _
        // Predicated region
        $region21: #{tpu_custom_call.1} parent=11 // pred_check
          %p370 = pneg %p266
        $region22: #{tpu_custom_call.1} parent=11 // pred_check_branch
          %372 = sbr.rel (%p370) target = $region24
        $region23: #{tpu_custom_call.1} parent=11 // pred_region
          _
        $region24: #{tpu_custom_call.1} parent=11 // pred_fallthru
          _
        // Predicated region
        $region25: #{tpu_custom_call.1} parent=11 // pred_check
          %p373 = pneg %p287
        $region26: #{tpu_custom_call.1} parent=11 // pred_check_branch
          %375 = sbr.rel (%p373) target = $region28
        $region27: #{tpu_custom_call.1} parent=11 // pred_region
          %s377 = ssub.s32 1024, 1024
          %378 = vsyncadd [#allocation7], %s377
          %s379 = sshll.u32 [#allocation11], 4
          %s380 = int_to_ptr.vmem [resolvable:$true] %s379
          %385 = dma.hbm_to_vmem [thread:$0]  %s10, 1024, %s380, [#allocation7], 64, 64, 4
        $region28: #{tpu_custom_call.1} parent=11 // pred_fallthru
          _
        // Predicated region
        $region29: #{tpu_custom_call.1} parent=11 // pred_check
          %p386 = pneg %p308
        $region30: #{tpu_custom_call.1} parent=11 // pred_check_branch
          %388 = sbr.rel (%p386) target = $region32
        $region31: #{tpu_custom_call.1} parent=11 // pred_region
          _
        $region32: #{tpu_custom_call.1} parent=11 // pred_fallthru
          _
      $region12: #{tpu_custom_call.1} parent=5 // pred_fallthru
        _
      %p389 = scmp.lt.s32.totalorder %s21, 3
      // Predicated region
      $region33: #{tpu_custom_call.1} parent=5 // pred_check
        %p390 = pneg %p389
      $region34: #{tpu_custom_call.1} parent=5 // pred_check_branch
        %392 = sbr.rel (%p390) target = $region36
      $region35: #{tpu_custom_call.1} parent=5 // pred_region
        // Predicated region
        $region37: #{tpu_custom_call.1} parent=35 // pred_check
          %p393 = pneg %p83
        $region38: #{tpu_custom_call.1} parent=35 // pred_check_branch
          %395 = sbr.rel (%p393) target = $region40
        $region39: #{tpu_custom_call.1} parent=35 // pred_region
          %s396 = sand.u32 %s21, 1
          %s397 = scalar_lea.sflag [#allocation4], %s396
          %s398 = sand.u32 %s73, 1
          %s399 = smul.addr %s398, 64
          %s400 = scalar_lea.vmem [#allocation8], %s399
          %s402 = ssub.s32 1024, 1024
          %403 = vsyncadd %s397, %s402
          %s404 = smul.addr %s21, 16
          %s405 = smul.addr %s404, 64
          %s406 = scalar_lea.hbm %s2, %s405
          %s407 = sshll.u32 %s400, 4
          %s408 = int_to_ptr.vmem [resolvable:$true] %s407
          %413 = dma.hbm_to_vmem [thread:$0]  %s406, 1024, %s408, %s397, 64, 64, 4
        $region40: #{tpu_custom_call.1} parent=35 // pred_fallthru
          _
        // Predicated region
        $region41: #{tpu_custom_call.1} parent=35 // pred_check
          %p414 = pneg %p109
        $region42: #{tpu_custom_call.1} parent=35 // pred_check_branch
          %416 = sbr.rel (%p414) target = $region44
        $region43: #{tpu_custom_call.1} parent=35 // pred_region
          %s417 = sand.u32 %s21, 1
          %s418 = scalar_lea.sflag [#allocation4], %s417
          %s419 = sand.u32 %s99, 1
          %s420 = smul.addr %s419, 64
          %s421 = scalar_lea.vmem [#allocation9], %s420
          %s423 = ssub.s32 1024, 1024
          %424 = vsyncadd %s418, %s423
          %s425 = smul.addr %s21, 16
          %s426 = smul.addr %s425, 64
          %s427 = scalar_lea.hbm %s3, %s426
          %s428 = sshll.u32 %s421, 4
          %s429 = int_to_ptr.vmem [resolvable:$true] %s428
          %434 = dma.hbm_to_vmem [thread:$0]  %s427, 1024, %s429, %s418, 64, 64, 4
        $region44: #{tpu_custom_call.1} parent=35 // pred_fallthru
          _
        // Predicated region
        $region45: #{tpu_custom_call.1} parent=35 // pred_check
          %p435 = pneg %p135
        $region46: #{tpu_custom_call.1} parent=35 // pred_check_branch
          %437 = sbr.rel (%p435) target = $region48
        $region47: #{tpu_custom_call.1} parent=35 // pred_region
          %p438 = scmp.lt.s32.totalorder %s21, 2
          %s439 = scalar_select %p438, %s21, 2
          %s440 = scalar_lea.vmem %s4, %s439
        $region48: #{tpu_custom_call.1} parent=35 // pred_fallthru
          _
        // Predicated region
        $region49: #{tpu_custom_call.1} parent=35 // pred_check
          %p441 = pneg %p161
        $region50: #{tpu_custom_call.1} parent=35 // pred_check_branch
          %443 = sbr.rel (%p441) target = $region52
        $region51: #{tpu_custom_call.1} parent=35 // pred_region
          %s444 = sand.u32 %s21, 1
          %s445 = scalar_lea.sflag [#allocation4], %s444
          %s446 = sand.u32 %s151, 1
          %s447 = smul.addr %s446, 64
          %s448 = scalar_lea.vmem [#allocation10], %s447
          %s450 = ssub.s32 1024, 1024
          %451 = vsyncadd %s445, %s450
          %s452 = smul.addr %s21, 16
          %s453 = smul.addr %s452, 64
          %s454 = scalar_lea.hbm %s5, %s453
          %s455 = sshll.u32 %s448, 4
          %s456 = int_to_ptr.vmem [resolvable:$true] %s455
          %461 = dma.hbm_to_vmem [thread:$0]  %s454, 1024, %s456, %s445, 64, 64, 4
        $region52: #{tpu_custom_call.1} parent=35 // pred_fallthru
          _
        // Predicated region
        $region53: #{tpu_custom_call.1} parent=35 // pred_check
          %p462 = pneg %p187
        $region54: #{tpu_custom_call.1} parent=35 // pred_check_branch
          %464 = sbr.rel (%p462) target = $region56
        $region55: #{tpu_custom_call.1} parent=35 // pred_region
          %p465 = scmp.lt.s32.totalorder %s21, 2
          %s466 = scalar_select %p465, %s21, 2
          %s467 = scalar_lea.vmem %s6, %s466
        $region56: #{tpu_custom_call.1} parent=35 // pred_fallthru
          _
        // Predicated region
        $region57: #{tpu_custom_call.1} parent=35 // pred_check
          %p468 = pneg %p213
        $region58: #{tpu_custom_call.1} parent=35 // pred_check_branch
          %470 = sbr.rel (%p468) target = $region60
        $region59: #{tpu_custom_call.1} parent=35 // pred_region
          %p471 = scmp.lt.s32.totalorder %s21, 2
          %s472 = scalar_select %p471, %s21, 2
          %s473 = scalar_lea.vmem %s7, %s472
        $region60: #{tpu_custom_call.1} parent=35 // pred_fallthru
          _
        // Predicated region
        $region61: #{tpu_custom_call.1} parent=35 // pred_check
          %p474 = pneg %p239
        $region62: #{tpu_custom_call.1} parent=35 // pred_check_branch
          %476 = sbr.rel (%p474) target = $region64
        $region63: #{tpu_custom_call.1} parent=35 // pred_region
          %p477 = scmp.lt.s32.totalorder %s21, 2
          %s478 = scalar_select %p477, %s21, 2
          %s479 = scalar_lea.vmem %s8, %s478
        $region64: #{tpu_custom_call.1} parent=35 // pred_fallthru
          _
      $region36: #{tpu_custom_call.1} parent=5 // pred_fallthru
        _
      %p480 = scmp.le.s32.totalorder 1, %s21
      %p481 = scmp.lt.s32.totalorder %s21, 4
      %p482 = pnand %p480, %p481
      %p483 = pneg %p482
      // Predicated region
      $region65: #{tpu_custom_call.1} parent=5 // pred_check
        _
      $region66: #{tpu_custom_call.1} parent=5 // pred_check_branch
        %485 = sbr.rel (%p482) target = $region68
      $region67: #{tpu_custom_call.1} parent=5 // pred_region
        %s486 = ssub.s32 %s21, 1
        // Predicated region
        $region69: #{tpu_custom_call.1} parent=67 // pred_check
          %p487 = pneg %p42
        $region70: #{tpu_custom_call.1} parent=67 // pred_check_branch
          %489 = sbr.rel (%p487) target = $region72
        $region71: #{tpu_custom_call.1} parent=67 // pred_region
          %490 = dma.done [#allocation4], 2048
        $region72: #{tpu_custom_call.1} parent=67 // pred_fallthru
          _
        // Predicated region
        $region73: #{tpu_custom_call.1} parent=67 // pred_check
          %p491 = pneg %p63
        $region74: #{tpu_custom_call.1} parent=67 // pred_check_branch
          %493 = sbr.rel (%p491) target = $region76
        $region75: #{tpu_custom_call.1} parent=67 // pred_region
          %494 = dma.done [#allocation7], 1024
        $region76: #{tpu_custom_call.1} parent=67 // pred_fallthru
          _
        %s495 = sand.u32 %s26, 1
        %s496 = scalar_lea.sflag [#allocation4], %s495
        %s497 = sand.u32 %s76, 1
        %s498 = smul.addr %s497, 64
        %s499 = scalar_lea.vmem [#allocation8], %s498
        // Predicated region
        $region77: #{tpu_custom_call.1} parent=67 // pred_check
          %p500 = pneg %p89
        $region78: #{tpu_custom_call.1} parent=67 // pred_check_branch
          %502 = sbr.rel (%p500) target = $region80
        $region79: #{tpu_custom_call.1} parent=67 // pred_region
          %503 = dma.done %s496, 1024
        $region80: #{tpu_custom_call.1} parent=67 // pred_fallthru
          _
        %s504 = sand.u32 %s26, 1
        %s505 = scalar_lea.sflag [#allocation4], %s504
        %s506 = sand.u32 %s102, 1
        %s507 = smul.addr %s506, 64
        %s508 = scalar_lea.vmem [#allocation9], %s507
        // Predicated region
        $region81: #{tpu_custom_call.1} parent=67 // pred_check
          %p509 = pneg %p115
        $region82: #{tpu_custom_call.1} parent=67 // pred_check_branch
          %511 = sbr.rel (%p509) target = $region84
        $region83: #{tpu_custom_call.1} parent=67 // pred_region
          %512 = dma.done %s505, 1024
        $region84: #{tpu_custom_call.1} parent=67 // pred_fallthru
          _
        %s513 = sand.u32 %s26, 1
        %s514 = scalar_lea.sflag [#allocation4], %s513
        %s515 = sand.u32 %s154, 1
        %s516 = smul.addr %s515, 64
        %s517 = scalar_lea.vmem [#allocation10], %s516
        // Predicated region
        $region85: #{tpu_custom_call.1} parent=67 // pred_check
          %p518 = pneg %p167
        $region86: #{tpu_custom_call.1} parent=67 // pred_check_branch
          %520 = sbr.rel (%p518) target = $region88
        $region87: #{tpu_custom_call.1} parent=67 // pred_region
          %521 = dma.done %s514, 1024
        $region88: #{tpu_custom_call.1} parent=67 // pred_fallthru
          _
        // Predicated region
        $region89: #{tpu_custom_call.1} parent=67 // pred_check
          %p522 = pneg %p287
        $region90: #{tpu_custom_call.1} parent=67 // pred_check_branch
          %524 = sbr.rel (%p522) target = $region92
        $region91: #{tpu_custom_call.1} parent=67 // pred_region
          %525 = dma.done [#allocation7], 1024
        $region92: #{tpu_custom_call.1} parent=67 // pred_fallthru
          _
        %p526 = pneg %p42
        %p527 = pneg %p39
        %p528 = pneg %p63
        %p529 = pneg %p60
        %s530 = sand.u32 %s26, 1
        %s531 = scalar_lea.sflag [#allocation4], %s530
        %s532 = sand.u32 %s76, 1
        %s533 = smul.addr %s532, 64
        %s534 = scalar_lea.vmem [#allocation8], %s533
        %p535 = pneg %p89
        %p536 = pneg %p86
        %s537 = sand.u32 %s26, 1
        %s538 = scalar_lea.sflag [#allocation4], %s537
        %s539 = sand.u32 %s102, 1
        %s540 = smul.addr %s539, 64
        %s541 = scalar_lea.vmem [#allocation9], %s540
        %p542 = pneg %p115
        %p543 = pneg %p112
        %p544 = scmp.lt.s32.totalorder %s26, 2
        %s545 = scalar_select %p544, %s26, 2
        %s546 = scalar_lea.vmem %s4, %s545
        %p547 = pneg %p141
        %p548 = pneg %p138
        %s549 = sand.u32 %s26, 1
        %s550 = scalar_lea.sflag [#allocation4], %s549
        %s551 = sand.u32 %s154, 1
        %s552 = smul.addr %s551, 64
        %s553 = scalar_lea.vmem [#allocation10], %s552
        %p554 = pneg %p167
        %p555 = pneg %p164
        %p556 = scmp.lt.s32.totalorder %s26, 2
        %s557 = scalar_select %p556, %s26, 2
        %s558 = scalar_lea.vmem %s6, %s557
        %p559 = pneg %p193
        %p560 = pneg %p190
        %p561 = scmp.lt.s32.totalorder %s26, 2
        %s562 = scalar_select %p561, %s26, 2
        %s563 = scalar_lea.vmem %s7, %s562
        %p564 = pneg %p219
        %p565 = pneg %p216
        %p566 = scmp.lt.s32.totalorder %s26, 2
        %s567 = scalar_select %p566, %s26, 2
        %s568 = scalar_lea.vmem %s8, %s567
        %p569 = pneg %p245
        %p570 = pneg %p242
        %p571 = pneg %p266
        %p572 = pneg %p263
        %p573 = pneg %p287
        %p574 = pneg %p284
        %p575 = pneg %p308
        %p576 = pneg %p305
        %p577 = pneg %p329
        %p578 = pneg %p326
        %p579 = scmp.lt.s32.totalorder %s26, 2
        %s580 = scalar_select %p579, %s26, 2
        %s581 = scalar_lea.vmem %s4, %s580
        %p582 = scmp.lt.s32.totalorder %s26, 2
        %s583 = scalar_select %p582, %s26, 2
        %s584 = scalar_lea.vmem %s6, %s583
        %p585 = scmp.lt.s32.totalorder %s26, 2
        %s586 = scalar_select %p585, %s26, 2
        %s587 = scalar_lea.vmem %s7, %s586
        %p588 = scmp.lt.s32.totalorder %s26, 2
        %s589 = scalar_select %p588, %s26, 2
        %s590 = scalar_lea.vmem %s8, %s589
        %p592 = scmp.eq.s32.totalorder %s26, 0
        // Predicated region
        $region93: #{tpu_custom_call.1} parent=67 // pred_check
          %p593 = pneg %p592
        $region94: #{tpu_custom_call.1} parent=67 // pred_check_branch
          %595 = sbr.rel (%p593) target = $region96
        $region95: #{tpu_custom_call.1} parent=67 // pred_region
          %v596 = vld [vmem:[#allocation3] sm:$0xff]
          %v597 = vld [vmem:[#allocation3 + $0x8] sm:$0xff]
          %v598 = vld [vmem:[#allocation3 + $0x10] sm:$0xff]
          %v599 = vld [vmem:[#allocation3 + $0x18] sm:$0xff]
          %v600 = vld [vmem:[#allocation3 + $0x20] sm:$0xff]
          %v601 = vld [vmem:[#allocation3 + $0x28] sm:$0xff]
          %v602 = vld [vmem:[#allocation3 + $0x30] sm:$0xff]
          %v603 = vld [vmem:[#allocation3 + $0x38] sm:$0xff]
          %v604 = vld [vmem:[#allocation3 + $0x40] sm:$0xff]
          %v605 = vld [vmem:[#allocation3 + $0x48] sm:$0xff]
          %v606 = vld [vmem:[#allocation3 + $0x50] sm:$0xff]
          %v607 = vld [vmem:[#allocation3 + $0x58] sm:$0xff]
          %v608 = vld [vmem:[#allocation3 + $0x60] sm:$0xff]
          %v609 = vld [vmem:[#allocation3 + $0x68] sm:$0xff]
          %v610 = vld [vmem:[#allocation3 + $0x70] sm:$0xff]
          %v611 = vld [vmem:[#allocation3 + $0x78] sm:$0xff]
          %612 = vst [vmem:[#allocation2] sm:$0xff] %v596
          %613 = vst [vmem:[#allocation2 + $0x8] sm:$0xff] %v597
          %614 = vst [vmem:[#allocation2 + $0x10] sm:$0xff] %v598
          %615 = vst [vmem:[#allocation2 + $0x18] sm:$0xff] %v599
          %616 = vst [vmem:[#allocation2 + $0x20] sm:$0xff] %v600
          %617 = vst [vmem:[#allocation2 + $0x28] sm:$0xff] %v601
          %618 = vst [vmem:[#allocation2 + $0x30] sm:$0xff] %v602
          %619 = vst [vmem:[#allocation2 + $0x38] sm:$0xff] %v603
          %620 = vst [vmem:[#allocation2 + $0x40] sm:$0xff] %v604
          %621 = vst [vmem:[#allocation2 + $0x48] sm:$0xff] %v605
          %622 = vst [vmem:[#allocation2 + $0x50] sm:$0xff] %v606
          %623 = vst [vmem:[#allocation2 + $0x58] sm:$0xff] %v607
          %624 = vst [vmem:[#allocation2 + $0x60] sm:$0xff] %v608
          %625 = vst [vmem:[#allocation2 + $0x68] sm:$0xff] %v609
          %626 = vst [vmem:[#allocation2 + $0x70] sm:$0xff] %v610
          %627 = vst [vmem:[#allocation2 + $0x78] sm:$0xff] %v611
        $region96: #{tpu_custom_call.1} parent=67 // pred_fallthru
          _
        %v628 = vld [vmem:[#allocation6] sm:$0xf]
        %v629 = vld [vmem:[#allocation6 + $0x4] sm:$0xf]
        %v630 = vld [vmem:[#allocation6 + $0x8] sm:$0xf]
        %v631 = vld [vmem:[#allocation6 + $0xc] sm:$0xf]
        %v632 = vld [vmem:[#allocation6 + $0x10] sm:$0xf]
        %v633 = vld [vmem:[#allocation6 + $0x14] sm:$0xf]
        %v634 = vld [vmem:[#allocation6 + $0x18] sm:$0xf]
        %v635 = vld [vmem:[#allocation6 + $0x1c] sm:$0xf]
        %v636 = vld [vmem:[#allocation6 + $0x20] sm:$0xf]
        %v637 = vld [vmem:[#allocation6 + $0x24] sm:$0xf]
        %v638 = vld [vmem:[#allocation6 + $0x28] sm:$0xf]
        %v639 = vld [vmem:[#allocation6 + $0x2c] sm:$0xf]
        %v640 = vld [vmem:[#allocation6 + $0x30] sm:$0xf]
        %v641 = vld [vmem:[#allocation6 + $0x34] sm:$0xf]
        %v642 = vld [vmem:[#allocation6 + $0x38] sm:$0xf]
        %v643 = vld [vmem:[#allocation6 + $0x3c] sm:$0xf]
        %v644 = vld [vmem:[#allocation2] sm:$0xff]
        %v645 = vld [vmem:[#allocation2 + $0x8] sm:$0xff]
        %v646 = vld [vmem:[#allocation2 + $0x10] sm:$0xff]
        %v647 = vld [vmem:[#allocation2 + $0x18] sm:$0xff]
        %v648 = vld [vmem:[#allocation2 + $0x20] sm:$0xff]
        %v649 = vld [vmem:[#allocation2 + $0x28] sm:$0xff]
        %v650 = vld [vmem:[#allocation2 + $0x30] sm:$0xff]
        %v651 = vld [vmem:[#allocation2 + $0x38] sm:$0xff]
        %v652 = vld [vmem:[#allocation2 + $0x40] sm:$0xff]
        %v653 = vld [vmem:[#allocation2 + $0x48] sm:$0xff]
        %v654 = vld [vmem:[#allocation2 + $0x50] sm:$0xff]
        %v655 = vld [vmem:[#allocation2 + $0x58] sm:$0xff]
        %v656 = vld [vmem:[#allocation2 + $0x60] sm:$0xff]
        %v657 = vld [vmem:[#allocation2 + $0x68] sm:$0xff]
        %v658 = vld [vmem:[#allocation2 + $0x70] sm:$0xff]
        %v659 = vld [vmem:[#allocation2 + $0x78] sm:$0xff]
        %v660 = vpack.c.bf16 %v645, %v644
        %v661 = vpack.c.bf16 %v647, %v646
        %v662 = vpack.c.bf16 %v649, %v648
        %v663 = vpack.c.bf16 %v651, %v650
        %v664 = vpack.c.bf16 %v653, %v652
        %v665 = vpack.c.bf16 %v655, %v654
        %v666 = vpack.c.bf16 %v657, %v656
        %v667 = vpack.c.bf16 %v659, %v658
        %v668 = vld [vmem:[%s499] sm:$0xf]
        %v669 = vld [vmem:[%s499 + $0x4] sm:$0xf]
        %v670 = vld [vmem:[%s499 + $0x8] sm:$0xf]
        %v671 = vld [vmem:[%s499 + $0xc] sm:$0xf]
        %v672 = vld [vmem:[%s499 + $0x10] sm:$0xf]
        %v673 = vld [vmem:[%s499 + $0x14] sm:$0xf]
        %v674 = vld [vmem:[%s499 + $0x18] sm:$0xf]
        %v675 = vld [vmem:[%s499 + $0x1c] sm:$0xf]
        %v676 = vld [vmem:[%s499 + $0x20] sm:$0xf]
        %v677 = vld [vmem:[%s499 + $0x24] sm:$0xf]
        %v678 = vld [vmem:[%s499 + $0x28] sm:$0xf]
        %v679 = vld [vmem:[%s499 + $0x2c] sm:$0xf]
        %v680 = vld [vmem:[%s499 + $0x30] sm:$0xf]
        %v681 = vld [vmem:[%s499 + $0x34] sm:$0xf]
        %v682 = vld [vmem:[%s499 + $0x38] sm:$0xf]
        %v683 = vld [vmem:[%s499 + $0x3c] sm:$0xf]
        %v684 = vunpack.c.l.bf16 %v668
        %v685 = vunpack.c.l.bf16 %v669
        %v686 = vunpack.c.l.bf16 %v670
        %v687 = vunpack.c.l.bf16 %v671
        %v688 = vunpack.c.l.bf16 %v672
        %v689 = vunpack.c.l.bf16 %v673
        %v690 = vunpack.c.l.bf16 %v674
        %v691 = vunpack.c.l.bf16 %v675
        %v692 = vunpack.c.l.bf16 %v676
        %v693 = vunpack.c.l.bf16 %v677
        %v694 = vunpack.c.l.bf16 %v678
        %v695 = vunpack.c.l.bf16 %v679
        %v696 = vunpack.c.l.bf16 %v680
        %v697 = vunpack.c.l.bf16 %v681
        %v698 = vunpack.c.l.bf16 %v682
        %v699 = vunpack.c.l.bf16 %v683
        %v716 = vunpack.c.l.b16 %v628
        %v717 = vunpack.c.l.b16 %v629
        %v718 = vunpack.c.l.b16 %v630
        %v719 = vunpack.c.l.b16 %v631
        %v720 = vunpack.c.l.b16 %v632
        %v721 = vunpack.c.l.b16 %v633
        %v722 = vunpack.c.l.b16 %v634
        %v723 = vunpack.c.l.b16 %v635
        %v724 = vunpack.c.l.b16 %v636
        %v725 = vunpack.c.l.b16 %v637
        %v726 = vunpack.c.l.b16 %v638
        %v727 = vunpack.c.l.b16 %v639
        %v728 = vunpack.c.l.b16 %v640
        %v729 = vunpack.c.l.b16 %v641
        %v730 = vunpack.c.l.b16 %v642
        %v731 = vunpack.c.l.b16 %v643
        %v732 = vpack.c.b16 %v717, %v716
        %v733 = vpack.c.b16 %v719, %v718
        %v734 = vpack.c.b16 %v721, %v720
        %v735 = vpack.c.b16 %v723, %v722
        %v736 = vpack.c.b16 %v725, %v724
        %v737 = vpack.c.b16 %v727, %v726
        %v738 = vpack.c.b16 %v729, %v728
        %v739 = vpack.c.b16 %v731, %v730
        %748 = vmatprep.subr.bf16.mxu0 0
        %749 = vmatpush1.bf16.msra.mxu0 %v660
        %750 = vmatprep.subr.bf16.mxu0 0
        %751 = vmatpush1.bf16.msra.mxu0 %v661
        %752 = vmatprep.subr.bf16.mxu0 0
        %753 = vmatpush1.bf16.msra.mxu0 %v662
        %754 = vmatprep.subr.bf16.mxu0 0
        %755 = vmatpush1.bf16.msra.mxu0 %v663
        %756 = vmatprep.subr.bf16.mxu0 0
        %757 = vmatpush1.bf16.msra.mxu0 %v664
        %758 = vmatprep.subr.bf16.mxu0 0
        %759 = vmatpush1.bf16.msra.mxu0 %v665
        %760 = vmatprep.subr.bf16.mxu0 0
        %761 = vmatpush1.bf16.msra.mxu0 %v666
        %762 = vmatprep.subr.bf16.mxu0 0
        %763 = vmatpush1.bf16.msra.mxu0 %v667
        %764 = vmatprep.subr.bf16.mxu0 0
        %765 = vmatpush1.bf16.msra.mxu0 0
        %766 = vmatprep.subr.bf16.mxu0 0
        %767 = vmatpush1.bf16.msra.mxu0 0
        %768 = vmatprep.subr.bf16.mxu0 0
        %769 = vmatpush1.bf16.msra.mxu0 0
        %770 = vmatprep.subr.bf16.mxu0 0
        %771 = vmatpush1.bf16.msra.mxu0 0
        %772 = vmatprep.subr.bf16.mxu0 0
        %773 = vmatpush1.bf16.msra.mxu0 0
        %774 = vmatprep.subr.bf16.mxu0 0
        %775 = vmatpush1.bf16.msra.mxu0 0
        %776 = vmatprep.subr.bf16.mxu0 0
        %777 = vmatpush1.bf16.msra.mxu0 0
        %778 = vmatprep.subr.bf16.mxu0 0
        %779 = vmatpush1.bf16.msra.mxu0 0
        %780 = vmatprep.mubr.bf16.mxu0 0
        %781 = vmatmul.mubr.bf16.gmra.mrb[0].mxu0 %v732
        %v782 = vpop.f32.mrb[0].mxu0
        %v783 = vadd.f32 %v684, %v782
        %v784 = vpop.f32.mrb[0].mxu0
        %v785 = vpop.f32.mrb[0].mxu0
        %v786 = vadd.f32 %v685, %v785
        %v787 = vpop.f32.mrb[0].mxu0
        %788 = vmatprep.mubr.bf16.mxu0 0
        %789 = vmatmul.mubr.bf16.gmra.mrb[0].mxu0 %v733
        %v790 = vpop.f32.mrb[0].mxu0
        %v791 = vadd.f32 %v686, %v790
        %v792 = vpop.f32.mrb[0].mxu0
        %v793 = vpop.f32.mrb[0].mxu0
        %v794 = vadd.f32 %v687, %v793
        %v795 = vpop.f32.mrb[0].mxu0
        %796 = vmatprep.mubr.bf16.mxu0 0
        %797 = vmatmul.mubr.bf16.gmra.mrb[0].mxu0 %v734
        %v798 = vpop.f32.mrb[0].mxu0
        %v799 = vadd.f32 %v688, %v798
        %v800 = vpop.f32.mrb[0].mxu0
        %v801 = vpop.f32.mrb[0].mxu0
        %v802 = vadd.f32 %v689, %v801
        %v803 = vpop.f32.mrb[0].mxu0
        %804 = vmatprep.mubr.bf16.mxu0 0
        %805 = vmatmul.mubr.bf16.gmra.mrb[0].mxu0 %v735
        %v806 = vpop.f32.mrb[0].mxu0
        %v807 = vadd.f32 %v690, %v806
        %v808 = vpop.f32.mrb[0].mxu0
        %v809 = vpop.f32.mrb[0].mxu0
        %v810 = vadd.f32 %v691, %v809
        %v811 = vpop.f32.mrb[0].mxu0
        %812 = vmatprep.mubr.bf16.mxu0 0
        %813 = vmatmul.mubr.bf16.gmra.mrb[0].mxu0 %v736
        %v814 = vpop.f32.mrb[0].mxu0
        %v815 = vadd.f32 %v692, %v814
        %v816 = vpop.f32.mrb[0].mxu0
        %v817 = vpop.f32.mrb[0].mxu0
        %v818 = vadd.f32 %v693, %v817
        %v819 = vpop.f32.mrb[0].mxu0
        %820 = vmatprep.mubr.bf16.mxu0 0
        %821 = vmatmul.mubr.bf16.gmra.mrb[0].mxu0 %v737
        %v822 = vpop.f32.mrb[0].mxu0
        %v823 = vadd.f32 %v694, %v822
        %v824 = vpop.f32.mrb[0].mxu0
        %v825 = vpop.f32.mrb[0].mxu0
        %v826 = vadd.f32 %v695, %v825
        %v827 = vpop.f32.mrb[0].mxu0
        %828 = vmatprep.mubr.bf16.mxu0 0
        %829 = vmatmul.mubr.bf16.gmra.mrb[0].mxu0 %v738
        %v830 = vpop.f32.mrb[0].mxu0
        %v831 = vadd.f32 %v696, %v830
        %v832 = vpop.f32.mrb[0].mxu0
        %v833 = vpop.f32.mrb[0].mxu0
        %v834 = vadd.f32 %v697, %v833
        %v835 = vpop.f32.mrb[0].mxu0
        %836 = vmatprep.mubr.bf16.mxu0 0
        %837 = vmatmul.mubr.bf16.gmra.mrb[0].mxu0 %v739
        %v838 = vpop.f32.mrb[0].mxu0
        %v839 = vadd.f32 %v698, %v838
        %v840 = vpop.f32.mrb[0].mxu0
        %v841 = vpop.f32.mrb[0].mxu0
        %v842 = vadd.f32 %v699, %v841
        %v843 = vpop.f32.mrb[0].mxu0
        %844 = vdwg.mxu0
        %v845 = vpack.c.bf16 %v786, %v783
        %v846 = vpack.c.bf16 %v794, %v791
        %v847 = vpack.c.bf16 %v802, %v799
        %v848 = vpack.c.bf16 %v810, %v807
        %v849 = vpack.c.bf16 %v818, %v815
        %v850 = vpack.c.bf16 %v826, %v823
        %v851 = vpack.c.bf16 %v834, %v831
        %v852 = vpack.c.bf16 %v842, %v839
        %v853 = vld [vmem:[%s508] sm:$0xf]
        %v854 = vld [vmem:[%s508 + $0x4] sm:$0xf]
        %v855 = vld [vmem:[%s508 + $0x8] sm:$0xf]
        %v856 = vld [vmem:[%s508 + $0xc] sm:$0xf]
        %v857 = vld [vmem:[%s508 + $0x10] sm:$0xf]
        %v858 = vld [vmem:[%s508 + $0x14] sm:$0xf]
        %v859 = vld [vmem:[%s508 + $0x18] sm:$0xf]
        %v860 = vld [vmem:[%s508 + $0x1c] sm:$0xf]
        %v861 = vld [vmem:[%s508 + $0x20] sm:$0xf]
        %v862 = vld [vmem:[%s508 + $0x24] sm:$0xf]
        %v863 = vld [vmem:[%s508 + $0x28] sm:$0xf]
        %v864 = vld [vmem:[%s508 + $0x2c] sm:$0xf]
        %v865 = vld [vmem:[%s508 + $0x30] sm:$0xf]
        %v866 = vld [vmem:[%s508 + $0x34] sm:$0xf]
        %v867 = vld [vmem:[%s508 + $0x38] sm:$0xf]
        %v868 = vld [vmem:[%s508 + $0x3c] sm:$0xf]
        %v869 = vld [vmem:[%s581] sm:$0x1]
        %v871 = vlaneseq
        %v872 = vshrl.u32 %v871, 7
        %v873 = vsub.s32 0, %v872
        %v874 = vrot.slane %v869, %v873
        %v892 = vunpack.c.l.b16 %v853
        %v893 = vunpack.c.l.b16 %v854
        %v894 = vunpack.c.l.b16 %v855
        %v895 = vunpack.c.l.b16 %v856
        %v896 = vunpack.c.l.b16 %v857
        %v897 = vunpack.c.l.b16 %v858
        %v898 = vunpack.c.l.b16 %v859
        %v899 = vunpack.c.l.b16 %v860
        %v900 = vunpack.c.l.b16 %v861
        %v901 = vunpack.c.l.b16 %v862
        %v902 = vunpack.c.l.b16 %v863
        %v903 = vunpack.c.l.b16 %v864
        %v904 = vunpack.c.l.b16 %v865
        %v905 = vunpack.c.l.b16 %v866
        %v906 = vunpack.c.l.b16 %v867
        %v907 = vunpack.c.l.b16 %v868
        %v908 = vpack.c.b16 %v893, %v892
        %v909 = vpack.c.b16 %v895, %v894
        %v910 = vpack.c.b16 %v897, %v896
        %v911 = vpack.c.b16 %v899, %v898
        %v912 = vpack.c.b16 %v901, %v900
        %v913 = vpack.c.b16 %v903, %v902
        %v914 = vpack.c.b16 %v905, %v904
        %v915 = vpack.c.b16 %v907, %v906
        %924 = vmatprep.subr.bf16.mxu0 0
        %925 = vmatpush1.bf16.msra.mxu0 %v908
        %926 = vmatprep.subr.bf16.mxu0 0
        %927 = vmatpush1.bf16.msra.mxu0 %v909
        %928 = vmatprep.subr.bf16.mxu0 0
        %929 = vmatpush1.bf16.msra.mxu0 %v910
        %930 = vmatprep.subr.bf16.mxu0 0
        %931 = vmatpush1.bf16.msra.mxu0 %v911
        %932 = vmatprep.subr.bf16.mxu0 0
        %933 = vmatpush1.bf16.msra.mxu0 %v912
        %934 = vmatprep.subr.bf16.mxu0 0
        %935 = vmatpush1.bf16.msra.mxu0 %v913
        %936 = vmatprep.subr.bf16.mxu0 0
        %937 = vmatpush1.bf16.msra.mxu0 %v914
        %938 = vmatprep.subr.bf16.mxu0 0
        %939 = vmatpush1.bf16.msra.mxu0 %v915
        %940 = vmatprep.subr.bf16.mxu0 0
        %941 = vmatpush1.bf16.msra.mxu0 0
        %942 = vmatprep.subr.bf16.mxu0 0
        %943 = vmatpush1.bf16.msra.mxu0 0
        %944 = vmatprep.subr.bf16.mxu0 0
        %945 = vmatpush1.bf16.msra.mxu0 0
        %946 = vmatprep.subr.bf16.mxu0 0
        %947 = vmatpush1.bf16.msra.mxu0 0
        %948 = vmatprep.subr.bf16.mxu0 0
        %949 = vmatpush1.bf16.msra.mxu0 0
        %950 = vmatprep.subr.bf16.mxu0 0
        %951 = vmatpush1.bf16.msra.mxu0 0
        %952 = vmatprep.subr.bf16.mxu0 0
        %953 = vmatpush1.bf16.msra.mxu0 0
        %954 = vmatprep.subr.bf16.mxu0 0
        %955 = vmatpush1.bf16.msra.mxu0 0
        %956 = vmatprep.mubr.bf16.mxu0 0
        %957 = vmatmul.mubr.bf16.gmra.mrb[0].mxu0 %v845
        %v958 = vpop.f32.mrb[0].mxu0
        %v959 = vadd.f32 %v874, %v958
        %v960 = vpop.f32.mrb[0].mxu0
        %v961 = vpop.f32.mrb[0].mxu0
        %v962 = vadd.f32 %v874, %v961
        %v963 = vpop.f32.mrb[0].mxu0
        %964 = vmatprep.mubr.bf16.mxu0 0
        %965 = vmatmul.mubr.bf16.gmra.mrb[0].mxu0 %v846
        %v966 = vpop.f32.mrb[0].mxu0
        %v967 = vadd.f32 %v874, %v966
        %v968 = vpop.f32.mrb[0].mxu0
        %v969 = vpop.f32.mrb[0].mxu0
        %v970 = vadd.f32 %v874, %v969
        %v971 = vpop.f32.mrb[0].mxu0
        %972 = vmatprep.mubr.bf16.mxu0 0
        %973 = vmatmul.mubr.bf16.gmra.mrb[0].mxu0 %v847
        %v974 = vpop.f32.mrb[0].mxu0
        %v975 = vadd.f32 %v874, %v974
        %v976 = vpop.f32.mrb[0].mxu0
        %v977 = vpop.f32.mrb[0].mxu0
        %v978 = vadd.f32 %v874, %v977
        %v979 = vpop.f32.mrb[0].mxu0
        %980 = vmatprep.mubr.bf16.mxu0 0
        %981 = vmatmul.mubr.bf16.gmra.mrb[0].mxu0 %v848
        %v982 = vpop.f32.mrb[0].mxu0
        %v983 = vadd.f32 %v874, %v982
        %v984 = vpop.f32.mrb[0].mxu0
        %v985 = vpop.f32.mrb[0].mxu0
        %v986 = vadd.f32 %v874, %v985
        %v987 = vpop.f32.mrb[0].mxu0
        %988 = vmatprep.mubr.bf16.mxu0 0
        %989 = vmatmul.mubr.bf16.gmra.mrb[0].mxu0 %v849
        %v990 = vpop.f32.mrb[0].mxu0
        %v991 = vadd.f32 %v874, %v990
        %v992 = vpop.f32.mrb[0].mxu0
        %v993 = vpop.f32.mrb[0].mxu0
        %v994 = vadd.f32 %v874, %v993
        %v995 = vpop.f32.mrb[0].mxu0
        %996 = vmatprep.mubr.bf16.mxu0 0
        %997 = vmatmul.mubr.bf16.gmra.mrb[0].mxu0 %v850
        %v998 = vpop.f32.mrb[0].mxu0
        %v999 = vadd.f32 %v874, %v998
        %v1000 = vpop.f32.mrb[0].mxu0
        %v1001 = vpop.f32.mrb[0].mxu0
        %v1002 = vadd.f32 %v874, %v1001
        %v1003 = vpop.f32.mrb[0].mxu0
        %1004 = vmatprep.mubr.bf16.mxu0 0
        %1005 = vmatmul.mubr.bf16.gmra.mrb[0].mxu0 %v851
        %v1006 = vpop.f32.mrb[0].mxu0
        %v1007 = vadd.f32 %v874, %v1006
        %v1008 = vpop.f32.mrb[0].mxu0
        %v1009 = vpop.f32.mrb[0].mxu0
        %v1010 = vadd.f32 %v874, %v1009
        %v1011 = vpop.f32.mrb[0].mxu0
        %1012 = vmatprep.mubr.bf16.mxu0 0
        %1013 = vmatmul.mubr.bf16.gmra.mrb[0].mxu0 %v852
        %v1014 = vpop.f32.mrb[0].mxu0
        %v1015 = vadd.f32 %v874, %v1014
        %v1016 = vpop.f32.mrb[0].mxu0
        %v1017 = vpop.f32.mrb[0].mxu0
        %v1018 = vadd.f32 %v874, %v1017
        %v1019 = vpop.f32.mrb[0].mxu0
        %1020 = vdwg.mxu0
        %v1021 = vmax.f32 %v959, 0.0
        %v1022 = vmax.f32 %v962, 0.0
        %v1023 = vmax.f32 %v967, 0.0
        %v1024 = vmax.f32 %v970, 0.0
        %v1025 = vmax.f32 %v975, 0.0
        %v1026 = vmax.f32 %v978, 0.0
        %v1027 = vmax.f32 %v983, 0.0
        %v1028 = vmax.f32 %v986, 0.0
        %v1029 = vmax.f32 %v991, 0.0
        %v1030 = vmax.f32 %v994, 0.0
        %v1031 = vmax.f32 %v999, 0.0
        %v1032 = vmax.f32 %v1002, 0.0
        %v1033 = vmax.f32 %v1007, 0.0
        %v1034 = vmax.f32 %v1010, 0.0
        %v1035 = vmax.f32 %v1015, 0.0
        %v1036 = vmax.f32 %v1018, 0.0
        %v1037 = vpack.c.bf16 %v1022, %v1021
        %v1038 = vpack.c.bf16 %v1024, %v1023
        %v1039 = vpack.c.bf16 %v1026, %v1025
        %v1040 = vpack.c.bf16 %v1028, %v1027
        %v1041 = vpack.c.bf16 %v1030, %v1029
        %v1042 = vpack.c.bf16 %v1032, %v1031
        %v1043 = vpack.c.bf16 %v1034, %v1033
        %v1044 = vpack.c.bf16 %v1036, %v1035
        %v1045 = vld [vmem:[%s517] sm:$0xf]
        %v1046 = vld [vmem:[%s517 + $0x4] sm:$0xf]
        %v1047 = vld [vmem:[%s517 + $0x8] sm:$0xf]
        %v1048 = vld [vmem:[%s517 + $0xc] sm:$0xf]
        %v1049 = vld [vmem:[%s517 + $0x10] sm:$0xf]
        %v1050 = vld [vmem:[%s517 + $0x14] sm:$0xf]
        %v1051 = vld [vmem:[%s517 + $0x18] sm:$0xf]
        %v1052 = vld [vmem:[%s517 + $0x1c] sm:$0xf]
        %v1053 = vld [vmem:[%s517 + $0x20] sm:$0xf]
        %v1054 = vld [vmem:[%s517 + $0x24] sm:$0xf]
        %v1055 = vld [vmem:[%s517 + $0x28] sm:$0xf]
        %v1056 = vld [vmem:[%s517 + $0x2c] sm:$0xf]
        %v1057 = vld [vmem:[%s517 + $0x30] sm:$0xf]
        %v1058 = vld [vmem:[%s517 + $0x34] sm:$0xf]
        %v1059 = vld [vmem:[%s517 + $0x38] sm:$0xf]
        %v1060 = vld [vmem:[%s517 + $0x3c] sm:$0xf]
        %v1061 = vld [vmem:[%s584] sm:$0x1]
        %v1063 = vlaneseq
        %v1064 = vshrl.u32 %v1063, 7
        %v1065 = vsub.s32 0, %v1064
        %v1066 = vrot.slane %v1061, %v1065
        %v1084 = vunpack.c.l.b16 %v1045
        %v1085 = vunpack.c.l.b16 %v1046
        %v1086 = vunpack.c.l.b16 %v1047
        %v1087 = vunpack.c.l.b16 %v1048
        %v1088 = vunpack.c.l.b16 %v1049
        %v1089 = vunpack.c.l.b16 %v1050
        %v1090 = vunpack.c.l.b16 %v1051
        %v1091 = vunpack.c.l.b16 %v1052
        %v1092 = vunpack.c.l.b16 %v1053
        %v1093 = vunpack.c.l.b16 %v1054
        %v1094 = vunpack.c.l.b16 %v1055
        %v1095 = vunpack.c.l.b16 %v1056
        %v1096 = vunpack.c.l.b16 %v1057
        %v1097 = vunpack.c.l.b16 %v1058
        %v1098 = vunpack.c.l.b16 %v1059
        %v1099 = vunpack.c.l.b16 %v1060
        %v1100 = vpack.c.b16 %v1085, %v1084
        %v1101 = vpack.c.b16 %v1087, %v1086
        %v1102 = vpack.c.b16 %v1089, %v1088
        %v1103 = vpack.c.b16 %v1091, %v1090
        %v1104 = vpack.c.b16 %v1093, %v1092
        %v1105 = vpack.c.b16 %v1095, %v1094
        %v1106 = vpack.c.b16 %v1097, %v1096
        %v1107 = vpack.c.b16 %v1099, %v1098
        %1116 = vmatprep.subr.bf16.mxu0 0
        %1117 = vmatpush1.bf16.msra.mxu0 %v1100
        %1118 = vmatprep.subr.bf16.mxu0 0
        %1119 = vmatpush1.bf16.msra.mxu0 %v1101
        %1120 = vmatprep.subr.bf16.mxu0 0
        %1121 = vmatpush1.bf16.msra.mxu0 %v1102
        %1122 = vmatprep.subr.bf16.mxu0 0
        %1123 = vmatpush1.bf16.msra.mxu0 %v1103
        %1124 = vmatprep.subr.bf16.mxu0 0
        %1125 = vmatpush1.bf16.msra.mxu0 %v1104
        %1126 = vmatprep.subr.bf16.mxu0 0
        %1127 = vmatpush1.bf16.msra.mxu0 %v1105
        %1128 = vmatprep.subr.bf16.mxu0 0
        %1129 = vmatpush1.bf16.msra.mxu0 %v1106
        %1130 = vmatprep.subr.bf16.mxu0 0
        %1131 = vmatpush1.bf16.msra.mxu0 %v1107
        %1132 = vmatprep.subr.bf16.mxu0 0
        %1133 = vmatpush1.bf16.msra.mxu0 0
        %1134 = vmatprep.subr.bf16.mxu0 0
        %1135 = vmatpush1.bf16.msra.mxu0 0
        %1136 = vmatprep.subr.bf16.mxu0 0
        %1137 = vmatpush1.bf16.msra.mxu0 0
        %1138 = vmatprep.subr.bf16.mxu0 0
        %1139 = vmatpush1.bf16.msra.mxu0 0
        %1140 = vmatprep.subr.bf16.mxu0 0
        %1141 = vmatpush1.bf16.msra.mxu0 0
        %1142 = vmatprep.subr.bf16.mxu0 0
        %1143 = vmatpush1.bf16.msra.mxu0 0
        %1144 = vmatprep.subr.bf16.mxu0 0
        %1145 = vmatpush1.bf16.msra.mxu0 0
        %1146 = vmatprep.subr.bf16.mxu0 0
        %1147 = vmatpush1.bf16.msra.mxu0 0
        %1148 = vmatprep.mubr.bf16.mxu0 0
        %1149 = vmatmul.mubr.bf16.gmra.mrb[0].mxu0 %v1037
        %v1150 = vpop.f32.mrb[0].mxu0
        %v1151 = vadd.f32 %v1066, %v1150
        %v1152 = vpop.f32.mrb[0].mxu0
        %v1153 = vpop.f32.mrb[0].mxu0
        %v1154 = vadd.f32 %v1066, %v1153
        %v1155 = vpop.f32.mrb[0].mxu0
        %1156 = vmatprep.mubr.bf16.mxu0 0
        %1157 = vmatmul.mubr.bf16.gmra.mrb[0].mxu0 %v1038
        %v1158 = vpop.f32.mrb[0].mxu0
        %v1159 = vadd.f32 %v1066, %v1158
        %v1160 = vpop.f32.mrb[0].mxu0
        %v1161 = vpop.f32.mrb[0].mxu0
        %v1162 = vadd.f32 %v1066, %v1161
        %v1163 = vpop.f32.mrb[0].mxu0
        %1164 = vmatprep.mubr.bf16.mxu0 0
        %1165 = vmatmul.mubr.bf16.gmra.mrb[0].mxu0 %v1039
        %v1166 = vpop.f32.mrb[0].mxu0
        %v1167 = vadd.f32 %v1066, %v1166
        %v1168 = vpop.f32.mrb[0].mxu0
        %v1169 = vpop.f32.mrb[0].mxu0
        %v1170 = vadd.f32 %v1066, %v1169
        %v1171 = vpop.f32.mrb[0].mxu0
        %1172 = vmatprep.mubr.bf16.mxu0 0
        %1173 = vmatmul.mubr.bf16.gmra.mrb[0].mxu0 %v1040
        %v1174 = vpop.f32.mrb[0].mxu0
        %v1175 = vadd.f32 %v1066, %v1174
        %v1176 = vpop.f32.mrb[0].mxu0
        %v1177 = vpop.f32.mrb[0].mxu0
        %v1178 = vadd.f32 %v1066, %v1177
        %v1179 = vpop.f32.mrb[0].mxu0
        %1180 = vmatprep.mubr.bf16.mxu0 0
        %1181 = vmatmul.mubr.bf16.gmra.mrb[0].mxu0 %v1041
        %v1182 = vpop.f32.mrb[0].mxu0
        %v1183 = vadd.f32 %v1066, %v1182
        %v1184 = vpop.f32.mrb[0].mxu0
        %v1185 = vpop.f32.mrb[0].mxu0
        %v1186 = vadd.f32 %v1066, %v1185
        %v1187 = vpop.f32.mrb[0].mxu0
        %1188 = vmatprep.mubr.bf16.mxu0 0
        %1189 = vmatmul.mubr.bf16.gmra.mrb[0].mxu0 %v1042
        %v1190 = vpop.f32.mrb[0].mxu0
        %v1191 = vadd.f32 %v1066, %v1190
        %v1192 = vpop.f32.mrb[0].mxu0
        %v1193 = vpop.f32.mrb[0].mxu0
        %v1194 = vadd.f32 %v1066, %v1193
        %v1195 = vpop.f32.mrb[0].mxu0
        %1196 = vmatprep.mubr.bf16.mxu0 0
        %1197 = vmatmul.mubr.bf16.gmra.mrb[0].mxu0 %v1043
        %v1198 = vpop.f32.mrb[0].mxu0
        %v1199 = vadd.f32 %v1066, %v1198
        %v1200 = vpop.f32.mrb[0].mxu0
        %v1201 = vpop.f32.mrb[0].mxu0
        %v1202 = vadd.f32 %v1066, %v1201
        %v1203 = vpop.f32.mrb[0].mxu0
        %1204 = vmatprep.mubr.bf16.mxu0 0
        %1205 = vmatmul.mubr.bf16.gmra.mrb[0].mxu0 %v1044
        %v1206 = vpop.f32.mrb[0].mxu0
        %v1207 = vadd.f32 %v1066, %v1206
        %v1208 = vpop.f32.mrb[0].mxu0
        %v1209 = vpop.f32.mrb[0].mxu0
        %v1210 = vadd.f32 %v1066, %v1209
        %v1211 = vpop.f32.mrb[0].mxu0
        %1212 = vdwg.mxu0
        %v1213 = vld [vmem:[%s587] sm:$0x1]
        %v1215 = vlaneseq
        %v1216 = vshrl.u32 %v1215, 7
        %v1217 = vsub.s32 0, %v1216
        %v1218 = vrot.slane %v1213, %v1217
        %v1220 = vmul.f32 %v1151, %v1218
        %v1221 = vmul.f32 %v1154, %v1218
        %v1222 = vmul.f32 %v1159, %v1218
        %v1223 = vmul.f32 %v1162, %v1218
        %v1224 = vmul.f32 %v1167, %v1218
        %v1225 = vmul.f32 %v1170, %v1218
        %v1226 = vmul.f32 %v1175, %v1218
        %v1227 = vmul.f32 %v1178, %v1218
        %v1228 = vmul.f32 %v1183, %v1218
        %v1229 = vmul.f32 %v1186, %v1218
        %v1230 = vmul.f32 %v1191, %v1218
        %v1231 = vmul.f32 %v1194, %v1218
        %v1232 = vmul.f32 %v1199, %v1218
        %v1233 = vmul.f32 %v1202, %v1218
        %v1234 = vmul.f32 %v1207, %v1218
        %v1235 = vmul.f32 %v1210, %v1218
        %v1236 = vld [vmem:[%s590] sm:$0x1]
        %v1238 = vlaneseq
        %v1239 = vshrl.u32 %v1238, 7
        %v1240 = vsub.s32 0, %v1239
        %v1241 = vrot.slane %v1236, %v1240
        %v1243 = vadd.f32 %v1220, %v1241
        %v1244 = vadd.f32 %v1221, %v1241
        %v1245 = vadd.f32 %v1222, %v1241
        %v1246 = vadd.f32 %v1223, %v1241
        %v1247 = vadd.f32 %v1224, %v1241
        %v1248 = vadd.f32 %v1225, %v1241
        %v1249 = vadd.f32 %v1226, %v1241
        %v1250 = vadd.f32 %v1227, %v1241
        %v1251 = vadd.f32 %v1228, %v1241
        %v1252 = vadd.f32 %v1229, %v1241
        %v1253 = vadd.f32 %v1230, %v1241
        %v1254 = vadd.f32 %v1231, %v1241
        %v1255 = vadd.f32 %v1232, %v1241
        %v1256 = vadd.f32 %v1233, %v1241
        %v1257 = vadd.f32 %v1234, %v1241
        %v1258 = vadd.f32 %v1235, %v1241
        %p1259 = scmp.ne.s32.totalorder %s26, 2
        // Predicated region
        $region97: #{tpu_custom_call.1} parent=67 // pred_check
          %p1260 = pneg %p1259
        $region98: #{tpu_custom_call.1} parent=67 // pred_check_branch
          %1262 = sbr.rel (%p1260) target = $region100
        $region99: #{tpu_custom_call.1} parent=67 // pred_region
          %v1263 = vmax.f32 %v1243, 0.0
          %v1264 = vmax.f32 %v1244, 0.0
          %v1265 = vmax.f32 %v1245, 0.0
          %v1266 = vmax.f32 %v1246, 0.0
          %v1267 = vmax.f32 %v1247, 0.0
          %v1268 = vmax.f32 %v1248, 0.0
          %v1269 = vmax.f32 %v1249, 0.0
          %v1270 = vmax.f32 %v1250, 0.0
          %v1271 = vmax.f32 %v1251, 0.0
          %v1272 = vmax.f32 %v1252, 0.0
          %v1273 = vmax.f32 %v1253, 0.0
          %v1274 = vmax.f32 %v1254, 0.0
          %v1275 = vmax.f32 %v1255, 0.0
          %v1276 = vmax.f32 %v1256, 0.0
          %v1277 = vmax.f32 %v1257, 0.0
          %v1278 = vmax.f32 %v1258, 0.0
          %1279 = vst [vmem:[#allocation2] sm:$0xff] %v1263
          %1280 = vst [vmem:[#allocation2 + $0x8] sm:$0xff] %v1264
          %1281 = vst [vmem:[#allocation2 + $0x10] sm:$0xff] %v1265
          %1282 = vst [vmem:[#allocation2 + $0x18] sm:$0xff] %v1266
          %1283 = vst [vmem:[#allocation2 + $0x20] sm:$0xff] %v1267
          %1284 = vst [vmem:[#allocation2 + $0x28] sm:$0xff] %v1268
          %1285 = vst [vmem:[#allocation2 + $0x30] sm:$0xff] %v1269
          %1286 = vst [vmem:[#allocation2 + $0x38] sm:$0xff] %v1270
          %1287 = vst [vmem:[#allocation2 + $0x40] sm:$0xff] %v1271
          %1288 = vst [vmem:[#allocation2 + $0x48] sm:$0xff] %v1272
          %1289 = vst [vmem:[#allocation2 + $0x50] sm:$0xff] %v1273
          %1290 = vst [vmem:[#allocation2 + $0x58] sm:$0xff] %v1274
          %1291 = vst [vmem:[#allocation2 + $0x60] sm:$0xff] %v1275
          %1292 = vst [vmem:[#allocation2 + $0x68] sm:$0xff] %v1276
          %1293 = vst [vmem:[#allocation2 + $0x70] sm:$0xff] %v1277
          %1294 = vst [vmem:[#allocation2 + $0x78] sm:$0xff] %v1278
        $region100: #{tpu_custom_call.1} parent=67 // pred_fallthru
          _
        %p1295 = scmp.eq.s32.totalorder %s26, 2
        // Predicated region
        $region101: #{tpu_custom_call.1} parent=67 // pred_check
          %p1296 = pneg %p1295
        $region102: #{tpu_custom_call.1} parent=67 // pred_check_branch
          %1298 = sbr.rel (%p1296) target = $region104
        $region103: #{tpu_custom_call.1} parent=67 // pred_region
          %v1299 = vld [vmem:[%s9] sm:$0xf]
          %v1300 = vpack.c.bf16 %v1244, %v1243
          %v1301 = vpack.c.bf16 %v1246, %v1245
          %v1302 = vpack.c.bf16 %v1248, %v1247
          %v1303 = vpack.c.bf16 %v1250, %v1249
          %v1304 = vpack.c.bf16 %v1252, %v1251
          %v1305 = vpack.c.bf16 %v1254, %v1253
          %v1306 = vpack.c.bf16 %v1256, %v1255
          %v1307 = vpack.c.bf16 %v1258, %v1257
          %1308 = vmatprep.subr.bf16.mxu0 0
          %1309 = vmatpush1.bf16.msra.mxu0 %v1300
          %1310 = vmatprep.subr.bf16.mxu0 0
          %1311 = vmatpush1.bf16.msra.mxu0 %v1301
          %1312 = vmatprep.subr.bf16.mxu0 0
          %1313 = vmatpush1.bf16.msra.mxu0 %v1302
          %1314 = vmatprep.subr.bf16.mxu0 0
          %1315 = vmatpush1.bf16.msra.mxu0 %v1303
          %1316 = vmatprep.subr.bf16.mxu0 0
          %1317 = vmatpush1.bf16.msra.mxu0 %v1304
          %1318 = vmatprep.subr.bf16.mxu0 0
          %1319 = vmatpush1.bf16.msra.mxu0 %v1305
          %1320 = vmatprep.subr.bf16.mxu0 0
          %1321 = vmatpush1.bf16.msra.mxu0 %v1306
          %1322 = vmatprep.subr.bf16.mxu0 0
          %1323 = vmatpush1.bf16.msra.mxu0 %v1307
          %1324 = vmatprep.subr.bf16.mxu0 0
          %1325 = vmatpush1.bf16.msra.mxu0 0
          %1326 = vmatprep.subr.bf16.mxu0 0
          %1327 = vmatpush1.bf16.msra.mxu0 0
          %1328 = vmatprep.subr.bf16.mxu0 0
          %1329 = vmatpush1.bf16.msra.mxu0 0
          %1330 = vmatprep.subr.bf16.mxu0 0
          %1331 = vmatpush1.bf16.msra.mxu0 0
          %1332 = vmatprep.subr.bf16.mxu0 0
          %1333 = vmatpush1.bf16.msra.mxu0 0
          %1334 = vmatprep.subr.bf16.mxu0 0
          %1335 = vmatpush1.bf16.msra.mxu0 0
          %1336 = vmatprep.subr.bf16.mxu0 0
          %1337 = vmatpush1.bf16.msra.mxu0 0
          %1338 = vmatprep.subr.bf16.mxu0 0
          %1339 = vmatpush1.bf16.msra.mxu0 0
          %1340 = vmatprep.mubr.bf16.mxu0 0
          %1341 = vmatmul.mubr.bf16.gmra.mrb[0].mxu0 %v1299
          %v1342 = vpop.f32.mrb[0].mxu0
          %v1343 = vadd.f32 0.0, %v1342
          %v1344 = vpop.f32.mrb[0].mxu0
          %v1345 = vpop.f32.mrb[0].mxu0
          %v1346 = vpop.f32.mrb[0].mxu0
          %1347 = vdwg.mxu0
          %v1348 = vpack.c.bf16 %v1343, %v1343
          %v1349 = vld [vmem:[#allocation11] sm:$0xf]
          %v1350 = vld [vmem:[#allocation11 + $0x4] sm:$0xf]
          %v1351 = vld [vmem:[#allocation11 + $0x8] sm:$0xf]
          %v1352 = vld [vmem:[#allocation11 + $0xc] sm:$0xf]
          %v1353 = vld [vmem:[#allocation11 + $0x10] sm:$0xf]
          %v1354 = vld [vmem:[#allocation11 + $0x14] sm:$0xf]
          %v1355 = vld [vmem:[#allocation11 + $0x18] sm:$0xf]
          %v1356 = vld [vmem:[#allocation11 + $0x1c] sm:$0xf]
          %v1357 = vld [vmem:[#allocation11 + $0x20] sm:$0xf]
          %v1358 = vld [vmem:[#allocation11 + $0x24] sm:$0xf]
          %v1359 = vld [vmem:[#allocation11 + $0x28] sm:$0xf]
          %v1360 = vld [vmem:[#allocation11 + $0x2c] sm:$0xf]
          %v1361 = vld [vmem:[#allocation11 + $0x30] sm:$0xf]
          %v1362 = vld [vmem:[#allocation11 + $0x34] sm:$0xf]
          %v1363 = vld [vmem:[#allocation11 + $0x38] sm:$0xf]
          %v1364 = vld [vmem:[#allocation11 + $0x3c] sm:$0xf]
          %v1365 = vld [vmem:[%s11] sm:$0x1]
          %v1367 = vlaneseq
          %v1368 = vshrl.u32 %v1367, 7
          %v1369 = vsub.s32 0, %v1368
          %v1370 = vrot.slane %v1365, %v1369
          %v1388 = vunpack.c.l.b16 %v1349
          %v1389 = vunpack.c.l.b16 %v1350
          %v1390 = vunpack.c.l.b16 %v1351
          %v1391 = vunpack.c.l.b16 %v1352
          %v1392 = vunpack.c.l.b16 %v1353
          %v1393 = vunpack.c.l.b16 %v1354
          %v1394 = vunpack.c.l.b16 %v1355
          %v1395 = vunpack.c.l.b16 %v1356
          %v1396 = vunpack.c.l.b16 %v1357
          %v1397 = vunpack.c.l.b16 %v1358
          %v1398 = vunpack.c.l.b16 %v1359
          %v1399 = vunpack.c.l.b16 %v1360
          %v1400 = vunpack.c.l.b16 %v1361
          %v1401 = vunpack.c.l.b16 %v1362
          %v1402 = vunpack.c.l.b16 %v1363
          %v1403 = vunpack.c.l.b16 %v1364
          %v1404 = vpack.c.b16 %v1389, %v1388
          %v1405 = vpack.c.b16 %v1391, %v1390
          %v1406 = vpack.c.b16 %v1393, %v1392
          %v1407 = vpack.c.b16 %v1395, %v1394
          %v1408 = vpack.c.b16 %v1397, %v1396
          %v1409 = vpack.c.b16 %v1399, %v1398
          %v1410 = vpack.c.b16 %v1401, %v1400
          %v1411 = vpack.c.b16 %v1403, %v1402
          %1420 = vmatprep.subr.bf16.mxu0 0
          %1421 = vmatpush1.bf16.msra.mxu0 %v1404
          %1422 = vmatprep.subr.bf16.mxu0 0
          %1423 = vmatpush1.bf16.msra.mxu0 %v1405
          %1424 = vmatprep.subr.bf16.mxu0 0
          %1425 = vmatpush1.bf16.msra.mxu0 %v1406
          %1426 = vmatprep.subr.bf16.mxu0 0
          %1427 = vmatpush1.bf16.msra.mxu0 %v1407
          %1428 = vmatprep.subr.bf16.mxu0 0
          %1429 = vmatpush1.bf16.msra.mxu0 %v1408
          %1430 = vmatprep.subr.bf16.mxu0 0
          %1431 = vmatpush1.bf16.msra.mxu0 %v1409
          %1432 = vmatprep.subr.bf16.mxu0 0
          %1433 = vmatpush1.bf16.msra.mxu0 %v1410
          %1434 = vmatprep.subr.bf16.mxu0 0
          %1435 = vmatpush1.bf16.msra.mxu0 %v1411
          %1436 = vmatprep.subr.bf16.mxu0 0
          %1437 = vmatpush1.bf16.msra.mxu0 0
          %1438 = vmatprep.subr.bf16.mxu0 0
          %1439 = vmatpush1.bf16.msra.mxu0 0
          %1440 = vmatprep.subr.bf16.mxu0 0
          %1441 = vmatpush1.bf16.msra.mxu0 0
          %1442 = vmatprep.subr.bf16.mxu0 0
          %1443 = vmatpush1.bf16.msra.mxu0 0
          %1444 = vmatprep.subr.bf16.mxu0 0
          %1445 = vmatpush1.bf16.msra.mxu0 0
          %1446 = vmatprep.subr.bf16.mxu0 0
          %1447 = vmatpush1.bf16.msra.mxu0 0
          %1448 = vmatprep.subr.bf16.mxu0 0
          %1449 = vmatpush1.bf16.msra.mxu0 0
          %1450 = vmatprep.subr.bf16.mxu0 0
          %1451 = vmatpush1.bf16.msra.mxu0 0
          %1452 = vmatprep.mubr.bf16.mxu0 0
          %1453 = vmatmul.mubr.bf16.gmra.mrb[0].mxu0 %v1348
          %v1454 = vpop.f32.mrb[0].mxu0
          %v1455 = vadd.f32 %v1370, %v1454
          %v1456 = vpop.f32.mrb[0].mxu0
          %v1457 = vpop.f32.mrb[0].mxu0
          %v1458 = vpop.f32.mrb[0].mxu0
          %1459 = vdwg.mxu0
          %1460 = vst [vmem:[#allocation12] sm:$0xff] %v1455
        $region104: #{tpu_custom_call.1} parent=67 // pred_fallthru
          _
        // Predicated region
        $region105: #{tpu_custom_call.1} parent=67 // pred_check
          %p1461 = pneg %p326
        $region106: #{tpu_custom_call.1} parent=67 // pred_check_branch
          %1463 = sbr.rel (%p1461) target = $region108
        $region107: #{tpu_custom_call.1} parent=67 // pred_region
          %s1465 = ssub.s32 128, 128
          %1466 = vsyncadd [#allocation5], %s1465
          %s1468 = sshll.u32 [#allocation12], 4
          %s1469 = int_to_ptr.vmem [resolvable:$true] %s1468
          %1471 = dma.vmem_to_hbm [thread:$0]  %s1469, 128, %s12, [#allocation5]
        $region108: #{tpu_custom_call.1} parent=67 // pred_fallthru
          _
        // Predicated region
        $region109: #{tpu_custom_call.1} parent=67 // pred_check
          %p1472 = pneg %p326
        $region110: #{tpu_custom_call.1} parent=67 // pred_check_branch
          %1474 = sbr.rel (%p1472) target = $region112
        $region111: #{tpu_custom_call.1} parent=67 // pred_region
          %1475 = dma.done [#allocation5], 128
        $region112: #{tpu_custom_call.1} parent=67 // pred_fallthru
          _
      $region68: #{tpu_custom_call.1} parent=5 // pred_fallthru
        _
      %p1476 = scmp.le.s32.totalorder 2, %s21
      // Predicated region
      $region113: #{tpu_custom_call.1} parent=5 // pred_check
        %p1477 = pneg %p1476
      $region114: #{tpu_custom_call.1} parent=5 // pred_check_branch
        %1479 = sbr.rel (%p1477) target = $region116
      $region115: #{tpu_custom_call.1} parent=5 // pred_region
        %s1480 = ssub.s32 %s21, 2
      $region116: #{tpu_custom_call.1} parent=5 // pred_fallthru
        _
    $region6: #{tpu_custom_call.1} parent=1 // loop_footer
      %s25 = sadd.s32 1, %s21
    $region7: #{tpu_custom_call.1} parent=1 // loop_footer_branch
      %20 = sbr.rel target = $region3
    $region8: #{tpu_custom_call.1} parent=1 // loop_exit
      _
    %1481 = vsyncpa [#allocation4], 1
    %s1482 = scalar_lea.sflag [#allocation4], 1
    %1483 = vsyncpa %s1482, 1
    %1484 = vsyncpa [#allocation7], 1
    %1485 = vsyncpa [#allocation5], 1
    %s1486 = scalar_lea.sflag [#allocation5], 1
    %1487 = vsyncpa %s1486, 1

</llo_original>
